<compile_context>
chip_gen: v5e
topology: v5e:2x2
jax: 0.10.0
libtpu: 0.0.40
codegen_flags: <defaults>
</compile_context>

<pallas_src>
import math

import jax
import jax.numpy as jnp
from jax import lax
from jax.experimental import pallas as pl
from jax.experimental.pallas import tpu as pltpu

LN_EPS = 1e-5


def make_pretreatment_kernel(n_streams, apply_ln):
    """One grid step processes TN rows of the flattened (seq*batch) axis."""

    def kernel(*refs):
        r_refs = refs[:n_streams]                               # n x (TN, D_m) f32
        (x1_ref, x3_ref, x6_ref, o1_ref, o2_ref, o3_ref,       # (TN, D_s)     f32
         ln_g_ref, ln_b_ref,                                    # (n, 1, D_m)   f32
         w_r_ref, b_r_ref,                                      # (n, D_m, D_text) bf16 / (1, D_text) f32
         w_x6_ref, b_x6_ref, w_o3_ref, b_o3_ref,
         w_x1_ref, b_x1_ref, w_x3_ref, b_x3_ref,
         w_o2_ref, b_o2_ref, w_o1_ref, b_o1_ref,
         r_out, kg_out, kp_out, x1_out, x3_out, o2_out, o1_out) = refs[n_streams:]

        # ---- r path: per-stream LayerNorm -> accumulated MXU matmul (no concat) ---
        acc = jnp.zeros(r_out.shape, jnp.float32)
        for s in range(n_streams):
            v = r_refs[s][...]                                   # (TN, D_m) f32
            if apply_ln:
                mu = jnp.mean(v, axis=-1, keepdims=True)
                var = jnp.mean(jnp.square(v - mu), axis=-1, keepdims=True)
                v = (v - mu) * lax.rsqrt(var + LN_EPS)
                v = v * ln_g_ref[s] + ln_b_ref[s]
            acc = acc + jnp.dot(v.astype(jnp.bfloat16), w_r_ref[s],
                                preferred_element_type=jnp.float32)
        r_out[...] = (acc + b_r_ref[...]).astype(r_out.dtype)

        # ---- knowledge path: one MXU matmul per distinct input (fused weights) ----
        def proj(x_ref, w_ref, b_ref, out_ref):
            y = jnp.dot(x_ref[...].astype(jnp.bfloat16), w_ref[...],
                        preferred_element_type=jnp.float32)
            out_ref[...] = (y + b_ref[...]).astype(out_ref.dtype)

        proj(x6_ref, w_x6_ref, b_x6_ref, kg_out)   # know_g
        proj(o3_ref, w_o3_ref, b_o3_ref, kp_out)   # know_p
        proj(x1_ref, w_x1_ref, b_x1_ref, x1_out)   # [know_k1 | k1]
        proj(x3_ref, w_x3_ref, b_x3_ref, x3_out)   # [know_k2 | k3]
        proj(o2_ref, w_o2_ref, b_o2_ref, o2_out)   # [know_k3 | k2]
        proj(o1_ref, w_o1_ref, b_o1_ref, o1_out)   # k4

    return kernel


def _const_index_map(nd):
    def imap(i):
        return (0,) * nd
    return imap


def pretreatment_forward(r1, r2, r3, r4, x1, x2, x3, x4, x5, x6, o1, o2, o3,
                         params, *, text_model=0, norm_strategy=1, tile_n=256):
    del x2, x4, x5  # unused by the reference module's forward, kept for API parity
    if norm_strategy not in (0, 1):
        raise NotImplementedError("only norm_strategy in {0, 1} is supported")

    seq_len, batch, d_m = r1.shape
    N = seq_len * batch

    w_in = params["linear_in_w"]           # torch layout (D_text, D_x)
    b_in = params["linear_in_b"]
    d_text = w_in.shape[0]

    # ---- select streams / split linear_in weight according to text_model --------
    rs = [r1, r2, r3, r4]
    if text_model == 0:
        streams, ln_idx = rs, [0, 1, 2, 3]
        w_chunks = [w_in[:, i * d_m:(i + 1) * d_m] for i in range(4)]
        scales = [1.0] * 4
    elif text_model == 1:
        streams, ln_idx = rs[:2], [0, 1]
        w_chunks = [w_in[:, i * d_m:(i + 1) * d_m] for i in range(2)]
        scales = [1.0] * 2
    elif text_model == 2:
        streams, ln_idx = rs, [0, 1, 2, 3]
        w_chunks, scales = [w_in] * 4, [0.25] * 4
    elif text_model in (3, 4, 5, 6):
        k = text_model - 3
        streams, ln_idx = [rs[k]], [k]
        w_chunks, scales = [w_in], [1.0]
    elif text_model == 7:
        streams, ln_idx = rs, [0, 1, 2, 3]
        w_chunks = [w_in] * 4
        scales = [params["r_weights"][i] for i in range(4)]
    else:
        raise ValueError(f"bad text_model {text_model}")

    n_streams = len(streams)
    apply_ln = (norm_strategy == 1)

    # Fold the combination scale into the per-stream (transposed) weight chunk.
    w_r = jnp.stack([w_chunks[i].T * scales[i] for i in range(n_streams)]
                    ).astype(jnp.bfloat16)                           # (n, D_m, D_text)
    ln_g = jnp.stack([params["norm1_g"][j] for j in ln_idx]
                     ).reshape(n_streams, 1, d_m).astype(jnp.float32)
    ln_b = jnp.stack([params["norm1_b"][j] for j in ln_idx]
                     ).reshape(n_streams, 1, d_m).astype(jnp.float32)
    b_r = b_in.reshape(1, d_text).astype(jnp.float32)

    # ---- knowledge weights: fuse projections that share an input ---------------
    d_aud = params["g1_w"].shape[0]
    d_vis = params["g2_w"].shape[0]
    d_ord = params["ord1_w"].shape[0]

    def wt(w):  # torch (out, in) -> (in, out), bf16 for the MXU
        return w.T.astype(jnp.bfloat16)

    def bt(*bs):
        return jnp.concatenate(bs).reshape(1, -1).astype(jnp.float32)

    w_x6, b_x6 = wt(params["g1_w"]), bt(params["g1_b"])
    w_o3, b_o3 = wt(params["g2_w"]), bt(params["g2_b"])
    w_x1 = jnp.concatenate([params["g3_w"].T, params["ord1_w"].T], axis=1).astype(jnp.bfloat16)
    b_x1 = bt(params["g3_b"], params["ord1_b"])
    w_x3 = jnp.concatenate([params["g4_w"].T, params["ord3_w"].T], axis=1).astype(jnp.bfloat16)
    b_x3 = bt(params["g4_b"], params["ord3_b"])
    w_o2 = jnp.concatenate([params["g4_w"].T, params["ord2_w"].T], axis=1).astype(jnp.bfloat16)
    b_o2 = bt(params["g4_b"], params["ord2_b"])
    w_o1, b_o1 = wt(params["ord4_w"]), bt(params["ord4_b"])

    # ---- flatten rows (free reshape, no casts), pick a row tile, pad if needed --
    tn = max(8, min(tile_n, ((N + 7) // 8) * 8))
    tn = ((tn + 7) // 8) * 8
    n_pad = ((N + tn - 1) // tn) * tn

    def flat_pad(a):
        a = a.reshape(N, a.shape[-1])
        if n_pad != N:
            a = jnp.pad(a, ((0, n_pad - N), (0, 0)))
        return a

    r_flats = [flat_pad(s) for s in streams]                 # n x (n_pad, D_m) f32
    x1f, x3f, x6f = flat_pad(x1), flat_pad(x3), flat_pad(x6)
    o1f, o2f, o3f = flat_pad(o1), flat_pad(o2), flat_pad(o3)

    inputs = (r_flats + [x1f, x3f, x6f, o1f, o2f, o3f,
                         ln_g, ln_b, w_r, b_r,
                         w_x6, b_x6, w_o3, b_o3, w_x1, b_x1, w_x3, b_x3,
                         w_o2, b_o2, w_o1, b_o1])

    r_specs = [pl.BlockSpec((tn, d_m), lambda i: (i, 0)) for _ in range(n_streams)]
    row_specs = [pl.BlockSpec((tn, a.shape[-1]), lambda i: (i, 0))
                 for a in (x1f, x3f, x6f, o1f, o2f, o3f)]
    weight_specs = [pl.BlockSpec(a.shape, _const_index_map(a.ndim))
                    for a in inputs[n_streams + 6:]]
    in_specs = r_specs + row_specs + weight_specs

    out_dims = (d_text, d_aud, d_vis, d_vis + d_ord, d_vis + d_ord, d_vis + d_ord, d_ord)
    out_shape = tuple(jax.ShapeDtypeStruct((n_pad, d), jnp.float32) for d in out_dims)
    out_specs = tuple(pl.BlockSpec((tn, d), lambda i: (i, 0)) for d in out_dims)

    outs = pl.pallas_call(
        make_pretreatment_kernel(n_streams, apply_ln),
        grid=(n_pad // tn,),
        in_specs=in_specs,
        out_specs=out_specs,
        out_shape=out_shape,
        compiler_params=pltpu.CompilerParams(
            dimension_semantics=("parallel",),
            vmem_limit_bytes=64 * 1024 * 1024),
    )(*inputs)

    r_o, kg_o, kp_o, x1_o, x3_o, o2_o, o1_o = outs

    def unflat(a, d):
        return a[:N].reshape(seq_len, batch, d)

    r = unflat(r_o, d_text)
    know_g = unflat(kg_o, d_aud)
    know_p = unflat(kp_o, d_vis)
    know_k1, k1 = unflat(x1_o[:, :d_vis], d_vis), unflat(x1_o[:, d_vis:], d_ord)
    know_k2, k3 = unflat(x3_o[:, :d_vis], d_vis), unflat(x3_o[:, d_vis:], d_ord)
    know_k3, k2 = unflat(o2_o[:, :d_vis], d_vis), unflat(o2_o[:, d_vis:], d_ord)
    k4 = unflat(o1_o, d_ord)
    return (r, know_g, know_p, k1, k2, k3, k4, know_k1, know_k2, know_k3)


def reference_forward(r1, r2, r3, r4, x1, x2, x3, x4, x5, x6, o1, o2, o3, params,
                      *, text_model=0, norm_strategy=1):
    """Pure-JAX f32 reference, direct translation of the PyTorch forward."""
    del x2, x4, x5

    def ln(v, g, b):
        mu = v.mean(-1, keepdims=True)
        var = ((v - mu) ** 2).mean(-1, keepdims=True)
        return (v - mu) / jnp.sqrt(var + LN_EPS) * g + b

    rs = [r1, r2, r3, r4]
    if norm_strategy == 1:
        rs = [ln(rs[i], params["norm1_g"][i], params["norm1_b"][i]) for i in range(4)]
    r1n, r2n, r3n, r4n = rs
    if text_model == 0:
        r = jnp.concatenate([r1n, r2n, r3n, r4n], axis=-1)
    elif text_model == 1:
        r = jnp.concatenate([r1n, r2n], axis=-1)
    elif text_model == 2:
        r = (r1n + r2n + r3n + r4n) / 4.0
    elif text_model in (3, 4, 5, 6):
        r = rs[text_model - 3]
    else:
        w = params["r_weights"]
        r = w[0] * r1n + w[1] * r2n + w[2] * r3n + w[3] * r4n

    def lin(x, w, b):
        return x @ w.T + b

    r = lin(r, params["linear_in_w"], params["linear_in_b"])
    know_g = lin(x6, params["g1_w"], params["g1_b"])
    know_p = lin(o3, params["g2_w"], params["g2_b"])
    know_k1 = lin(x1, params["g3_w"], params["g3_b"])
    know_k2 = lin(x3, params["g4_w"], params["g4_b"])
    know_k3 = lin(o2, params["g4_w"], params["g4_b"])
    k1 = lin(x1, params["ord1_w"], params["ord1_b"])
    k2 = lin(o2, params["ord2_w"], params["ord2_b"])
    k3 = lin(x3, params["ord3_w"], params["ord3_b"])
    k4 = lin(o1, params["ord4_w"], params["ord4_b"])
    return (r, know_g, know_p, k1, k2, k3, k4, know_k1, know_k2, know_k3)


def init_params(key, d_m, d_text, d_s, d_audio, d_visual, d_ord, text_model=0):
    d_x = 4 * d_m if text_model == 0 else (2 * d_m if text_model == 1 else d_m)
    ks = jax.random.split(key, 16)

    def lin_init(k, out_d, in_d):
        k1, k2 = jax.random.split(k)
        bound = 1.0 / math.sqrt(in_d)
        w = jax.random.uniform(k1, (out_d, in_d), jnp.float32, -bound, bound)
        b = jax.random.uniform(k2, (out_d,), jnp.float32, -bound, bound)
        return w, b

    params = {}
    params["linear_in_w"], params["linear_in_b"] = lin_init(ks[0], d_text, d_x)
    # LayerNorm affine params: randomized around (1, 0) for a stronger check
    params["norm1_g"] = 1.0 + 0.1 * jax.random.normal(ks[1], (4, d_m), jnp.float32)
    params["norm1_b"] = 0.1 * jax.random.normal(ks[2], (4, d_m), jnp.float32)
    params["g1_w"], params["g1_b"] = lin_init(ks[3], d_audio, d_s)
    params["g2_w"], params["g2_b"] = lin_init(ks[4], d_visual, d_s)
    params["g3_w"], params["g3_b"] = lin_init(ks[5], d_visual, d_s)
    params["g4_w"], params["g4_b"] = lin_init(ks[6], d_visual, d_s)
    params["ord1_w"], params["ord1_b"] = lin_init(ks[7], d_ord, d_s)
    params["ord2_w"], params["ord2_b"] = lin_init(ks[8], d_ord, d_s)
    params["ord3_w"], params["ord3_b"] = lin_init(ks[9], d_ord, d_s)
    params["ord4_w"], params["ord4_b"] = lin_init(ks[10], d_ord, d_s)
    params["r_weights"] = jnp.array([0.25, 0.25, 0.25, 0.25], jnp.float32)
    return params


if __name__ == "__main__":
    # Small config (lane-friendly 128-wide features, tiny seq/batch).
    seq_len, batch = 16, 8
    d_m, d_text = 128, 128
    d_s, d_audio, d_visual, d_ord = 128, 128, 128, 128
    text_model, norm_strategy = 0, 1

    key = jax.random.PRNGKey(0)
    kp, kd = jax.random.split(key)
    params = init_params(kp, d_m, d_text, d_s, d_audio, d_visual, d_ord, text_model)

    dkeys = jax.random.split(kd, 13)

    def feat(k, d):
        return jax.random.normal(k, (seq_len, batch, d), jnp.float32)

    r1, r2, r3, r4 = (feat(dkeys[i], d_m) for i in range(4))
    x1, x2, x3, x4, x5, x6 = (feat(dkeys[4 + i], d_s) for i in range(6))
    o1, o2, o3 = (feat(dkeys[10 + i], d_s) for i in range(3))

    outs = pretreatment_forward(r1, r2, r3, r4, x1, x2, x3, x4, x5, x6, o1, o2, o3,
                                params, text_model=text_model,
                                norm_strategy=norm_strategy, tile_n=64)
    outs = jax.block_until_ready(outs)

    refs = reference_forward(r1, r2, r3, r4, x1, x2, x3, x4, x5, x6, o1, o2, o3,
                             params, text_model=text_model, norm_strategy=norm_strategy)

    names = ("r", "know_g", "know_p", "k1", "k2", "k3", "k4",
             "know_k1", "know_k2", "know_k3")
    for name, a, b in zip(names, outs, refs):
        assert a.shape == b.shape, f"shape mismatch for {name}"
        assert jnp.allclose(a, b, rtol=2e-2, atol=2e-2), f"value mismatch for {name}"

    print("KERNEL_OK")
</pallas_src>

<mosaic_0001>
module attributes {stable_mosaic.version = 11 : i64} {
  func.func @kernel(%arg0: i32, %arg1: memref<64x128xf32, #tpu.memory_space<vmem>>, %arg2: memref<64x128xf32, #tpu.memory_space<vmem>>, %arg3: memref<64x128xf32, #tpu.memory_space<vmem>>, %arg4: memref<64x128xf32, #tpu.memory_space<vmem>>, %arg5: memref<64x128xf32, #tpu.memory_space<vmem>>, %arg6: memref<64x128xf32, #tpu.memory_space<vmem>>, %arg7: memref<64x128xf32, #tpu.memory_space<vmem>>, %arg8: memref<64x128xf32, #tpu.memory_space<vmem>>, %arg9: memref<64x128xf32, #tpu.memory_space<vmem>>, %arg10: memref<64x128xf32, #tpu.memory_space<vmem>>, %arg11: memref<4x1x128xf32, #tpu.memory_space<vmem>>, %arg12: memref<4x1x128xf32, #tpu.memory_space<vmem>>, %arg13: memref<4x128x128xbf16, #tpu.memory_space<vmem>>, %arg14: memref<1x128xf32, #tpu.memory_space<vmem>>, %arg15: memref<128x128xbf16, #tpu.memory_space<vmem>>, %arg16: memref<1x128xf32, #tpu.memory_space<vmem>>, %arg17: memref<128x128xbf16, #tpu.memory_space<vmem>>, %arg18: memref<1x128xf32, #tpu.memory_space<vmem>>, %arg19: memref<128x256xbf16, #tpu.memory_space<vmem>>, %arg20: memref<1x256xf32, #tpu.memory_space<vmem>>, %arg21: memref<128x256xbf16, #tpu.memory_space<vmem>>, %arg22: memref<1x256xf32, #tpu.memory_space<vmem>>, %arg23: memref<128x256xbf16, #tpu.memory_space<vmem>>, %arg24: memref<1x256xf32, #tpu.memory_space<vmem>>, %arg25: memref<128x128xbf16, #tpu.memory_space<vmem>>, %arg26: memref<1x128xf32, #tpu.memory_space<vmem>>, %arg27: memref<64x128xf32, #tpu.memory_space<vmem>>, %arg28: memref<64x128xf32, #tpu.memory_space<vmem>>, %arg29: memref<64x128xf32, #tpu.memory_space<vmem>>, %arg30: memref<64x256xf32, #tpu.memory_space<vmem>>, %arg31: memref<64x256xf32, #tpu.memory_space<vmem>>, %arg32: memref<64x256xf32, #tpu.memory_space<vmem>>, %arg33: memref<64x128xf32, #tpu.memory_space<vmem>>) attributes {dimension_semantics = [#tpu.dimension_semantics<parallel>], iteration_bounds = array<i64: 2>, scalar_prefetch = 0 : i64, scratch_operands = 0 : i64, tpu.core_type = #tpu.core_type<tc>, window_params = [{transform_indices = @transform_0, window_bounds = array<i64: 64, 128>}, {transform_indices = @transform_1, window_bounds = array<i64: 64, 128>}, {transform_indices = @transform_2, window_bounds = array<i64: 64, 128>}, {transform_indices = @transform_3, window_bounds = array<i64: 64, 128>}, {transform_indices = @transform_4, window_bounds = array<i64: 64, 128>}, {transform_indices = @transform_5, window_bounds = array<i64: 64, 128>}, {transform_indices = @transform_6, window_bounds = array<i64: 64, 128>}, {transform_indices = @transform_7, window_bounds = array<i64: 64, 128>}, {transform_indices = @transform_8, window_bounds = array<i64: 64, 128>}, {transform_indices = @transform_9, window_bounds = array<i64: 64, 128>}, {pipeline_mode = #tpu.pipeline_mode<synchronous>, transform_indices = @transform_10, window_bounds = array<i64: 4, 1, 128>}, {pipeline_mode = #tpu.pipeline_mode<synchronous>, transform_indices = @transform_11, window_bounds = array<i64: 4, 1, 128>}, {pipeline_mode = #tpu.pipeline_mode<synchronous>, transform_indices = @transform_12, window_bounds = array<i64: 4, 128, 128>}, {pipeline_mode = #tpu.pipeline_mode<synchronous>, transform_indices = @transform_13, window_bounds = array<i64: 1, 128>}, {pipeline_mode = #tpu.pipeline_mode<synchronous>, transform_indices = @transform_14, window_bounds = array<i64: 128, 128>}, {pipeline_mode = #tpu.pipeline_mode<synchronous>, transform_indices = @transform_15, window_bounds = array<i64: 1, 128>}, {pipeline_mode = #tpu.pipeline_mode<synchronous>, transform_indices = @transform_16, window_bounds = array<i64: 128, 128>}, {pipeline_mode = #tpu.pipeline_mode<synchronous>, transform_indices = @transform_17, window_bounds = array<i64: 1, 128>}, {pipeline_mode = #tpu.pipeline_mode<synchronous>, transform_indices = @transform_18, window_bounds = array<i64: 128, 256>}, {pipeline_mode = #tpu.pipeline_mode<synchronous>, transform_indices = @transform_19, window_bounds = array<i64: 1, 256>}, {pipeline_mode = #tpu.pipeline_mode<synchronous>, transform_indices = @transform_20, window_bounds = array<i64: 128, 256>}, {pipeline_mode = #tpu.pipeline_mode<synchronous>, transform_indices = @transform_21, window_bounds = array<i64: 1, 256>}, {pipeline_mode = #tpu.pipeline_mode<synchronous>, transform_indices = @transform_22, window_bounds = array<i64: 128, 256>}, {pipeline_mode = #tpu.pipeline_mode<synchronous>, transform_indices = @transform_23, window_bounds = array<i64: 1, 256>}, {pipeline_mode = #tpu.pipeline_mode<synchronous>, transform_indices = @transform_24, window_bounds = array<i64: 128, 128>}, {pipeline_mode = #tpu.pipeline_mode<synchronous>, transform_indices = @transform_25, window_bounds = array<i64: 1, 128>}, {transform_indices = @transform_26, window_bounds = array<i64: 64, 128>}, {transform_indices = @transform_27, window_bounds = array<i64: 64, 128>}, {transform_indices = @transform_28, window_bounds = array<i64: 64, 128>}, {transform_indices = @transform_29, window_bounds = array<i64: 64, 256>}, {transform_indices = @transform_30, window_bounds = array<i64: 64, 256>}, {transform_indices = @transform_31, window_bounds = array<i64: 64, 256>}, {transform_indices = @transform_32, window_bounds = array<i64: 64, 128>}]} {
    %cst = arith.constant 0.000000e+00 : f32
    %0 = vector.broadcast %cst : f32 to vector<64x128xf32>
    %c0 = arith.constant 0 : index
    %c0_0 = arith.constant 0 : index
    %1 = vector.load %arg1[%c0, %c0_0] : memref<64x128xf32, #tpu.memory_space<vmem>>, vector<64x128xf32>
    %cst_1 = arith.constant dense<0.000000e+00> : vector<64xf32>
    %2 = vector.multi_reduction <add>, %1, %cst_1 [1] : vector<64x128xf32> to vector<64xf32>
    %3 = vector.shape_cast %2 : vector<64xf32> to vector<64x1xf32>
    %cst_2 = arith.constant 1.280000e+02 : f32
    %4 = vector.broadcast %cst_2 : f32 to vector<64x1xf32>
    %5 = arith.divf %3, %4 : vector<64x1xf32>
    %6 = vector.broadcast %5 : vector<64x1xf32> to vector<64x128xf32>
    %7 = arith.subf %1, %6 : vector<64x128xf32>
    %8 = arith.mulf %7, %7 : vector<64x128xf32>
    %cst_3 = arith.constant dense<0.000000e+00> : vector<64xf32>
    %9 = vector.multi_reduction <add>, %8, %cst_3 [1] : vector<64x128xf32> to vector<64xf32>
    %10 = vector.shape_cast %9 : vector<64xf32> to vector<64x1xf32>
    %cst_4 = arith.constant 1.280000e+02 : f32
    %11 = vector.broadcast %cst_4 : f32 to vector<64x1xf32>
    %12 = arith.divf %10, %11 : vector<64x1xf32>
    %13 = vector.broadcast %5 : vector<64x1xf32> to vector<64x128xf32>
    %14 = arith.subf %1, %13 : vector<64x128xf32>
    %cst_5 = arith.constant 9.99999974E-6 : f32
    %15 = vector.broadcast %cst_5 : f32 to vector<64x1xf32>
    %16 = arith.addf %12, %15 : vector<64x1xf32>
    %17 = math.rsqrt %16 : vector<64x1xf32>
    %18 = vector.broadcast %17 : vector<64x1xf32> to vector<64x128xf32>
    %19 = arith.mulf %14, %18 : vector<64x128xf32>
    %c0_6 = arith.constant 0 : index
    %c0_7 = arith.constant 0 : index
    %c0_8 = arith.constant 0 : index
    %20 = vector.load %arg11[%c0_6, %c0_7, %c0_8] : memref<4x1x128xf32, #tpu.memory_space<vmem>>, vector<1x1x128xf32>
    %21 = vector.shape_cast %20 : vector<1x1x128xf32> to vector<1x128xf32>
    %22 = vector.broadcast %21 : vector<1x128xf32> to vector<64x128xf32>
    %23 = arith.mulf %19, %22 : vector<64x128xf32>
    %c0_9 = arith.constant 0 : index
    %c0_10 = arith.constant 0 : index
    %c0_11 = arith.constant 0 : index
    %24 = vector.load %arg12[%c0_9, %c0_10, %c0_11] : memref<4x1x128xf32, #tpu.memory_space<vmem>>, vector<1x1x128xf32>
    %25 = vector.shape_cast %24 : vector<1x1x128xf32> to vector<1x128xf32>
    %26 = vector.broadcast %25 : vector<1x128xf32> to vector<64x128xf32>
    %27 = arith.addf %23, %26 : vector<64x128xf32>
    %28 = arith.truncf %27 : vector<64x128xf32> to vector<64x128xbf16>
    %c0_12 = arith.constant 0 : index
    %c0_13 = arith.constant 0 : index
    %c0_14 = arith.constant 0 : index
    %29 = vector.load %arg13[%c0_12, %c0_13, %c0_14] : memref<4x128x128xbf16, #tpu.memory_space<vmem>>, vector<1x128x128xbf16>
    %30 = vector.shape_cast %29 : vector<1x128x128xbf16> to vector<128x128xbf16>
    %cst_15 = arith.constant dense<0.000000e+00> : vector<64x128xf32>
    %31 = tpu.matmul %28, %30, %cst_15 {dimension_numbers = #tpu.dot_dimension_numbers<[1], [0], [0], [1], [0, 0, 1, 1], [], []>} : vector<64x128xbf16>, vector<128x128xbf16>, vector<64x128xf32> -> vector<64x128xf32>
    %32 = arith.addf %0, %31 : vector<64x128xf32>
    %c0_16 = arith.constant 0 : index
    %c0_17 = arith.constant 0 : index
    %33 = vector.load %arg2[%c0_16, %c0_17] : memref<64x128xf32, #tpu.memory_space<vmem>>, vector<64x128xf32>
    %cst_18 = arith.constant dense<0.000000e+00> : vector<64xf32>
    %34 = vector.multi_reduction <add>, %33, %cst_18 [1] : vector<64x128xf32> to vector<64xf32>
    %35 = vector.shape_cast %34 : vector<64xf32> to vector<64x1xf32>
    %cst_19 = arith.constant 1.280000e+02 : f32
    %36 = vector.broadcast %cst_19 : f32 to vector<64x1xf32>
    %37 = arith.divf %35, %36 : vector<64x1xf32>
    %38 = vector.broadcast %37 : vector<64x1xf32> to vector<64x128xf32>
    %39 = arith.subf %33, %38 : vector<64x128xf32>
    %40 = arith.mulf %39, %39 : vector<64x128xf32>
    %cst_20 = arith.constant dense<0.000000e+00> : vector<64xf32>
    %41 = vector.multi_reduction <add>, %40, %cst_20 [1] : vector<64x128xf32> to vector<64xf32>
    %42 = vector.shape_cast %41 : vector<64xf32> to vector<64x1xf32>
    %cst_21 = arith.constant 1.280000e+02 : f32
    %43 = vector.broadcast %cst_21 : f32 to vector<64x1xf32>
    %44 = arith.divf %42, %43 : vector<64x1xf32>
    %45 = vector.broadcast %37 : vector<64x1xf32> to vector<64x128xf32>
    %46 = arith.subf %33, %45 : vector<64x128xf32>
    %cst_22 = arith.constant 9.99999974E-6 : f32
    %47 = vector.broadcast %cst_22 : f32 to vector<64x1xf32>
    %48 = arith.addf %44, %47 : vector<64x1xf32>
    %49 = math.rsqrt %48 : vector<64x1xf32>
    %50 = vector.broadcast %49 : vector<64x1xf32> to vector<64x128xf32>
    %51 = arith.mulf %46, %50 : vector<64x128xf32>
    %c1 = arith.constant 1 : index
    %c0_23 = arith.constant 0 : index
    %c0_24 = arith.constant 0 : index
    %52 = vector.load %arg11[%c1, %c0_23, %c0_24] : memref<4x1x128xf32, #tpu.memory_space<vmem>>, vector<1x1x128xf32>
    %53 = vector.shape_cast %52 : vector<1x1x128xf32> to vector<1x128xf32>
    %54 = vector.broadcast %53 : vector<1x128xf32> to vector<64x128xf32>
    %55 = arith.mulf %51, %54 : vector<64x128xf32>
    %c1_25 = arith.constant 1 : index
    %c0_26 = arith.constant 0 : index
    %c0_27 = arith.constant 0 : index
    %56 = vector.load %arg12[%c1_25, %c0_26, %c0_27] : memref<4x1x128xf32, #tpu.memory_space<vmem>>, vector<1x1x128xf32>
    %57 = vector.shape_cast %56 : vector<1x1x128xf32> to vector<1x128xf32>
    %58 = vector.broadcast %57 : vector<1x128xf32> to vector<64x128xf32>
    %59 = arith.addf %55, %58 : vector<64x128xf32>
    %60 = arith.truncf %59 : vector<64x128xf32> to vector<64x128xbf16>
    %c1_28 = arith.constant 1 : index
    %c0_29 = arith.constant 0 : index
    %c0_30 = arith.constant 0 : index
    %61 = vector.load %arg13[%c1_28, %c0_29, %c0_30] : memref<4x128x128xbf16, #tpu.memory_space<vmem>>, vector<1x128x128xbf16>
    %62 = vector.shape_cast %61 : vector<1x128x128xbf16> to vector<128x128xbf16>
    %cst_31 = arith.constant dense<0.000000e+00> : vector<64x128xf32>
    %63 = tpu.matmul %60, %62, %cst_31 {dimension_numbers = #tpu.dot_dimension_numbers<[1], [0], [0], [1], [0, 0, 1, 1], [], []>} : vector<64x128xbf16>, vector<128x128xbf16>, vector<64x128xf32> -> vector<64x128xf32>
    %64 = arith.addf %32, %63 : vector<64x128xf32>
    %c0_32 = arith.constant 0 : index
    %c0_33 = arith.constant 0 : index
    %65 = vector.load %arg3[%c0_32, %c0_33] : memref<64x128xf32, #tpu.memory_space<vmem>>, vector<64x128xf32>
    %cst_34 = arith.constant dense<0.000000e+00> : vector<64xf32>
    %66 = vector.multi_reduction <add>, %65, %cst_34 [1] : vector<64x128xf32> to vector<64xf32>
    %67 = vector.shape_cast %66 : vector<64xf32> to vector<64x1xf32>
    %cst_35 = arith.constant 1.280000e+02 : f32
    %68 = vector.broadcast %cst_35 : f32 to vector<64x1xf32>
    %69 = arith.divf %67, %68 : vector<64x1xf32>
    %70 = vector.broadcast %69 : vector<64x1xf32> to vector<64x128xf32>
    %71 = arith.subf %65, %70 : vector<64x128xf32>
    %72 = arith.mulf %71, %71 : vector<64x128xf32>
    %cst_36 = arith.constant dense<0.000000e+00> : vector<64xf32>
    %73 = vector.multi_reduction <add>, %72, %cst_36 [1] : vector<64x128xf32> to vector<64xf32>
    %74 = vector.shape_cast %73 : vector<64xf32> to vector<64x1xf32>
    %cst_37 = arith.constant 1.280000e+02 : f32
    %75 = vector.broadcast %cst_37 : f32 to vector<64x1xf32>
    %76 = arith.divf %74, %75 : vector<64x1xf32>
    %77 = vector.broadcast %69 : vector<64x1xf32> to vector<64x128xf32>
    %78 = arith.subf %65, %77 : vector<64x128xf32>
    %cst_38 = arith.constant 9.99999974E-6 : f32
    %79 = vector.broadcast %cst_38 : f32 to vector<64x1xf32>
    %80 = arith.addf %76, %79 : vector<64x1xf32>
    %81 = math.rsqrt %80 : vector<64x1xf32>
    %82 = vector.broadcast %81 : vector<64x1xf32> to vector<64x128xf32>
    %83 = arith.mulf %78, %82 : vector<64x128xf32>
    %c2 = arith.constant 2 : index
    %c0_39 = arith.constant 0 : index
    %c0_40 = arith.constant 0 : index
    %84 = vector.load %arg11[%c2, %c0_39, %c0_40] : memref<4x1x128xf32, #tpu.memory_space<vmem>>, vector<1x1x128xf32>
    %85 = vector.shape_cast %84 : vector<1x1x128xf32> to vector<1x128xf32>
    %86 = vector.broadcast %85 : vector<1x128xf32> to vector<64x128xf32>
    %87 = arith.mulf %83, %86 : vector<64x128xf32>
    %c2_41 = arith.constant 2 : index
    %c0_42 = arith.constant 0 : index
    %c0_43 = arith.constant 0 : index
    %88 = vector.load %arg12[%c2_41, %c0_42, %c0_43] : memref<4x1x128xf32, #tpu.memory_space<vmem>>, vector<1x1x128xf32>
    %89 = vector.shape_cast %88 : vector<1x1x128xf32> to vector<1x128xf32>
    %90 = vector.broadcast %89 : vector<1x128xf32> to vector<64x128xf32>
    %91 = arith.addf %87, %90 : vector<64x128xf32>
    %92 = arith.truncf %91 : vector<64x128xf32> to vector<64x128xbf16>
    %c2_44 = arith.constant 2 : index
    %c0_45 = arith.constant 0 : index
    %c0_46 = arith.constant 0 : index
    %93 = vector.load %arg13[%c2_44, %c0_45, %c0_46] : memref<4x128x128xbf16, #tpu.memory_space<vmem>>, vector<1x128x128xbf16>
    %94 = vector.shape_cast %93 : vector<1x128x128xbf16> to vector<128x128xbf16>
    %cst_47 = arith.constant dense<0.000000e+00> : vector<64x128xf32>
    %95 = tpu.matmul %92, %94, %cst_47 {dimension_numbers = #tpu.dot_dimension_numbers<[1], [0], [0], [1], [0, 0, 1, 1], [], []>} : vector<64x128xbf16>, vector<128x128xbf16>, vector<64x128xf32> -> vector<64x128xf32>
    %96 = arith.addf %64, %95 : vector<64x128xf32>
    %c0_48 = arith.constant 0 : index
    %c0_49 = arith.constant 0 : index
    %97 = vector.load %arg4[%c0_48, %c0_49] : memref<64x128xf32, #tpu.memory_space<vmem>>, vector<64x128xf32>
    %cst_50 = arith.constant dense<0.000000e+00> : vector<64xf32>
    %98 = vector.multi_reduction <add>, %97, %cst_50 [1] : vector<64x128xf32> to vector<64xf32>
    %99 = vector.shape_cast %98 : vector<64xf32> to vector<64x1xf32>
    %cst_51 = arith.constant 1.280000e+02 : f32
    %100 = vector.broadcast %cst_51 : f32 to vector<64x1xf32>
    %101 = arith.divf %99, %100 : vector<64x1xf32>
    %102 = vector.broadcast %101 : vector<64x1xf32> to vector<64x128xf32>
    %103 = arith.subf %97, %102 : vector<64x128xf32>
    %104 = arith.mulf %103, %103 : vector<64x128xf32>
    %cst_52 = arith.constant dense<0.000000e+00> : vector<64xf32>
    %105 = vector.multi_reduction <add>, %104, %cst_52 [1] : vector<64x128xf32> to vector<64xf32>
    %106 = vector.shape_cast %105 : vector<64xf32> to vector<64x1xf32>
    %cst_53 = arith.constant 1.280000e+02 : f32
    %107 = vector.broadcast %cst_53 : f32 to vector<64x1xf32>
    %108 = arith.divf %106, %107 : vector<64x1xf32>
    %109 = vector.broadcast %101 : vector<64x1xf32> to vector<64x128xf32>
    %110 = arith.subf %97, %109 : vector<64x128xf32>
    %cst_54 = arith.constant 9.99999974E-6 : f32
    %111 = vector.broadcast %cst_54 : f32 to vector<64x1xf32>
    %112 = arith.addf %108, %111 : vector<64x1xf32>
    %113 = math.rsqrt %112 : vector<64x1xf32>
    %114 = vector.broadcast %113 : vector<64x1xf32> to vector<64x128xf32>
    %115 = arith.mulf %110, %114 : vector<64x128xf32>
    %c3 = arith.constant 3 : index
    %c0_55 = arith.constant 0 : index
    %c0_56 = arith.constant 0 : index
    %116 = vector.load %arg11[%c3, %c0_55, %c0_56] : memref<4x1x128xf32, #tpu.memory_space<vmem>>, vector<1x1x128xf32>
    %117 = vector.shape_cast %116 : vector<1x1x128xf32> to vector<1x128xf32>
    %118 = vector.broadcast %117 : vector<1x128xf32> to vector<64x128xf32>
    %119 = arith.mulf %115, %118 : vector<64x128xf32>
    %c3_57 = arith.constant 3 : index
    %c0_58 = arith.constant 0 : index
    %c0_59 = arith.constant 0 : index
    %120 = vector.load %arg12[%c3_57, %c0_58, %c0_59] : memref<4x1x128xf32, #tpu.memory_space<vmem>>, vector<1x1x128xf32>
    %121 = vector.shape_cast %120 : vector<1x1x128xf32> to vector<1x128xf32>
    %122 = vector.broadcast %121 : vector<1x128xf32> to vector<64x128xf32>
    %123 = arith.addf %119, %122 : vector<64x128xf32>
    %124 = arith.truncf %123 : vector<64x128xf32> to vector<64x128xbf16>
    %c3_60 = arith.constant 3 : index
    %c0_61 = arith.constant 0 : index
    %c0_62 = arith.constant 0 : index
    %125 = vector.load %arg13[%c3_60, %c0_61, %c0_62] : memref<4x128x128xbf16, #tpu.memory_space<vmem>>, vector<1x128x128xbf16>
    %126 = vector.shape_cast %125 : vector<1x128x128xbf16> to vector<128x128xbf16>
    %cst_63 = arith.constant dense<0.000000e+00> : vector<64x128xf32>
    %127 = tpu.matmul %124, %126, %cst_63 {dimension_numbers = #tpu.dot_dimension_numbers<[1], [0], [0], [1], [0, 0, 1, 1], [], []>} : vector<64x128xbf16>, vector<128x128xbf16>, vector<64x128xf32> -> vector<64x128xf32>
    %128 = arith.addf %96, %127 : vector<64x128xf32>
    %c0_64 = arith.constant 0 : index
    %c0_65 = arith.constant 0 : index
    %129 = vector.load %arg14[%c0_64, %c0_65] : memref<1x128xf32, #tpu.memory_space<vmem>>, vector<1x128xf32>
    %130 = vector.broadcast %129 : vector<1x128xf32> to vector<64x128xf32>
    %131 = arith.addf %128, %130 : vector<64x128xf32>
    %c0_66 = arith.constant 0 : index
    %c0_67 = arith.constant 0 : index
    %132 = vector.load %arg27[%c0_66, %c0_67] : memref<64x128xf32, #tpu.memory_space<vmem>>, vector<64x128xf32>
    tpu.vector_store %arg27[%c0_66, %c0_67], %131 {strides = array<i32>} : memref<64x128xf32, #tpu.memory_space<vmem>>, vector<64x128xf32>,
    %c0_68 = arith.constant 0 : index
    %c0_69 = arith.constant 0 : index
    %133 = vector.load %arg7[%c0_68, %c0_69] : memref<64x128xf32, #tpu.memory_space<vmem>>, vector<64x128xf32>
    %134 = arith.truncf %133 : vector<64x128xf32> to vector<64x128xbf16>
    %c0_70 = arith.constant 0 : index
    %c0_71 = arith.constant 0 : index
    %135 = vector.load %arg15[%c0_70, %c0_71] : memref<128x128xbf16, #tpu.memory_space<vmem>>, vector<128x128xbf16>
    %cst_72 = arith.constant dense<0.000000e+00> : vector<64x128xf32>
    %136 = tpu.matmul %134, %135, %cst_72 {dimension_numbers = #tpu.dot_dimension_numbers<[1], [0], [0], [1], [0, 0, 1, 1], [], []>} : vector<64x128xbf16>, vector<128x128xbf16>, vector<64x128xf32> -> vector<64x128xf32>
    %c0_73 = arith.constant 0 : index
    %c0_74 = arith.constant 0 : index
    %137 = vector.load %arg16[%c0_73, %c0_74] : memref<1x128xf32, #tpu.memory_space<vmem>>, vector<1x128xf32>
    %138 = vector.broadcast %137 : vector<1x128xf32> to vector<64x128xf32>
    %139 = arith.addf %136, %138 : vector<64x128xf32>
    %c0_75 = arith.constant 0 : index
    %c0_76 = arith.constant 0 : index
    %140 = vector.load %arg28[%c0_75, %c0_76] : memref<64x128xf32, #tpu.memory_space<vmem>>, vector<64x128xf32>
    tpu.vector_store %arg28[%c0_75, %c0_76], %139 {strides = array<i32>} : memref<64x128xf32, #tpu.memory_space<vmem>>, vector<64x128xf32>,
    %c0_77 = arith.constant 0 : index
    %c0_78 = arith.constant 0 : index
    %141 = vector.load %arg10[%c0_77, %c0_78] : memref<64x128xf32, #tpu.memory_space<vmem>>, vector<64x128xf32>
    %142 = arith.truncf %141 : vector<64x128xf32> to vector<64x128xbf16>
    %c0_79 = arith.constant 0 : index
    %c0_80 = arith.constant 0 : index
    %143 = vector.load %arg17[%c0_79, %c0_80] : memref<128x128xbf16, #tpu.memory_space<vmem>>, vector<128x128xbf16>
    %cst_81 = arith.constant dense<0.000000e+00> : vector<64x128xf32>
    %144 = tpu.matmul %142, %143, %cst_81 {dimension_numbers = #tpu.dot_dimension_numbers<[1], [0], [0], [1], [0, 0, 1, 1], [], []>} : vector<64x128xbf16>, vector<128x128xbf16>, vector<64x128xf32> -> vector<64x128xf32>
    %c0_82 = arith.constant 0 : index
    %c0_83 = arith.constant 0 : index
    %145 = vector.load %arg18[%c0_82, %c0_83] : memref<1x128xf32, #tpu.memory_space<vmem>>, vector<1x128xf32>
    %146 = vector.broadcast %145 : vector<1x128xf32> to vector<64x128xf32>
    %147 = arith.addf %144, %146 : vector<64x128xf32>
    %c0_84 = arith.constant 0 : index
    %c0_85 = arith.constant 0 : index
    %148 = vector.load %arg29[%c0_84, %c0_85] : memref<64x128xf32, #tpu.memory_space<vmem>>, vector<64x128xf32>
    tpu.vector_store %arg29[%c0_84, %c0_85], %147 {strides = array<i32>} : memref<64x128xf32, #tpu.memory_space<vmem>>, vector<64x128xf32>,
    %c0_86 = arith.constant 0 : index
    %c0_87 = arith.constant 0 : index
    %149 = vector.load %arg5[%c0_86, %c0_87] : memref<64x128xf32, #tpu.memory_space<vmem>>, vector<64x128xf32>
    %150 = arith.truncf %149 : vector<64x128xf32> to vector<64x128xbf16>
    %c0_88 = arith.constant 0 : index
    %c0_89 = arith.constant 0 : index
    %151 = vector.load %arg19[%c0_88, %c0_89] : memref<128x256xbf16, #tpu.memory_space<vmem>>, vector<128x256xbf16>
    %cst_90 = arith.constant dense<0.000000e+00> : vector<64x256xf32>
    %152 = tpu.matmul %150, %151, %cst_90 {dimension_numbers = #tpu.dot_dimension_numbers<[1], [0], [0], [1], [0, 0, 1, 1], [], []>} : vector<64x128xbf16>, vector<128x256xbf16>, vector<64x256xf32> -> vector<64x256xf32>
    %c0_91 = arith.constant 0 : index
    %c0_92 = arith.constant 0 : index
    %153 = vector.load %arg20[%c0_91, %c0_92] : memref<1x256xf32, #tpu.memory_space<vmem>>, vector<1x256xf32>
    %154 = vector.broadcast %153 : vector<1x256xf32> to vector<64x256xf32>
    %155 = arith.addf %152, %154 : vector<64x256xf32>
    %c0_93 = arith.constant 0 : index
    %c0_94 = arith.constant 0 : index
    %156 = vector.load %arg30[%c0_93, %c0_94] : memref<64x256xf32, #tpu.memory_space<vmem>>, vector<64x256xf32>
    tpu.vector_store %arg30[%c0_93, %c0_94], %155 {strides = array<i32>} : memref<64x256xf32, #tpu.memory_space<vmem>>, vector<64x256xf32>,
    %c0_95 = arith.constant 0 : index
    %c0_96 = arith.constant 0 : index
    %157 = vector.load %arg6[%c0_95, %c0_96] : memref<64x128xf32, #tpu.memory_space<vmem>>, vector<64x128xf32>
    %158 = arith.truncf %157 : vector<64x128xf32> to vector<64x128xbf16>
    %c0_97 = arith.constant 0 : index
    %c0_98 = arith.constant 0 : index
    %159 = vector.load %arg21[%c0_97, %c0_98] : memref<128x256xbf16, #tpu.memory_space<vmem>>, vector<128x256xbf16>
    %cst_99 = arith.constant dense<0.000000e+00> : vector<64x256xf32>
    %160 = tpu.matmul %158, %159, %cst_99 {dimension_numbers = #tpu.dot_dimension_numbers<[1], [0], [0], [1], [0, 0, 1, 1], [], []>} : vector<64x128xbf16>, vector<128x256xbf16>, vector<64x256xf32> -> vector<64x256xf32>
    %c0_100 = arith.constant 0 : index
    %c0_101 = arith.constant 0 : index
    %161 = vector.load %arg22[%c0_100, %c0_101] : memref<1x256xf32, #tpu.memory_space<vmem>>, vector<1x256xf32>
    %162 = vector.broadcast %161 : vector<1x256xf32> to vector<64x256xf32>
    %163 = arith.addf %160, %162 : vector<64x256xf32>
    %c0_102 = arith.constant 0 : index
    %c0_103 = arith.constant 0 : index
    %164 = vector.load %arg31[%c0_102, %c0_103] : memref<64x256xf32, #tpu.memory_space<vmem>>, vector<64x256xf32>
    tpu.vector_store %arg31[%c0_102, %c0_103], %163 {strides = array<i32>} : memref<64x256xf32, #tpu.memory_space<vmem>>, vector<64x256xf32>,
    %c0_104 = arith.constant 0 : index
    %c0_105 = arith.constant 0 : index
    %165 = vector.load %arg9[%c0_104, %c0_105] : memref<64x128xf32, #tpu.memory_space<vmem>>, vector<64x128xf32>
    %166 = arith.truncf %165 : vector<64x128xf32> to vector<64x128xbf16>
    %c0_106 = arith.constant 0 : index
    %c0_107 = arith.constant 0 : index
    %167 = vector.load %arg23[%c0_106, %c0_107] : memref<128x256xbf16, #tpu.memory_space<vmem>>, vector<128x256xbf16>
    %cst_108 = arith.constant dense<0.000000e+00> : vector<64x256xf32>
    %168 = tpu.matmul %166, %167, %cst_108 {dimension_numbers = #tpu.dot_dimension_numbers<[1], [0], [0], [1], [0, 0, 1, 1], [], []>} : vector<64x128xbf16>, vector<128x256xbf16>, vector<64x256xf32> -> vector<64x256xf32>
    %c0_109 = arith.constant 0 : index
    %c0_110 = arith.constant 0 : index
    %169 = vector.load %arg24[%c0_109, %c0_110] : memref<1x256xf32, #tpu.memory_space<vmem>>, vector<1x256xf32>
    %170 = vector.broadcast %169 : vector<1x256xf32> to vector<64x256xf32>
    %171 = arith.addf %168, %170 : vector<64x256xf32>
    %c0_111 = arith.constant 0 : index
    %c0_112 = arith.constant 0 : index
    %172 = vector.load %arg32[%c0_111, %c0_112] : memref<64x256xf32, #tpu.memory_space<vmem>>, vector<64x256xf32>
    tpu.vector_store %arg32[%c0_111, %c0_112], %171 {strides = array<i32>} : memref<64x256xf32, #tpu.memory_space<vmem>>, vector<64x256xf32>,
    %c0_113 = arith.constant 0 : index
    %c0_114 = arith.constant 0 : index
    %173 = vector.load %arg8[%c0_113, %c0_114] : memref<64x128xf32, #tpu.memory_space<vmem>>, vector<64x128xf32>
    %174 = arith.truncf %173 : vector<64x128xf32> to vector<64x128xbf16>
    %c0_115 = arith.constant 0 : index
    %c0_116 = arith.constant 0 : index
    %175 = vector.load %arg25[%c0_115, %c0_116] : memref<128x128xbf16, #tpu.memory_space<vmem>>, vector<128x128xbf16>
    %cst_117 = arith.constant dense<0.000000e+00> : vector<64x128xf32>
    %176 = tpu.matmul %174, %175, %cst_117 {dimension_numbers = #tpu.dot_dimension_numbers<[1], [0], [0], [1], [0, 0, 1, 1], [], []>} : vector<64x128xbf16>, vector<128x128xbf16>, vector<64x128xf32> -> vector<64x128xf32>
    %c0_118 = arith.constant 0 : index
    %c0_119 = arith.constant 0 : index
    %177 = vector.load %arg26[%c0_118, %c0_119] : memref<1x128xf32, #tpu.memory_space<vmem>>, vector<1x128xf32>
    %178 = vector.broadcast %177 : vector<1x128xf32> to vector<64x128xf32>
    %179 = arith.addf %176, %178 : vector<64x128xf32>
    %c0_120 = arith.constant 0 : index
    %c0_121 = arith.constant 0 : index
    %180 = vector.load %arg33[%c0_120, %c0_121] : memref<64x128xf32, #tpu.memory_space<vmem>>, vector<64x128xf32>
    tpu.vector_store %arg33[%c0_120, %c0_121], %179 {strides = array<i32>} : memref<64x128xf32, #tpu.memory_space<vmem>>, vector<64x128xf32>,
    return
  }
  func.func @transform_0(%arg0: i32) -> (i32, i32) {
    %c0_i32 = arith.constant 0 : i32
    %c0_i32_0 = arith.constant 0 : i32
    return %arg0, %c0_i32 : i32, i32
  }
  func.func @transform_1(%arg0: i32) -> (i32, i32) {
    %c0_i32 = arith.constant 0 : i32
    %c0_i32_0 = arith.constant 0 : i32
    return %arg0, %c0_i32 : i32, i32
  }
  func.func @transform_2(%arg0: i32) -> (i32, i32) {
    %c0_i32 = arith.constant 0 : i32
    %c0_i32_0 = arith.constant 0 : i32
    return %arg0, %c0_i32 : i32, i32
  }
  func.func @transform_3(%arg0: i32) -> (i32, i32) {
    %c0_i32 = arith.constant 0 : i32
    %c0_i32_0 = arith.constant 0 : i32
    return %arg0, %c0_i32 : i32, i32
  }
  func.func @transform_4(%arg0: i32) -> (i32, i32) {
    %c0_i32 = arith.constant 0 : i32
    %c0_i32_0 = arith.constant 0 : i32
    return %arg0, %c0_i32 : i32, i32
  }
  func.func @transform_5(%arg0: i32) -> (i32, i32) {
    %c0_i32 = arith.constant 0 : i32
    %c0_i32_0 = arith.constant 0 : i32
    return %arg0, %c0_i32 : i32, i32
  }
  func.func @transform_6(%arg0: i32) -> (i32, i32) {
    %c0_i32 = arith.constant 0 : i32
    %c0_i32_0 = arith.constant 0 : i32
    return %arg0, %c0_i32 : i32, i32
  }
  func.func @transform_7(%arg0: i32) -> (i32, i32) {
    %c0_i32 = arith.constant 0 : i32
    %c0_i32_0 = arith.constant 0 : i32
    return %arg0, %c0_i32 : i32, i32
  }
  func.func @transform_8(%arg0: i32) -> (i32, i32) {
    %c0_i32 = arith.constant 0 : i32
    %c0_i32_0 = arith.constant 0 : i32
    return %arg0, %c0_i32 : i32, i32
  }
  func.func @transform_9(%arg0: i32) -> (i32, i32) {
    %c0_i32 = arith.constant 0 : i32
    %c0_i32_0 = arith.constant 0 : i32
    return %arg0, %c0_i32 : i32, i32
  }
  func.func @transform_10(%arg0: i32) -> (i32, i32, i32) {
    %c0_i32 = arith.constant 0 : i32
    %c0_i32_0 = arith.constant 0 : i32
    %c0_i32_1 = arith.constant 0 : i32
    %c0_i32_2 = arith.constant 0 : i32
    return %c0_i32, %c0_i32_0, %c0_i32_1 : i32, i32, i32
  }
  func.func @transform_11(%arg0: i32) -> (i32, i32, i32) {
    %c0_i32 = arith.constant 0 : i32
    %c0_i32_0 = arith.constant 0 : i32
    %c0_i32_1 = arith.constant 0 : i32
    %c0_i32_2 = arith.constant 0 : i32
    return %c0_i32, %c0_i32_0, %c0_i32_1 : i32, i32, i32
  }
  func.func @transform_12(%arg0: i32) -> (i32, i32, i32) {
    %c0_i32 = arith.constant 0 : i32
    %c0_i32_0 = arith.constant 0 : i32
    %c0_i32_1 = arith.constant 0 : i32
    %c0_i32_2 = arith.constant 0 : i32
    return %c0_i32, %c0_i32_0, %c0_i32_1 : i32, i32, i32
  }
  func.func @transform_13(%arg0: i32) -> (i32, i32) {
    %c0_i32 = arith.constant 0 : i32
    %c0_i32_0 = arith.constant 0 : i32
    %c0_i32_1 = arith.constant 0 : i32
    return %c0_i32, %c0_i32_0 : i32, i32
  }
  func.func @transform_14(%arg0: i32) -> (i32, i32) {
    %c0_i32 = arith.constant 0 : i32
    %c0_i32_0 = arith.constant 0 : i32
    %c0_i32_1 = arith.constant 0 : i32
    return %c0_i32, %c0_i32_0 : i32, i32
  }
  func.func @transform_15(%arg0: i32) -> (i32, i32) {
    %c0_i32 = arith.constant 0 : i32
    %c0_i32_0 = arith.constant 0 : i32
    %c0_i32_1 = arith.constant 0 : i32
    return %c0_i32, %c0_i32_0 : i32, i32
  }
  func.func @transform_16(%arg0: i32) -> (i32, i32) {
    %c0_i32 = arith.constant 0 : i32
    %c0_i32_0 = arith.constant 0 : i32
    %c0_i32_1 = arith.constant 0 : i32
    return %c0_i32, %c0_i32_0 : i32, i32
  }
  func.func @transform_17(%arg0: i32) -> (i32, i32) {
    %c0_i32 = arith.constant 0 : i32
    %c0_i32_0 = arith.constant 0 : i32
    %c0_i32_1 = arith.constant 0 : i32
    return %c0_i32, %c0_i32_0 : i32, i32
  }
  func.func @transform_18(%arg0: i32) -> (i32, i32) {
    %c0_i32 = arith.constant 0 : i32
    %c0_i32_0 = arith.constant 0 : i32
    %c0_i32_1 = arith.constant 0 : i32
    return %c0_i32, %c0_i32_0 : i32, i32
  }
  func.func @transform_19(%arg0: i32) -> (i32, i32) {
    %c0_i32 = arith.constant 0 : i32
    %c0_i32_0 = arith.constant 0 : i32
    %c0_i32_1 = arith.constant 0 : i32
    return %c0_i32, %c0_i32_0 : i32, i32
  }
  func.func @transform_20(%arg0: i32) -> (i32, i32) {
    %c0_i32 = arith.constant 0 : i32
    %c0_i32_0 = arith.constant 0 : i32
    %c0_i32_1 = arith.constant 0 : i32
    return %c0_i32, %c0_i32_0 : i32, i32
  }
  func.func @transform_21(%arg0: i32) -> (i32, i32) {
    %c0_i32 = arith.constant 0 : i32
    %c0_i32_0 = arith.constant 0 : i32
    %c0_i32_1 = arith.constant 0 : i32
    return %c0_i32, %c0_i32_0 : i32, i32
  }
  func.func @transform_22(%arg0: i32) -> (i32, i32) {
    %c0_i32 = arith.constant 0 : i32
    %c0_i32_0 = arith.constant 0 : i32
    %c0_i32_1 = arith.constant 0 : i32
    return %c0_i32, %c0_i32_0 : i32, i32
  }
  func.func @transform_23(%arg0: i32) -> (i32, i32) {
    %c0_i32 = arith.constant 0 : i32
    %c0_i32_0 = arith.constant 0 : i32
    %c0_i32_1 = arith.constant 0 : i32
    return %c0_i32, %c0_i32_0 : i32, i32
  }
  func.func @transform_24(%arg0: i32) -> (i32, i32) {
    %c0_i32 = arith.constant 0 : i32
    %c0_i32_0 = arith.constant 0 : i32
    %c0_i32_1 = arith.constant 0 : i32
    return %c0_i32, %c0_i32_0 : i32, i32
  }
  func.func @transform_25(%arg0: i32) -> (i32, i32) {
    %c0_i32 = arith.constant 0 : i32
    %c0_i32_0 = arith.constant 0 : i32
    %c0_i32_1 = arith.constant 0 : i32
    return %c0_i32, %c0_i32_0 : i32, i32
  }
  func.func @transform_26(%arg0: i32) -> (i32, i32) {
    %c0_i32 = arith.constant 0 : i32
    %c0_i32_0 = arith.constant 0 : i32
    return %arg0, %c0_i32 : i32, i32
  }
  func.func @transform_27(%arg0: i32) -> (i32, i32) {
    %c0_i32 = arith.constant 0 : i32
    %c0_i32_0 = arith.constant 0 : i32
    return %arg0, %c0_i32 : i32, i32
  }
  func.func @transform_28(%arg0: i32) -> (i32, i32) {
    %c0_i32 = arith.constant 0 : i32
    %c0_i32_0 = arith.constant 0 : i32
    return %arg0, %c0_i32 : i32, i32
  }
  func.func @transform_29(%arg0: i32) -> (i32, i32) {
    %c0_i32 = arith.constant 0 : i32
    %c0_i32_0 = arith.constant 0 : i32
    return %arg0, %c0_i32 : i32, i32
  }
  func.func @transform_30(%arg0: i32) -> (i32, i32) {
    %c0_i32 = arith.constant 0 : i32
    %c0_i32_0 = arith.constant 0 : i32
    return %arg0, %c0_i32 : i32, i32
  }
  func.func @transform_31(%arg0: i32) -> (i32, i32) {
    %c0_i32 = arith.constant 0 : i32
    %c0_i32_0 = arith.constant 0 : i32
    return %arg0, %c0_i32 : i32, i32
  }
  func.func @transform_32(%arg0: i32) -> (i32, i32) {
    %c0_i32 = arith.constant 0 : i32
    %c0_i32_0 = arith.constant 0 : i32
    return %arg0, %c0_i32 : i32, i32
  }
}

</mosaic_0001>

<llo_original>
// kernel: tpu_custom_call.1
$region0: #{tpu_custom_call.1}
  #allocation0 [shape = 'u32[]', space=smem, size = 0x4, offset = 0x4, fixed_abs, tag = 'smem constant byte address 0x4 - core index']
  #allocation1 [shape = 'u32[72,128]{1,0:T(1,128)}', space=vmem, size = 0x9000, scoped, tag = 'internal scratch']
  %s0 = inlined_call_operand.smem [shape: u32[33], index: -1, kind: input, shape index: {}]
  %s1 = sld [smem:[%s0]]
  %s2 = scalar_lea.smem %s0, 1
  %s3 = sld [smem:[%s2]]
  %s4 = scalar_lea.smem %s0, 2
  %s5 = sld [smem:[%s4]]
  %s6 = scalar_lea.smem %s0, 3
  %s7 = sld [smem:[%s6]]
  %s8 = scalar_lea.smem %s0, 4
  %s9 = sld [smem:[%s8]]
  %s10 = scalar_lea.smem %s0, 5
  %s11 = sld [smem:[%s10]]
  %s12 = scalar_lea.smem %s0, 6
  %s13 = sld [smem:[%s12]]
  %s14 = scalar_lea.smem %s0, 7
  %s15 = sld [smem:[%s14]]
  %s16 = scalar_lea.smem %s0, 8
  %s17 = sld [smem:[%s16]]
  %s18 = scalar_lea.smem %s0, 9
  %s19 = sld [smem:[%s18]]
  %s20 = scalar_lea.smem %s0, 10
  %s21 = sld [smem:[%s20]]
  %s22 = scalar_lea.smem %s0, 11
  %s23 = sld [smem:[%s22]]
  %s24 = scalar_lea.smem %s0, 12
  %s25 = sld [smem:[%s24]]
  %s26 = scalar_lea.smem %s0, 13
  %s27 = sld [smem:[%s26]]
  %s28 = scalar_lea.smem %s0, 14
  %s29 = sld [smem:[%s28]]
  %s30 = scalar_lea.smem %s0, 15
  %s31 = sld [smem:[%s30]]
  %s32 = scalar_lea.smem %s0, 16
  %s33 = sld [smem:[%s32]]
  %s34 = scalar_lea.smem %s0, 17
  %s35 = sld [smem:[%s34]]
  %s36 = scalar_lea.smem %s0, 18
  %s37 = sld [smem:[%s36]]
  %s38 = scalar_lea.smem %s0, 19
  %s39 = sld [smem:[%s38]]
  %s40 = scalar_lea.smem %s0, 20
  %s41 = sld [smem:[%s40]]
  %s42 = scalar_lea.smem %s0, 21
  %s43 = sld [smem:[%s42]]
  %s44 = scalar_lea.smem %s0, 22
  %s45 = sld [smem:[%s44]]
  %s46 = scalar_lea.smem %s0, 23
  %s47 = sld [smem:[%s46]]
  %s48 = scalar_lea.smem %s0, 24
  %s49 = sld [smem:[%s48]]
  %s50 = scalar_lea.smem %s0, 25
  %s51 = sld [smem:[%s50]]
  %s52 = scalar_lea.smem %s0, 26
  %s53 = sld [smem:[%s52]]
  %s54 = scalar_lea.smem %s0, 27
  %s55 = sld [smem:[%s54]]
  %s56 = scalar_lea.smem %s0, 28
  %s57 = sld [smem:[%s56]]
  %s58 = scalar_lea.smem %s0, 29
  %s59 = sld [smem:[%s58]]
  %s60 = scalar_lea.smem %s0, 30
  %s61 = sld [smem:[%s60]]
  %s62 = scalar_lea.smem %s0, 31
  %s63 = sld [smem:[%s62]]
  %s64 = scalar_lea.smem %s0, 32
  %s65 = sld [smem:[%s64]]
  %66 = xla_tuple %s53, %s55, %s57, %s59, %s61, %s63, %s65
  %s67 = sld [smem:[#allocation0]]
  $region261: #{tpu_custom_call.1} parent=0
    _
  %s69 = ssub.s32 1, %s67
  %s70 = scalar_select 0, %s69, %s67
  $region1: #{tpu_custom_call.1} parent=0
    #allocation2 [shape = 'u8[65536]{0}', space=vmem, size = 0x10000, scoped, tag = 'input window, operand 0']
    #allocation3 [shape = 's32[2]{0}', space=sflag, size = 0x8, scoped, tag = 'scoped memory for tpu_custom_call.1']
    #allocation4 [shape = 's32[2]{0}', space=sflag, size = 0x8, scoped, tag = 'scoped memory for tpu_custom_call.1']
    #allocation5 [shape = 'u8[65536]{0}', space=vmem, size = 0x10000, scoped, tag = 'input window, operand 1']
    #allocation6 [shape = 's32[2]{0}', space=sflag, size = 0x8, scoped, tag = 'scoped memory for tpu_custom_call.1']
    #allocation7 [shape = 'u8[65536]{0}', space=vmem, size = 0x10000, scoped, tag = 'input window, operand 2']
    #allocation8 [shape = 'u8[65536]{0}', space=vmem, size = 0x10000, scoped, tag = 'input window, operand 3']
    #allocation9 [shape = 's32[2]{0}', space=sflag, size = 0x8, scoped, tag = 'scoped memory for tpu_custom_call.1']
    #allocation10 [shape = 'u8[65536]{0}', space=vmem, size = 0x10000, scoped, tag = 'input window, operand 4']
    #allocation11 [shape = 'u8[65536]{0}', space=vmem, size = 0x10000, scoped, tag = 'input window, operand 5']
    #allocation12 [shape = 's32[2]{0}', space=sflag, size = 0x8, scoped, tag = 'scoped memory for tpu_custom_call.1']
    #allocation13 [shape = 'u8[65536]{0}', space=vmem, size = 0x10000, scoped, tag = 'input window, operand 6']
    #allocation14 [shape = 'u8[65536]{0}', space=vmem, size = 0x10000, scoped, tag = 'input window, operand 7']
    #allocation15 [shape = 's32[2]{0}', space=sflag, size = 0x8, scoped, tag = 'scoped memory for tpu_custom_call.1']
    #allocation16 [shape = 'u8[65536]{0}', space=vmem, size = 0x10000, scoped, tag = 'input window, operand 8']
    #allocation17 [shape = 'u8[65536]{0}', space=vmem, size = 0x10000, scoped, tag = 'input window, operand 9']
    #allocation18 [shape = 's32[2]{0}', space=sflag, size = 0x8, scoped, tag = 'scoped memory for tpu_custom_call.1']
    #allocation19 [shape = 'u8[131072]{0}', space=vmem, size = 0x20000, scoped, tag = 'input window, operand 12, single buffered']
    #allocation20 [shape = 'u8[512]{0}', space=vmem, size = 0x400, scoped, tag = 'input window, operand 13, single buffered']
    #allocation21 [shape = 's32[1]{0}', space=sflag, size = 0x4, scoped, tag = 'scoped memory for tpu_custom_call.1']
    #allocation22 [shape = 'u8[32768]{0}', space=vmem, size = 0x8000, scoped, tag = 'input window, operand 14, single buffered']
    #allocation23 [shape = 'u8[512]{0}', space=vmem, size = 0x400, scoped, tag = 'input window, operand 15, single buffered']
    #allocation24 [shape = 's32[1]{0}', space=sflag, size = 0x4, scoped, tag = 'scoped memory for tpu_custom_call.1']
    #allocation25 [shape = 'u8[32768]{0}', space=vmem, size = 0x8000, scoped, tag = 'input window, operand 16, single buffered']
    #allocation26 [shape = 'u8[65536]{0}', space=vmem, size = 0x10000, scoped, tag = 'input window, operand 18, single buffered']
    #allocation27 [shape = 's32[1]{0}', space=sflag, size = 0x4, scoped, tag = 'scoped memory for tpu_custom_call.1']
    #allocation28 [shape = 'u8[65536]{0}', space=vmem, size = 0x10000, scoped, tag = 'input window, operand 20, single buffered']
    #allocation29 [shape = 'u8[65536]{0}', space=vmem, size = 0x10000, scoped, tag = 'input window, operand 22, single buffered']
    #allocation30 [shape = 's32[1]{0}', space=sflag, size = 0x4, scoped, tag = 'scoped memory for tpu_custom_call.1']
    #allocation31 [shape = 'u8[32768]{0}', space=vmem, size = 0x8000, scoped, tag = 'input window, operand 24, single buffered']
    #allocation32 [shape = 'u8[65536]{0}', space=vmem, size = 0x10000, scoped, tag = 'output window, operand 0']
    #allocation33 [shape = 'u8[65536]{0}', space=vmem, size = 0x10000, scoped, tag = 'output window, operand 1']
    #allocation34 [shape = 's32[2]{0}', space=sflag, size = 0x8, scoped, tag = 'scoped memory for tpu_custom_call.1']
    #allocation35 [shape = 'u8[65536]{0}', space=vmem, size = 0x10000, scoped, tag = 'output window, operand 2']
    #allocation36 [shape = 'u8[131072]{0}', space=vmem, size = 0x20000, scoped, tag = 'output window, operand 3']
    #allocation37 [shape = 's32[2]{0}', space=sflag, size = 0x8, scoped, tag = 'scoped memory for tpu_custom_call.1']
    #allocation38 [shape = 'u8[131072]{0}', space=vmem, size = 0x20000, scoped, tag = 'output window, operand 4']
    #allocation39 [shape = 'u8[131072]{0}', space=vmem, size = 0x20000, scoped, tag = 'output window, operand 5']
    #allocation40 [shape = 's32[2]{0}', space=sflag, size = 0x8, scoped, tag = 'scoped memory for tpu_custom_call.1']
    #allocation41 [shape = 'u8[65536]{0}', space=vmem, size = 0x10000, scoped, tag = 'output window, operand 6']
    %71 = vsyncpa [#allocation3], 0
    %s72 = scalar_lea.sflag [#allocation3], 1
    %73 = vsyncpa %s72, 0
    %74 = vsyncpa [#allocation6], 0
    %s75 = scalar_lea.sflag [#allocation6], 1
    %76 = vsyncpa %s75, 0
    %77 = vsyncpa [#allocation9], 0
    %s78 = scalar_lea.sflag [#allocation9], 1
    %79 = vsyncpa %s78, 0
    %80 = vsyncpa [#allocation12], 0
    %s81 = scalar_lea.sflag [#allocation12], 1
    %82 = vsyncpa %s81, 0
    %83 = vsyncpa [#allocation15], 0
    %s84 = scalar_lea.sflag [#allocation15], 1
    %85 = vsyncpa %s84, 0
    %86 = vsyncpa [#allocation18], 0
    %s87 = scalar_lea.sflag [#allocation18], 1
    %88 = vsyncpa %s87, 0
    %89 = vsyncpa [#allocation21], 0
    %90 = vsyncpa [#allocation24], 0
    %91 = vsyncpa [#allocation27], 0
    %92 = vsyncpa [#allocation30], 0
    %93 = vsyncpa [#allocation4], 0
    %s94 = scalar_lea.sflag [#allocation4], 1
    %95 = vsyncpa %s94, 0
    %96 = vsyncpa [#allocation34], 0
    %s97 = scalar_lea.sflag [#allocation34], 1
    %98 = vsyncpa %s97, 0
    %99 = vsyncpa [#allocation37], 0
    %s100 = scalar_lea.sflag [#allocation37], 1
    %101 = vsyncpa %s100, 0
    %102 = vsyncpa [#allocation40], 0
    %s103 = scalar_lea.sflag [#allocation40], 1
    %104 = vsyncpa %s103, 0
    loop: start=0, step=1, limit=4
    $region2: #{tpu_custom_call.1} parent=1 // loop_pre_header
      _
    $region3: #{tpu_custom_call.1} parent=1 // loop_header
      %s106 = sphi 0, %s110
      %p107 = scmp.ge.s32.totalorder %s106, 4
      %s116 = sphi 0, %s118
      %s119 = sphi 0, %s116
      %s120 = sphi 0, %s119
      %s136 = sphi 0, %s120
      %s142 = sphi 0, %s144
      %s145 = sphi 0, %s142
      %s146 = sphi 0, %s145
      %s162 = sphi 0, %s146
      %s168 = sphi 0, %s170
      %s171 = sphi 0, %s168
      %s172 = sphi 0, %s171
      %s188 = sphi 0, %s172
      %s194 = sphi 0, %s196
      %s197 = sphi 0, %s194
      %s198 = sphi 0, %s197
      %s214 = sphi 0, %s198
      %s220 = sphi 0, %s222
      %s223 = sphi 0, %s220
      %s224 = sphi 0, %s223
      %s240 = sphi 0, %s224
      %s246 = sphi 0, %s248
      %s249 = sphi 0, %s246
      %s250 = sphi 0, %s249
      %s266 = sphi 0, %s250
      %s272 = sphi 0, %s274
      %s275 = sphi 0, %s272
      %s276 = sphi 0, %s275
      %s292 = sphi 0, %s276
      %s298 = sphi 0, %s300
      %s301 = sphi 0, %s298
      %s302 = sphi 0, %s301
      %s318 = sphi 0, %s302
      %s324 = sphi 0, %s326
      %s327 = sphi 0, %s324
      %s328 = sphi 0, %s327
      %s344 = sphi 0, %s328
      %s350 = sphi 0, %s352
      %s353 = sphi 0, %s350
      %s354 = sphi 0, %s353
      %s370 = sphi 0, %s354
      %s374 = sphi 0, %s374
      %s376 = sphi 0, %s374
      %s377 = sphi 0, %s376
      %s391 = sphi 0, %s377
      %s395 = sphi 0, %s395
      %s397 = sphi 0, %s395
      %s398 = sphi 0, %s397
      %s412 = sphi 0, %s398
      %s416 = sphi 0, %s416
      %s418 = sphi 0, %s416
      %s419 = sphi 0, %s418
      %s433 = sphi 0, %s419
      %s437 = sphi 0, %s437
      %s439 = sphi 0, %s437
      %s440 = sphi 0, %s439
      %s454 = sphi 0, %s440
      %s458 = sphi 0, %s458
      %s460 = sphi 0, %s458
      %s461 = sphi 0, %s460
      %s475 = sphi 0, %s461
      %s479 = sphi 0, %s479
      %s481 = sphi 0, %s479
      %s482 = sphi 0, %s481
      %s496 = sphi 0, %s482
      %s500 = sphi 0, %s500
      %s502 = sphi 0, %s500
      %s503 = sphi 0, %s502
      %s517 = sphi 0, %s503
      %s521 = sphi 0, %s521
      %s523 = sphi 0, %s521
      %s524 = sphi 0, %s523
      %s538 = sphi 0, %s524
      %s542 = sphi 0, %s542
      %s544 = sphi 0, %s542
      %s545 = sphi 0, %s544
      %s559 = sphi 0, %s545
      %s563 = sphi 0, %s563
      %s565 = sphi 0, %s563
      %s566 = sphi 0, %s565
      %s580 = sphi 0, %s566
      %s584 = sphi 0, %s584
      %s586 = sphi 0, %s584
      %s587 = sphi 0, %s586
      %s601 = sphi 0, %s587
      %s605 = sphi 0, %s605
      %s607 = sphi 0, %s605
      %s608 = sphi 0, %s607
      %s622 = sphi 0, %s608
      %s626 = sphi 0, %s626
      %s628 = sphi 0, %s626
      %s629 = sphi 0, %s628
      %s643 = sphi 0, %s629
      %s647 = sphi 0, %s647
      %s649 = sphi 0, %s647
      %s650 = sphi 0, %s649
      %s664 = sphi 0, %s650
      %s668 = sphi 0, %s668
      %s670 = sphi 0, %s668
      %s671 = sphi 0, %s670
      %s685 = sphi 0, %s671
      %s689 = sphi 0, %s689
      %s691 = sphi 0, %s689
      %s692 = sphi 0, %s691
      %s706 = sphi 0, %s692
      %s712 = sphi 0, %s714
      %s715 = sphi 0, %s712
      %s716 = sphi 0, %s715
      %s732 = sphi 0, %s716
      %s738 = sphi 0, %s740
      %s741 = sphi 0, %s738
      %s742 = sphi 0, %s741
      %s758 = sphi 0, %s742
      %s764 = sphi 0, %s766
      %s767 = sphi 0, %s764
      %s768 = sphi 0, %s767
      %s784 = sphi 0, %s768
      %s790 = sphi 0, %s792
      %s793 = sphi 0, %s790
      %s794 = sphi 0, %s793
      %s810 = sphi 0, %s794
      %s816 = sphi 0, %s818
      %s819 = sphi 0, %s816
      %s820 = sphi 0, %s819
      %s836 = sphi 0, %s820
      %s842 = sphi 0, %s844
      %s845 = sphi 0, %s842
      %s846 = sphi 0, %s845
      %s862 = sphi 0, %s846
      %s868 = sphi 0, %s870
      %s871 = sphi 0, %s868
      %s872 = sphi 0, %s871
      %s888 = sphi 0, %s872
    $region4: #{tpu_custom_call.1} parent=1 // loop_header_branch
      %109 = sbr.rel (%p107) target = $region8
    $region5: #{tpu_custom_call.1} parent=1 // loop_body
      %s111 = ssub.s32 %s106, 1
      %s112 = ssub.s32 %s106, 2
      %s113 = sadd.s32 %s106, 1
      %s114 = ssub.s32 %s106, %s113
      %p115 = scmp.eq.s32.totalorder %s114, 0
      %s117 = sadd.s32 %s116, 1
      %s118 = scalar_select %p115, %s116, %s117
      %p121 = pneg %p115
      %p122 = scmp.eq.s32.totalorder %s106, 1
      %p123 = por %p121, %p122
      %p124 = scmp.ne.s32.totalorder %s116, %s119
      %p125 = scmp.eq.s32.totalorder %s106, 0
      %p126 = por %p124, %p125
      %p127 = scmp.ne.s32.totalorder %s116, %s119
      %p128 = scmp.eq.s32.totalorder %s111, 1
      %p129 = por %p127, %p128
      %p130 = scmp.ne.s32.totalorder %s119, %s120
      %p131 = scmp.eq.s32.totalorder %s111, 0
      %p132 = por %p130, %p131
      %p133 = scmp.ne.s32.totalorder %s119, %s120
      %p134 = scmp.eq.s32.totalorder %s112, 1
      %p135 = por %p133, %p134
      %p137 = scmp.ne.s32.totalorder %s120, %s136
      %p138 = scmp.eq.s32.totalorder %s112, 0
      %p139 = por %p137, %p138
      %s140 = ssub.s32 %s106, %s113
      %p141 = scmp.eq.s32.totalorder %s140, 0
      %s143 = sadd.s32 %s142, 1
      %s144 = scalar_select %p141, %s142, %s143
      %p147 = pneg %p141
      %p148 = scmp.eq.s32.totalorder %s106, 1
      %p149 = por %p147, %p148
      %p150 = scmp.ne.s32.totalorder %s142, %s145
      %p151 = scmp.eq.s32.totalorder %s106, 0
      %p152 = por %p150, %p151
      %p153 = scmp.ne.s32.totalorder %s142, %s145
      %p154 = scmp.eq.s32.totalorder %s111, 1
      %p155 = por %p153, %p154
      %p156 = scmp.ne.s32.totalorder %s145, %s146
      %p157 = scmp.eq.s32.totalorder %s111, 0
      %p158 = por %p156, %p157
      %p159 = scmp.ne.s32.totalorder %s145, %s146
      %p160 = scmp.eq.s32.totalorder %s112, 1
      %p161 = por %p159, %p160
      %p163 = scmp.ne.s32.totalorder %s146, %s162
      %p164 = scmp.eq.s32.totalorder %s112, 0
      %p165 = por %p163, %p164
      %s166 = ssub.s32 %s106, %s113
      %p167 = scmp.eq.s32.totalorder %s166, 0
      %s169 = sadd.s32 %s168, 1
      %s170 = scalar_select %p167, %s168, %s169
      %p173 = pneg %p167
      %p174 = scmp.eq.s32.totalorder %s106, 1
      %p175 = por %p173, %p174
      %p176 = scmp.ne.s32.totalorder %s168, %s171
      %p177 = scmp.eq.s32.totalorder %s106, 0
      %p178 = por %p176, %p177
      %p179 = scmp.ne.s32.totalorder %s168, %s171
      %p180 = scmp.eq.s32.totalorder %s111, 1
      %p181 = por %p179, %p180
      %p182 = scmp.ne.s32.totalorder %s171, %s172
      %p183 = scmp.eq.s32.totalorder %s111, 0
      %p184 = por %p182, %p183
      %p185 = scmp.ne.s32.totalorder %s171, %s172
      %p186 = scmp.eq.s32.totalorder %s112, 1
      %p187 = por %p185, %p186
      %p189 = scmp.ne.s32.totalorder %s172, %s188
      %p190 = scmp.eq.s32.totalorder %s112, 0
      %p191 = por %p189, %p190
      %s192 = ssub.s32 %s106, %s113
      %p193 = scmp.eq.s32.totalorder %s192, 0
      %s195 = sadd.s32 %s194, 1
      %s196 = scalar_select %p193, %s194, %s195
      %p199 = pneg %p193
      %p200 = scmp.eq.s32.totalorder %s106, 1
      %p201 = por %p199, %p200
      %p202 = scmp.ne.s32.totalorder %s194, %s197
      %p203 = scmp.eq.s32.totalorder %s106, 0
      %p204 = por %p202, %p203
      %p205 = scmp.ne.s32.totalorder %s194, %s197
      %p206 = scmp.eq.s32.totalorder %s111, 1
      %p207 = por %p205, %p206
      %p208 = scmp.ne.s32.totalorder %s197, %s198
      %p209 = scmp.eq.s32.totalorder %s111, 0
      %p210 = por %p208, %p209
      %p211 = scmp.ne.s32.totalorder %s197, %s198
      %p212 = scmp.eq.s32.totalorder %s112, 1
      %p213 = por %p211, %p212
      %p215 = scmp.ne.s32.totalorder %s198, %s214
      %p216 = scmp.eq.s32.totalorder %s112, 0
      %p217 = por %p215, %p216
      %s218 = ssub.s32 %s106, %s113
      %p219 = scmp.eq.s32.totalorder %s218, 0
      %s221 = sadd.s32 %s220, 1
      %s222 = scalar_select %p219, %s220, %s221
      %p225 = pneg %p219
      %p226 = scmp.eq.s32.totalorder %s106, 1
      %p227 = por %p225, %p226
      %p228 = scmp.ne.s32.totalorder %s220, %s223
      %p229 = scmp.eq.s32.totalorder %s106, 0
      %p230 = por %p228, %p229
      %p231 = scmp.ne.s32.totalorder %s220, %s223
      %p232 = scmp.eq.s32.totalorder %s111, 1
      %p233 = por %p231, %p232
      %p234 = scmp.ne.s32.totalorder %s223, %s224
      %p235 = scmp.eq.s32.totalorder %s111, 0
      %p236 = por %p234, %p235
      %p237 = scmp.ne.s32.totalorder %s223, %s224
      %p238 = scmp.eq.s32.totalorder %s112, 1
      %p239 = por %p237, %p238
      %p241 = scmp.ne.s32.totalorder %s224, %s240
      %p242 = scmp.eq.s32.totalorder %s112, 0
      %p243 = por %p241, %p242
      %s244 = ssub.s32 %s106, %s113
      %p245 = scmp.eq.s32.totalorder %s244, 0
      %s247 = sadd.s32 %s246, 1
      %s248 = scalar_select %p245, %s246, %s247
      %p251 = pneg %p245
      %p252 = scmp.eq.s32.totalorder %s106, 1
      %p253 = por %p251, %p252
      %p254 = scmp.ne.s32.totalorder %s246, %s249
      %p255 = scmp.eq.s32.totalorder %s106, 0
      %p256 = por %p254, %p255
      %p257 = scmp.ne.s32.totalorder %s246, %s249
      %p258 = scmp.eq.s32.totalorder %s111, 1
      %p259 = por %p257, %p258
      %p260 = scmp.ne.s32.totalorder %s249, %s250
      %p261 = scmp.eq.s32.totalorder %s111, 0
      %p262 = por %p260, %p261
      %p263 = scmp.ne.s32.totalorder %s249, %s250
      %p264 = scmp.eq.s32.totalorder %s112, 1
      %p265 = por %p263, %p264
      %p267 = scmp.ne.s32.totalorder %s250, %s266
      %p268 = scmp.eq.s32.totalorder %s112, 0
      %p269 = por %p267, %p268
      %s270 = ssub.s32 %s106, %s113
      %p271 = scmp.eq.s32.totalorder %s270, 0
      %s273 = sadd.s32 %s272, 1
      %s274 = scalar_select %p271, %s272, %s273
      %p277 = pneg %p271
      %p278 = scmp.eq.s32.totalorder %s106, 1
      %p279 = por %p277, %p278
      %p280 = scmp.ne.s32.totalorder %s272, %s275
      %p281 = scmp.eq.s32.totalorder %s106, 0
      %p282 = por %p280, %p281
      %p283 = scmp.ne.s32.totalorder %s272, %s275
      %p284 = scmp.eq.s32.totalorder %s111, 1
      %p285 = por %p283, %p284
      %p286 = scmp.ne.s32.totalorder %s275, %s276
      %p287 = scmp.eq.s32.totalorder %s111, 0
      %p288 = por %p286, %p287
      %p289 = scmp.ne.s32.totalorder %s275, %s276
      %p290 = scmp.eq.s32.totalorder %s112, 1
      %p291 = por %p289, %p290
      %p293 = scmp.ne.s32.totalorder %s276, %s292
      %p294 = scmp.eq.s32.totalorder %s112, 0
      %p295 = por %p293, %p294
      %s296 = ssub.s32 %s106, %s113
      %p297 = scmp.eq.s32.totalorder %s296, 0
      %s299 = sadd.s32 %s298, 1
      %s300 = scalar_select %p297, %s298, %s299
      %p303 = pneg %p297
      %p304 = scmp.eq.s32.totalorder %s106, 1
      %p305 = por %p303, %p304
      %p306 = scmp.ne.s32.totalorder %s298, %s301
      %p307 = scmp.eq.s32.totalorder %s106, 0
      %p308 = por %p306, %p307
      %p309 = scmp.ne.s32.totalorder %s298, %s301
      %p310 = scmp.eq.s32.totalorder %s111, 1
      %p311 = por %p309, %p310
      %p312 = scmp.ne.s32.totalorder %s301, %s302
      %p313 = scmp.eq.s32.totalorder %s111, 0
      %p314 = por %p312, %p313
      %p315 = scmp.ne.s32.totalorder %s301, %s302
      %p316 = scmp.eq.s32.totalorder %s112, 1
      %p317 = por %p315, %p316
      %p319 = scmp.ne.s32.totalorder %s302, %s318
      %p320 = scmp.eq.s32.totalorder %s112, 0
      %p321 = por %p319, %p320
      %s322 = ssub.s32 %s106, %s113
      %p323 = scmp.eq.s32.totalorder %s322, 0
      %s325 = sadd.s32 %s324, 1
      %s326 = scalar_select %p323, %s324, %s325
      %p329 = pneg %p323
      %p330 = scmp.eq.s32.totalorder %s106, 1
      %p331 = por %p329, %p330
      %p332 = scmp.ne.s32.totalorder %s324, %s327
      %p333 = scmp.eq.s32.totalorder %s106, 0
      %p334 = por %p332, %p333
      %p335 = scmp.ne.s32.totalorder %s324, %s327
      %p336 = scmp.eq.s32.totalorder %s111, 1
      %p337 = por %p335, %p336
      %p338 = scmp.ne.s32.totalorder %s327, %s328
      %p339 = scmp.eq.s32.totalorder %s111, 0
      %p340 = por %p338, %p339
      %p341 = scmp.ne.s32.totalorder %s327, %s328
      %p342 = scmp.eq.s32.totalorder %s112, 1
      %p343 = por %p341, %p342
      %p345 = scmp.ne.s32.totalorder %s328, %s344
      %p346 = scmp.eq.s32.totalorder %s112, 0
      %p347 = por %p345, %p346
      %s348 = ssub.s32 %s106, %s113
      %p349 = scmp.eq.s32.totalorder %s348, 0
      %s351 = sadd.s32 %s350, 1
      %s352 = scalar_select %p349, %s350, %s351
      %p355 = pneg %p349
      %p356 = scmp.eq.s32.totalorder %s106, 1
      %p357 = por %p355, %p356
      %p358 = scmp.ne.s32.totalorder %s350, %s353
      %p359 = scmp.eq.s32.totalorder %s106, 0
      %p360 = por %p358, %p359
      %p361 = scmp.ne.s32.totalorder %s350, %s353
      %p362 = scmp.eq.s32.totalorder %s111, 1
      %p363 = por %p361, %p362
      %p364 = scmp.ne.s32.totalorder %s353, %s354
      %p365 = scmp.eq.s32.totalorder %s111, 0
      %p366 = por %p364, %p365
      %p367 = scmp.ne.s32.totalorder %s353, %s354
      %p368 = scmp.eq.s32.totalorder %s112, 1
      %p369 = por %p367, %p368
      %p371 = scmp.ne.s32.totalorder %s354, %s370
      %p372 = scmp.eq.s32.totalorder %s112, 0
      %p373 = por %p371, %p372
      %s375 = sadd.s32 %s374, 1
      %p378 = scmp.eq.s32.totalorder %s106, 1
      %p379 = scmp.ne.s32.totalorder %s374, %s376
      %p380 = scmp.eq.s32.totalorder %s106, 0
      %p381 = por %p379, %p380
      %p382 = scmp.ne.s32.totalorder %s374, %s376
      %p383 = scmp.eq.s32.totalorder %s111, 1
      %p384 = por %p382, %p383
      %p385 = scmp.ne.s32.totalorder %s376, %s377
      %p386 = scmp.eq.s32.totalorder %s111, 0
      %p387 = por %p385, %p386
      %p388 = scmp.ne.s32.totalorder %s376, %s377
      %p389 = scmp.eq.s32.totalorder %s112, 1
      %p390 = por %p388, %p389
      %p392 = scmp.ne.s32.totalorder %s377, %s391
      %p393 = scmp.eq.s32.totalorder %s112, 0
      %p394 = por %p392, %p393
      %s396 = sadd.s32 %s395, 1
      %p399 = scmp.eq.s32.totalorder %s106, 1
      %p400 = scmp.ne.s32.totalorder %s395, %s397
      %p401 = scmp.eq.s32.totalorder %s106, 0
      %p402 = por %p400, %p401
      %p403 = scmp.ne.s32.totalorder %s395, %s397
      %p404 = scmp.eq.s32.totalorder %s111, 1
      %p405 = por %p403, %p404
      %p406 = scmp.ne.s32.totalorder %s397, %s398
      %p407 = scmp.eq.s32.totalorder %s111, 0
      %p408 = por %p406, %p407
      %p409 = scmp.ne.s32.totalorder %s397, %s398
      %p410 = scmp.eq.s32.totalorder %s112, 1
      %p411 = por %p409, %p410
      %p413 = scmp.ne.s32.totalorder %s398, %s412
      %p414 = scmp.eq.s32.totalorder %s112, 0
      %p415 = por %p413, %p414
      %s417 = sadd.s32 %s416, 1
      %p420 = scmp.eq.s32.totalorder %s106, 1
      %p421 = scmp.ne.s32.totalorder %s416, %s418
      %p422 = scmp.eq.s32.totalorder %s106, 0
      %p423 = por %p421, %p422
      %p424 = scmp.ne.s32.totalorder %s416, %s418
      %p425 = scmp.eq.s32.totalorder %s111, 1
      %p426 = por %p424, %p425
      %p427 = scmp.ne.s32.totalorder %s418, %s419
      %p428 = scmp.eq.s32.totalorder %s111, 0
      %p429 = por %p427, %p428
      %p430 = scmp.ne.s32.totalorder %s418, %s419
      %p431 = scmp.eq.s32.totalorder %s112, 1
      %p432 = por %p430, %p431
      %p434 = scmp.ne.s32.totalorder %s419, %s433
      %p435 = scmp.eq.s32.totalorder %s112, 0
      %p436 = por %p434, %p435
      %s438 = sadd.s32 %s437, 1
      %p441 = scmp.eq.s32.totalorder %s106, 1
      %p442 = scmp.ne.s32.totalorder %s437, %s439
      %p443 = scmp.eq.s32.totalorder %s106, 0
      %p444 = por %p442, %p443
      %p445 = scmp.ne.s32.totalorder %s437, %s439
      %p446 = scmp.eq.s32.totalorder %s111, 1
      %p447 = por %p445, %p446
      %p448 = scmp.ne.s32.totalorder %s439, %s440
      %p449 = scmp.eq.s32.totalorder %s111, 0
      %p450 = por %p448, %p449
      %p451 = scmp.ne.s32.totalorder %s439, %s440
      %p452 = scmp.eq.s32.totalorder %s112, 1
      %p453 = por %p451, %p452
      %p455 = scmp.ne.s32.totalorder %s440, %s454
      %p456 = scmp.eq.s32.totalorder %s112, 0
      %p457 = por %p455, %p456
      %s459 = sadd.s32 %s458, 1
      %p462 = scmp.eq.s32.totalorder %s106, 1
      %p463 = scmp.ne.s32.totalorder %s458, %s460
      %p464 = scmp.eq.s32.totalorder %s106, 0
      %p465 = por %p463, %p464
      %p466 = scmp.ne.s32.totalorder %s458, %s460
      %p467 = scmp.eq.s32.totalorder %s111, 1
      %p468 = por %p466, %p467
      %p469 = scmp.ne.s32.totalorder %s460, %s461
      %p470 = scmp.eq.s32.totalorder %s111, 0
      %p471 = por %p469, %p470
      %p472 = scmp.ne.s32.totalorder %s460, %s461
      %p473 = scmp.eq.s32.totalorder %s112, 1
      %p474 = por %p472, %p473
      %p476 = scmp.ne.s32.totalorder %s461, %s475
      %p477 = scmp.eq.s32.totalorder %s112, 0
      %p478 = por %p476, %p477
      %s480 = sadd.s32 %s479, 1
      %p483 = scmp.eq.s32.totalorder %s106, 1
      %p484 = scmp.ne.s32.totalorder %s479, %s481
      %p485 = scmp.eq.s32.totalorder %s106, 0
      %p486 = por %p484, %p485
      %p487 = scmp.ne.s32.totalorder %s479, %s481
      %p488 = scmp.eq.s32.totalorder %s111, 1
      %p489 = por %p487, %p488
      %p490 = scmp.ne.s32.totalorder %s481, %s482
      %p491 = scmp.eq.s32.totalorder %s111, 0
      %p492 = por %p490, %p491
      %p493 = scmp.ne.s32.totalorder %s481, %s482
      %p494 = scmp.eq.s32.totalorder %s112, 1
      %p495 = por %p493, %p494
      %p497 = scmp.ne.s32.totalorder %s482, %s496
      %p498 = scmp.eq.s32.totalorder %s112, 0
      %p499 = por %p497, %p498
      %s501 = sadd.s32 %s500, 1
      %p504 = scmp.eq.s32.totalorder %s106, 1
      %p505 = scmp.ne.s32.totalorder %s500, %s502
      %p506 = scmp.eq.s32.totalorder %s106, 0
      %p507 = por %p505, %p506
      %p508 = scmp.ne.s32.totalorder %s500, %s502
      %p509 = scmp.eq.s32.totalorder %s111, 1
      %p510 = por %p508, %p509
      %p511 = scmp.ne.s32.totalorder %s502, %s503
      %p512 = scmp.eq.s32.totalorder %s111, 0
      %p513 = por %p511, %p512
      %p514 = scmp.ne.s32.totalorder %s502, %s503
      %p515 = scmp.eq.s32.totalorder %s112, 1
      %p516 = por %p514, %p515
      %p518 = scmp.ne.s32.totalorder %s503, %s517
      %p519 = scmp.eq.s32.totalorder %s112, 0
      %p520 = por %p518, %p519
      %s522 = sadd.s32 %s521, 1
      %p525 = scmp.eq.s32.totalorder %s106, 1
      %p526 = scmp.ne.s32.totalorder %s521, %s523
      %p527 = scmp.eq.s32.totalorder %s106, 0
      %p528 = por %p526, %p527
      %p529 = scmp.ne.s32.totalorder %s521, %s523
      %p530 = scmp.eq.s32.totalorder %s111, 1
      %p531 = por %p529, %p530
      %p532 = scmp.ne.s32.totalorder %s523, %s524
      %p533 = scmp.eq.s32.totalorder %s111, 0
      %p534 = por %p532, %p533
      %p535 = scmp.ne.s32.totalorder %s523, %s524
      %p536 = scmp.eq.s32.totalorder %s112, 1
      %p537 = por %p535, %p536
      %p539 = scmp.ne.s32.totalorder %s524, %s538
      %p540 = scmp.eq.s32.totalorder %s112, 0
      %p541 = por %p539, %p540
      %s543 = sadd.s32 %s542, 1
      %p546 = scmp.eq.s32.totalorder %s106, 1
      %p547 = scmp.ne.s32.totalorder %s542, %s544
      %p548 = scmp.eq.s32.totalorder %s106, 0
      %p549 = por %p547, %p548
      %p550 = scmp.ne.s32.totalorder %s542, %s544
      %p551 = scmp.eq.s32.totalorder %s111, 1
      %p552 = por %p550, %p551
      %p553 = scmp.ne.s32.totalorder %s544, %s545
      %p554 = scmp.eq.s32.totalorder %s111, 0
      %p555 = por %p553, %p554
      %p556 = scmp.ne.s32.totalorder %s544, %s545
      %p557 = scmp.eq.s32.totalorder %s112, 1
      %p558 = por %p556, %p557
      %p560 = scmp.ne.s32.totalorder %s545, %s559
      %p561 = scmp.eq.s32.totalorder %s112, 0
      %p562 = por %p560, %p561
      %s564 = sadd.s32 %s563, 1
      %p567 = scmp.eq.s32.totalorder %s106, 1
      %p568 = scmp.ne.s32.totalorder %s563, %s565
      %p569 = scmp.eq.s32.totalorder %s106, 0
      %p570 = por %p568, %p569
      %p571 = scmp.ne.s32.totalorder %s563, %s565
      %p572 = scmp.eq.s32.totalorder %s111, 1
      %p573 = por %p571, %p572
      %p574 = scmp.ne.s32.totalorder %s565, %s566
      %p575 = scmp.eq.s32.totalorder %s111, 0
      %p576 = por %p574, %p575
      %p577 = scmp.ne.s32.totalorder %s565, %s566
      %p578 = scmp.eq.s32.totalorder %s112, 1
      %p579 = por %p577, %p578
      %p581 = scmp.ne.s32.totalorder %s566, %s580
      %p582 = scmp.eq.s32.totalorder %s112, 0
      %p583 = por %p581, %p582
      %s585 = sadd.s32 %s584, 1
      %p588 = scmp.eq.s32.totalorder %s106, 1
      %p589 = scmp.ne.s32.totalorder %s584, %s586
      %p590 = scmp.eq.s32.totalorder %s106, 0
      %p591 = por %p589, %p590
      %p592 = scmp.ne.s32.totalorder %s584, %s586
      %p593 = scmp.eq.s32.totalorder %s111, 1
      %p594 = por %p592, %p593
      %p595 = scmp.ne.s32.totalorder %s586, %s587
      %p596 = scmp.eq.s32.totalorder %s111, 0
      %p597 = por %p595, %p596
      %p598 = scmp.ne.s32.totalorder %s586, %s587
      %p599 = scmp.eq.s32.totalorder %s112, 1
      %p600 = por %p598, %p599
      %p602 = scmp.ne.s32.totalorder %s587, %s601
      %p603 = scmp.eq.s32.totalorder %s112, 0
      %p604 = por %p602, %p603
      %s606 = sadd.s32 %s605, 1
      %p609 = scmp.eq.s32.totalorder %s106, 1
      %p610 = scmp.ne.s32.totalorder %s605, %s607
      %p611 = scmp.eq.s32.totalorder %s106, 0
      %p612 = por %p610, %p611
      %p613 = scmp.ne.s32.totalorder %s605, %s607
      %p614 = scmp.eq.s32.totalorder %s111, 1
      %p615 = por %p613, %p614
      %p616 = scmp.ne.s32.totalorder %s607, %s608
      %p617 = scmp.eq.s32.totalorder %s111, 0
      %p618 = por %p616, %p617
      %p619 = scmp.ne.s32.totalorder %s607, %s608
      %p620 = scmp.eq.s32.totalorder %s112, 1
      %p621 = por %p619, %p620
      %p623 = scmp.ne.s32.totalorder %s608, %s622
      %p624 = scmp.eq.s32.totalorder %s112, 0
      %p625 = por %p623, %p624
      %s627 = sadd.s32 %s626, 1
      %p630 = scmp.eq.s32.totalorder %s106, 1
      %p631 = scmp.ne.s32.totalorder %s626, %s628
      %p632 = scmp.eq.s32.totalorder %s106, 0
      %p633 = por %p631, %p632
      %p634 = scmp.ne.s32.totalorder %s626, %s628
      %p635 = scmp.eq.s32.totalorder %s111, 1
      %p636 = por %p634, %p635
      %p637 = scmp.ne.s32.totalorder %s628, %s629
      %p638 = scmp.eq.s32.totalorder %s111, 0
      %p639 = por %p637, %p638
      %p640 = scmp.ne.s32.totalorder %s628, %s629
      %p641 = scmp.eq.s32.totalorder %s112, 1
      %p642 = por %p640, %p641
      %p644 = scmp.ne.s32.totalorder %s629, %s643
      %p645 = scmp.eq.s32.totalorder %s112, 0
      %p646 = por %p644, %p645
      %s648 = sadd.s32 %s647, 1
      %p651 = scmp.eq.s32.totalorder %s106, 1
      %p652 = scmp.ne.s32.totalorder %s647, %s649
      %p653 = scmp.eq.s32.totalorder %s106, 0
      %p654 = por %p652, %p653
      %p655 = scmp.ne.s32.totalorder %s647, %s649
      %p656 = scmp.eq.s32.totalorder %s111, 1
      %p657 = por %p655, %p656
      %p658 = scmp.ne.s32.totalorder %s649, %s650
      %p659 = scmp.eq.s32.totalorder %s111, 0
      %p660 = por %p658, %p659
      %p661 = scmp.ne.s32.totalorder %s649, %s650
      %p662 = scmp.eq.s32.totalorder %s112, 1
      %p663 = por %p661, %p662
      %p665 = scmp.ne.s32.totalorder %s650, %s664
      %p666 = scmp.eq.s32.totalorder %s112, 0
      %p667 = por %p665, %p666
      %s669 = sadd.s32 %s668, 1
      %p672 = scmp.eq.s32.totalorder %s106, 1
      %p673 = scmp.ne.s32.totalorder %s668, %s670
      %p674 = scmp.eq.s32.totalorder %s106, 0
      %p675 = por %p673, %p674
      %p676 = scmp.ne.s32.totalorder %s668, %s670
      %p677 = scmp.eq.s32.totalorder %s111, 1
      %p678 = por %p676, %p677
      %p679 = scmp.ne.s32.totalorder %s670, %s671
      %p680 = scmp.eq.s32.totalorder %s111, 0
      %p681 = por %p679, %p680
      %p682 = scmp.ne.s32.totalorder %s670, %s671
      %p683 = scmp.eq.s32.totalorder %s112, 1
      %p684 = por %p682, %p683
      %p686 = scmp.ne.s32.totalorder %s671, %s685
      %p687 = scmp.eq.s32.totalorder %s112, 0
      %p688 = por %p686, %p687
      %s690 = sadd.s32 %s689, 1
      %p693 = scmp.eq.s32.totalorder %s106, 1
      %p694 = scmp.ne.s32.totalorder %s689, %s691
      %p695 = scmp.eq.s32.totalorder %s106, 0
      %p696 = por %p694, %p695
      %p697 = scmp.ne.s32.totalorder %s689, %s691
      %p698 = scmp.eq.s32.totalorder %s111, 1
      %p699 = por %p697, %p698
      %p700 = scmp.ne.s32.totalorder %s691, %s692
      %p701 = scmp.eq.s32.totalorder %s111, 0
      %p702 = por %p700, %p701
      %p703 = scmp.ne.s32.totalorder %s691, %s692
      %p704 = scmp.eq.s32.totalorder %s112, 1
      %p705 = por %p703, %p704
      %p707 = scmp.ne.s32.totalorder %s692, %s706
      %p708 = scmp.eq.s32.totalorder %s112, 0
      %p709 = por %p707, %p708
      %s710 = ssub.s32 %s106, %s113
      %p711 = scmp.eq.s32.totalorder %s710, 0
      %s713 = sadd.s32 %s712, 1
      %s714 = scalar_select %p711, %s712, %s713
      %p717 = pneg %p711
      %p718 = scmp.eq.s32.totalorder %s106, 1
      %p719 = por %p717, %p718
      %p720 = scmp.ne.s32.totalorder %s712, %s715
      %p721 = scmp.eq.s32.totalorder %s106, 0
      %p722 = por %p720, %p721
      %p723 = scmp.ne.s32.totalorder %s712, %s715
      %p724 = scmp.eq.s32.totalorder %s111, 1
      %p725 = por %p723, %p724
      %p726 = scmp.ne.s32.totalorder %s715, %s716
      %p727 = scmp.eq.s32.totalorder %s111, 0
      %p728 = por %p726, %p727
      %p729 = scmp.ne.s32.totalorder %s715, %s716
      %p730 = scmp.eq.s32.totalorder %s112, 1
      %p731 = por %p729, %p730
      %p733 = scmp.ne.s32.totalorder %s716, %s732
      %p734 = scmp.eq.s32.totalorder %s112, 0
      %p735 = por %p733, %p734
      %s736 = ssub.s32 %s106, %s113
      %p737 = scmp.eq.s32.totalorder %s736, 0
      %s739 = sadd.s32 %s738, 1
      %s740 = scalar_select %p737, %s738, %s739
      %p743 = pneg %p737
      %p744 = scmp.eq.s32.totalorder %s106, 1
      %p745 = por %p743, %p744
      %p746 = scmp.ne.s32.totalorder %s738, %s741
      %p747 = scmp.eq.s32.totalorder %s106, 0
      %p748 = por %p746, %p747
      %p749 = scmp.ne.s32.totalorder %s738, %s741
      %p750 = scmp.eq.s32.totalorder %s111, 1
      %p751 = por %p749, %p750
      %p752 = scmp.ne.s32.totalorder %s741, %s742
      %p753 = scmp.eq.s32.totalorder %s111, 0
      %p754 = por %p752, %p753
      %p755 = scmp.ne.s32.totalorder %s741, %s742
      %p756 = scmp.eq.s32.totalorder %s112, 1
      %p757 = por %p755, %p756
      %p759 = scmp.ne.s32.totalorder %s742, %s758
      %p760 = scmp.eq.s32.totalorder %s112, 0
      %p761 = por %p759, %p760
      %s762 = ssub.s32 %s106, %s113
      %p763 = scmp.eq.s32.totalorder %s762, 0
      %s765 = sadd.s32 %s764, 1
      %s766 = scalar_select %p763, %s764, %s765
      %p769 = pneg %p763
      %p770 = scmp.eq.s32.totalorder %s106, 1
      %p771 = por %p769, %p770
      %p772 = scmp.ne.s32.totalorder %s764, %s767
      %p773 = scmp.eq.s32.totalorder %s106, 0
      %p774 = por %p772, %p773
      %p775 = scmp.ne.s32.totalorder %s764, %s767
      %p776 = scmp.eq.s32.totalorder %s111, 1
      %p777 = por %p775, %p776
      %p778 = scmp.ne.s32.totalorder %s767, %s768
      %p779 = scmp.eq.s32.totalorder %s111, 0
      %p780 = por %p778, %p779
      %p781 = scmp.ne.s32.totalorder %s767, %s768
      %p782 = scmp.eq.s32.totalorder %s112, 1
      %p783 = por %p781, %p782
      %p785 = scmp.ne.s32.totalorder %s768, %s784
      %p786 = scmp.eq.s32.totalorder %s112, 0
      %p787 = por %p785, %p786
      %s788 = ssub.s32 %s106, %s113
      %p789 = scmp.eq.s32.totalorder %s788, 0
      %s791 = sadd.s32 %s790, 1
      %s792 = scalar_select %p789, %s790, %s791
      %p795 = pneg %p789
      %p796 = scmp.eq.s32.totalorder %s106, 1
      %p797 = por %p795, %p796
      %p798 = scmp.ne.s32.totalorder %s790, %s793
      %p799 = scmp.eq.s32.totalorder %s106, 0
      %p800 = por %p798, %p799
      %p801 = scmp.ne.s32.totalorder %s790, %s793
      %p802 = scmp.eq.s32.totalorder %s111, 1
      %p803 = por %p801, %p802
      %p804 = scmp.ne.s32.totalorder %s793, %s794
      %p805 = scmp.eq.s32.totalorder %s111, 0
      %p806 = por %p804, %p805
      %p807 = scmp.ne.s32.totalorder %s793, %s794
      %p808 = scmp.eq.s32.totalorder %s112, 1
      %p809 = por %p807, %p808
      %p811 = scmp.ne.s32.totalorder %s794, %s810
      %p812 = scmp.eq.s32.totalorder %s112, 0
      %p813 = por %p811, %p812
      %s814 = ssub.s32 %s106, %s113
      %p815 = scmp.eq.s32.totalorder %s814, 0
      %s817 = sadd.s32 %s816, 1
      %s818 = scalar_select %p815, %s816, %s817
      %p821 = pneg %p815
      %p822 = scmp.eq.s32.totalorder %s106, 1
      %p823 = por %p821, %p822
      %p824 = scmp.ne.s32.totalorder %s816, %s819
      %p825 = scmp.eq.s32.totalorder %s106, 0
      %p826 = por %p824, %p825
      %p827 = scmp.ne.s32.totalorder %s816, %s819
      %p828 = scmp.eq.s32.totalorder %s111, 1
      %p829 = por %p827, %p828
      %p830 = scmp.ne.s32.totalorder %s819, %s820
      %p831 = scmp.eq.s32.totalorder %s111, 0
      %p832 = por %p830, %p831
      %p833 = scmp.ne.s32.totalorder %s819, %s820
      %p834 = scmp.eq.s32.totalorder %s112, 1
      %p835 = por %p833, %p834
      %p837 = scmp.ne.s32.totalorder %s820, %s836
      %p838 = scmp.eq.s32.totalorder %s112, 0
      %p839 = por %p837, %p838
      %s840 = ssub.s32 %s106, %s113
      %p841 = scmp.eq.s32.totalorder %s840, 0
      %s843 = sadd.s32 %s842, 1
      %s844 = scalar_select %p841, %s842, %s843
      %p847 = pneg %p841
      %p848 = scmp.eq.s32.totalorder %s106, 1
      %p849 = por %p847, %p848
      %p850 = scmp.ne.s32.totalorder %s842, %s845
      %p851 = scmp.eq.s32.totalorder %s106, 0
      %p852 = por %p850, %p851
      %p853 = scmp.ne.s32.totalorder %s842, %s845
      %p854 = scmp.eq.s32.totalorder %s111, 1
      %p855 = por %p853, %p854
      %p856 = scmp.ne.s32.totalorder %s845, %s846
      %p857 = scmp.eq.s32.totalorder %s111, 0
      %p858 = por %p856, %p857
      %p859 = scmp.ne.s32.totalorder %s845, %s846
      %p860 = scmp.eq.s32.totalorder %s112, 1
      %p861 = por %p859, %p860
      %p863 = scmp.ne.s32.totalorder %s846, %s862
      %p864 = scmp.eq.s32.totalorder %s112, 0
      %p865 = por %p863, %p864
      %s866 = ssub.s32 %s106, %s113
      %p867 = scmp.eq.s32.totalorder %s866, 0
      %s869 = sadd.s32 %s868, 1
      %s870 = scalar_select %p867, %s868, %s869
      %p873 = pneg %p867
      %p874 = scmp.eq.s32.totalorder %s106, 1
      %p875 = por %p873, %p874
      %p876 = scmp.ne.s32.totalorder %s868, %s871
      %p877 = scmp.eq.s32.totalorder %s106, 0
      %p878 = por %p876, %p877
      %p879 = scmp.ne.s32.totalorder %s868, %s871
      %p880 = scmp.eq.s32.totalorder %s111, 1
      %p881 = por %p879, %p880
      %p882 = scmp.ne.s32.totalorder %s871, %s872
      %p883 = scmp.eq.s32.totalorder %s111, 0
      %p884 = por %p882, %p883
      %p885 = scmp.ne.s32.totalorder %s871, %s872
      %p886 = scmp.eq.s32.totalorder %s112, 1
      %p887 = por %p885, %p886
      %p889 = scmp.ne.s32.totalorder %s872, %s888
      %p890 = scmp.eq.s32.totalorder %s112, 0
      %p891 = por %p889, %p890
      %p892 = scmp.le.s32.totalorder 1, %s106
      %p893 = scmp.lt.s32.totalorder %s106, 3
      %p894 = pnand %p892, %p893
      %p895 = pneg %p894
      // Predicated region
      $region9: #{tpu_custom_call.1} parent=5 // pred_check
        _
      $region10: #{tpu_custom_call.1} parent=5 // pred_check_branch
        %897 = sbr.rel (%p894) target = $region12
      $region11: #{tpu_custom_call.1} parent=5 // pred_region
        %s898 = ssub.s32 %s106, 1
        // Predicated region
        $region13: #{tpu_custom_call.1} parent=11 // pred_check
          %p899 = pneg %p387
        $region14: #{tpu_custom_call.1} parent=11 // pred_check_branch
          %901 = sbr.rel (%p899) target = $region16
        $region15: #{tpu_custom_call.1} parent=11 // pred_region
          _
        $region16: #{tpu_custom_call.1} parent=11 // pred_fallthru
          _
        // Predicated region
        $region17: #{tpu_custom_call.1} parent=11 // pred_check
          %p902 = pneg %p408
        $region18: #{tpu_custom_call.1} parent=11 // pred_check_branch
          %904 = sbr.rel (%p902) target = $region20
        $region19: #{tpu_custom_call.1} parent=11 // pred_region
          _
        $region20: #{tpu_custom_call.1} parent=11 // pred_fallthru
          _
        // Predicated region
        $region21: #{tpu_custom_call.1} parent=11 // pred_check
          %p905 = pneg %p429
        $region22: #{tpu_custom_call.1} parent=11 // pred_check_branch
          %907 = sbr.rel (%p905) target = $region24
        $region23: #{tpu_custom_call.1} parent=11 // pred_region
          %909 = vsyncadd [#allocation18], 0
          %s910 = sshll.u32 %s25, 4
          %s911 = int_to_ptr.hbm [resolvable:$true] %s910
          %s912 = sshll.u32 [#allocation19], 4
          %s913 = int_to_ptr.vmem [resolvable:$true] %s912
          %918 = dma.hbm_to_vmem [thread:$0]  %s911, 4096, %s913, [#allocation18], 64, 64, 4
        $region24: #{tpu_custom_call.1} parent=11 // pred_fallthru
          _
        // Predicated region
        $region25: #{tpu_custom_call.1} parent=11 // pred_check
          %p919 = pneg %p450
        $region26: #{tpu_custom_call.1} parent=11 // pred_check_branch
          %921 = sbr.rel (%p919) target = $region28
        $region27: #{tpu_custom_call.1} parent=11 // pred_region
          %923 = vsyncadd [#allocation21], 0
          %s925 = sshll.u32 %s27, 4
          %s926 = int_to_ptr.hbm [resolvable:$true] %s925
          %s927 = sshll.u32 [#allocation20], 4
          %s928 = int_to_ptr.vmem [resolvable:$true] %s927
          %930 = dma.hbm_to_vmem [thread:$0]  %s926, 16, %s928, [#allocation21]
        $region28: #{tpu_custom_call.1} parent=11 // pred_fallthru
          _
        // Predicated region
        $region29: #{tpu_custom_call.1} parent=11 // pred_check
          %p931 = pneg %p471
        $region30: #{tpu_custom_call.1} parent=11 // pred_check_branch
          %933 = sbr.rel (%p931) target = $region32
        $region31: #{tpu_custom_call.1} parent=11 // pred_region
          %935 = vsyncadd [#allocation21], 0
          %s936 = sshll.u32 %s29, 4
          %s937 = int_to_ptr.hbm [resolvable:$true] %s936
          %s938 = sshll.u32 [#allocation22], 4
          %s939 = int_to_ptr.vmem [resolvable:$true] %s938
          %944 = dma.hbm_to_vmem [thread:$0]  %s937, 1024, %s939, [#allocation21], 64, 64, 4
        $region32: #{tpu_custom_call.1} parent=11 // pred_fallthru
          _
        // Predicated region
        $region33: #{tpu_custom_call.1} parent=11 // pred_check
          %p945 = pneg %p492
        $region34: #{tpu_custom_call.1} parent=11 // pred_check_branch
          %947 = sbr.rel (%p945) target = $region36
        $region35: #{tpu_custom_call.1} parent=11 // pred_region
          %949 = vsyncadd [#allocation24], 0
          %s951 = sshll.u32 %s31, 4
          %s952 = int_to_ptr.hbm [resolvable:$true] %s951
          %s953 = sshll.u32 [#allocation23], 4
          %s954 = int_to_ptr.vmem [resolvable:$true] %s953
          %956 = dma.hbm_to_vmem [thread:$0]  %s952, 16, %s954, [#allocation24]
        $region36: #{tpu_custom_call.1} parent=11 // pred_fallthru
          _
        // Predicated region
        $region37: #{tpu_custom_call.1} parent=11 // pred_check
          %p957 = pneg %p513
        $region38: #{tpu_custom_call.1} parent=11 // pred_check_branch
          %959 = sbr.rel (%p957) target = $region40
        $region39: #{tpu_custom_call.1} parent=11 // pred_region
          %961 = vsyncadd [#allocation24], 0
          %s962 = sshll.u32 %s33, 4
          %s963 = int_to_ptr.hbm [resolvable:$true] %s962
          %s964 = sshll.u32 [#allocation25], 4
          %s965 = int_to_ptr.vmem [resolvable:$true] %s964
          %970 = dma.hbm_to_vmem [thread:$0]  %s963, 1024, %s965, [#allocation24], 64, 64, 4
        $region40: #{tpu_custom_call.1} parent=11 // pred_fallthru
          _
        // Predicated region
        $region41: #{tpu_custom_call.1} parent=11 // pred_check
          %p971 = pneg %p534
        $region42: #{tpu_custom_call.1} parent=11 // pred_check_branch
          %973 = sbr.rel (%p971) target = $region44
        $region43: #{tpu_custom_call.1} parent=11 // pred_region
          _
        $region44: #{tpu_custom_call.1} parent=11 // pred_fallthru
          _
        // Predicated region
        $region45: #{tpu_custom_call.1} parent=11 // pred_check
          %p974 = pneg %p555
        $region46: #{tpu_custom_call.1} parent=11 // pred_check_branch
          %976 = sbr.rel (%p974) target = $region48
        $region47: #{tpu_custom_call.1} parent=11 // pred_region
          %978 = vsyncadd [#allocation27], 0
          %s979 = sshll.u32 %s37, 4
          %s980 = int_to_ptr.hbm [resolvable:$true] %s979
          %s981 = sshll.u32 [#allocation26], 4
          %s982 = int_to_ptr.vmem [resolvable:$true] %s981
          %987 = dma.hbm_to_vmem [thread:$0]  %s980, 2048, %s982, [#allocation27], 128, 128, 8
        $region48: #{tpu_custom_call.1} parent=11 // pred_fallthru
          _
        // Predicated region
        $region49: #{tpu_custom_call.1} parent=11 // pred_check
          %p988 = pneg %p576
        $region50: #{tpu_custom_call.1} parent=11 // pred_check_branch
          %990 = sbr.rel (%p988) target = $region52
        $region51: #{tpu_custom_call.1} parent=11 // pred_region
          _
        $region52: #{tpu_custom_call.1} parent=11 // pred_fallthru
          _
        // Predicated region
        $region53: #{tpu_custom_call.1} parent=11 // pred_check
          %p991 = pneg %p597
        $region54: #{tpu_custom_call.1} parent=11 // pred_check_branch
          %993 = sbr.rel (%p991) target = $region56
        $region55: #{tpu_custom_call.1} parent=11 // pred_region
          %995 = vsyncadd [#allocation27], 0
          %s996 = sshll.u32 %s41, 4
          %s997 = int_to_ptr.hbm [resolvable:$true] %s996
          %s998 = sshll.u32 [#allocation28], 4
          %s999 = int_to_ptr.vmem [resolvable:$true] %s998
          %1004 = dma.hbm_to_vmem [thread:$0]  %s997, 2048, %s999, [#allocation27], 128, 128, 8
        $region56: #{tpu_custom_call.1} parent=11 // pred_fallthru
          _
        // Predicated region
        $region57: #{tpu_custom_call.1} parent=11 // pred_check
          %p1005 = pneg %p618
        $region58: #{tpu_custom_call.1} parent=11 // pred_check_branch
          %1007 = sbr.rel (%p1005) target = $region60
        $region59: #{tpu_custom_call.1} parent=11 // pred_region
          _
        $region60: #{tpu_custom_call.1} parent=11 // pred_fallthru
          _
        // Predicated region
        $region61: #{tpu_custom_call.1} parent=11 // pred_check
          %p1008 = pneg %p639
        $region62: #{tpu_custom_call.1} parent=11 // pred_check_branch
          %1010 = sbr.rel (%p1008) target = $region64
        $region63: #{tpu_custom_call.1} parent=11 // pred_region
          %1012 = vsyncadd [#allocation30], 0
          %s1013 = sshll.u32 %s45, 4
          %s1014 = int_to_ptr.hbm [resolvable:$true] %s1013
          %s1015 = sshll.u32 [#allocation29], 4
          %s1016 = int_to_ptr.vmem [resolvable:$true] %s1015
          %1021 = dma.hbm_to_vmem [thread:$0]  %s1014, 2048, %s1016, [#allocation30], 128, 128, 8
        $region64: #{tpu_custom_call.1} parent=11 // pred_fallthru
          _
        // Predicated region
        $region65: #{tpu_custom_call.1} parent=11 // pred_check
          %p1022 = pneg %p660
        $region66: #{tpu_custom_call.1} parent=11 // pred_check_branch
          %1024 = sbr.rel (%p1022) target = $region68
        $region67: #{tpu_custom_call.1} parent=11 // pred_region
          _
        $region68: #{tpu_custom_call.1} parent=11 // pred_fallthru
          _
        // Predicated region
        $region69: #{tpu_custom_call.1} parent=11 // pred_check
          %p1025 = pneg %p681
        $region70: #{tpu_custom_call.1} parent=11 // pred_check_branch
          %1027 = sbr.rel (%p1025) target = $region72
        $region71: #{tpu_custom_call.1} parent=11 // pred_region
          %1029 = vsyncadd [#allocation30], 0
          %s1030 = sshll.u32 %s49, 4
          %s1031 = int_to_ptr.hbm [resolvable:$true] %s1030
          %s1032 = sshll.u32 [#allocation31], 4
          %s1033 = int_to_ptr.vmem [resolvable:$true] %s1032
          %1038 = dma.hbm_to_vmem [thread:$0]  %s1031, 1024, %s1033, [#allocation30], 64, 64, 4
        $region72: #{tpu_custom_call.1} parent=11 // pred_fallthru
          _
        // Predicated region
        $region73: #{tpu_custom_call.1} parent=11 // pred_check
          %p1039 = pneg %p702
        $region74: #{tpu_custom_call.1} parent=11 // pred_check_branch
          %1041 = sbr.rel (%p1039) target = $region76
        $region75: #{tpu_custom_call.1} parent=11 // pred_region
          _
        $region76: #{tpu_custom_call.1} parent=11 // pred_fallthru
          _
      $region12: #{tpu_custom_call.1} parent=5 // pred_fallthru
        _
      %p1042 = scmp.lt.s32.totalorder %s106, 2
      // Predicated region
      $region77: #{tpu_custom_call.1} parent=5 // pred_check
        %p1043 = pneg %p1042
      $region78: #{tpu_custom_call.1} parent=5 // pred_check_branch
        %1045 = sbr.rel (%p1043) target = $region80
      $region79: #{tpu_custom_call.1} parent=5 // pred_region
        // Predicated region
        $region81: #{tpu_custom_call.1} parent=79 // pred_check
          %p1046 = pneg %p126
        $region82: #{tpu_custom_call.1} parent=79 // pred_check_branch
          %1048 = sbr.rel (%p1046) target = $region84
        $region83: #{tpu_custom_call.1} parent=79 // pred_region
          %s1049 = sand.u32 %s116, 1
          %s1050 = scalar_lea.sflag [#allocation3], %s1049
          %s1051 = sand.u32 %s116, 1
          %s1052 = smul.addr %s1051, 64
          %s1053 = scalar_lea.vmem [#allocation2], %s1052
          %s1054 = smul.u32 8, %s106
          %1056 = vsyncadd %s1050, 0
          %s1057 = smul.addr %s1054, 8
          %s1058 = scalar_lea.hbm %s1, %s1057
          %s1059 = sshll.u32 %s1058, 4
          %s1060 = int_to_ptr.hbm [resolvable:$true] %s1059
          %s1061 = sshll.u32 %s1053, 4
          %s1062 = int_to_ptr.vmem [resolvable:$true] %s1061
          %1067 = dma.hbm_to_vmem [thread:$0]  %s1060, 1024, %s1062, %s1050, 128, 128, 8
        $region84: #{tpu_custom_call.1} parent=79 // pred_fallthru
          _
        // Predicated region
        $region85: #{tpu_custom_call.1} parent=79 // pred_check
          %p1068 = pneg %p152
        $region86: #{tpu_custom_call.1} parent=79 // pred_check_branch
          %1070 = sbr.rel (%p1068) target = $region88
        $region87: #{tpu_custom_call.1} parent=79 // pred_region
          %s1071 = sand.u32 %s106, 1
          %s1072 = scalar_lea.sflag [#allocation6], %s1071
          %s1073 = sand.u32 %s142, 1
          %s1074 = smul.addr %s1073, 64
          %s1075 = scalar_lea.vmem [#allocation5], %s1074
          %s1076 = smul.u32 8, %s106
          %1078 = vsyncadd %s1072, 0
          %s1079 = smul.addr %s1076, 8
          %s1080 = scalar_lea.hbm %s3, %s1079
          %s1081 = sshll.u32 %s1080, 4
          %s1082 = int_to_ptr.hbm [resolvable:$true] %s1081
          %s1083 = sshll.u32 %s1075, 4
          %s1084 = int_to_ptr.vmem [resolvable:$true] %s1083
          %1089 = dma.hbm_to_vmem [thread:$0]  %s1082, 1024, %s1084, %s1072, 128, 128, 8
        $region88: #{tpu_custom_call.1} parent=79 // pred_fallthru
          _
        // Predicated region
        $region89: #{tpu_custom_call.1} parent=79 // pred_check
          %p1090 = pneg %p178
        $region90: #{tpu_custom_call.1} parent=79 // pred_check_branch
          %1092 = sbr.rel (%p1090) target = $region92
        $region91: #{tpu_custom_call.1} parent=79 // pred_region
          %s1093 = sand.u32 %s106, 1
          %s1094 = scalar_lea.sflag [#allocation6], %s1093
          %s1095 = sand.u32 %s168, 1
          %s1096 = smul.addr %s1095, 64
          %s1097 = scalar_lea.vmem [#allocation7], %s1096
          %s1098 = smul.u32 8, %s106
          %1100 = vsyncadd %s1094, 0
          %s1101 = smul.addr %s1098, 8
          %s1102 = scalar_lea.hbm %s5, %s1101
          %s1103 = sshll.u32 %s1102, 4
          %s1104 = int_to_ptr.hbm [resolvable:$true] %s1103
          %s1105 = sshll.u32 %s1097, 4
          %s1106 = int_to_ptr.vmem [resolvable:$true] %s1105
          %1111 = dma.hbm_to_vmem [thread:$0]  %s1104, 1024, %s1106, %s1094, 128, 128, 8
        $region92: #{tpu_custom_call.1} parent=79 // pred_fallthru
          _
        // Predicated region
        $region93: #{tpu_custom_call.1} parent=79 // pred_check
          %p1112 = pneg %p204
        $region94: #{tpu_custom_call.1} parent=79 // pred_check_branch
          %1114 = sbr.rel (%p1112) target = $region96
        $region95: #{tpu_custom_call.1} parent=79 // pred_region
          %s1115 = sand.u32 %s106, 1
          %s1116 = scalar_lea.sflag [#allocation9], %s1115
          %s1117 = sand.u32 %s194, 1
          %s1118 = smul.addr %s1117, 64
          %s1119 = scalar_lea.vmem [#allocation8], %s1118
          %s1120 = smul.u32 8, %s106
          %1122 = vsyncadd %s1116, 0
          %s1123 = smul.addr %s1120, 8
          %s1124 = scalar_lea.hbm %s7, %s1123
          %s1125 = sshll.u32 %s1124, 4
          %s1126 = int_to_ptr.hbm [resolvable:$true] %s1125
          %s1127 = sshll.u32 %s1119, 4
          %s1128 = int_to_ptr.vmem [resolvable:$true] %s1127
          %1133 = dma.hbm_to_vmem [thread:$0]  %s1126, 1024, %s1128, %s1116, 128, 128, 8
        $region96: #{tpu_custom_call.1} parent=79 // pred_fallthru
          _
        // Predicated region
        $region97: #{tpu_custom_call.1} parent=79 // pred_check
          %p1134 = pneg %p230
        $region98: #{tpu_custom_call.1} parent=79 // pred_check_branch
          %1136 = sbr.rel (%p1134) target = $region100
        $region99: #{tpu_custom_call.1} parent=79 // pred_region
          %s1137 = sand.u32 %s106, 1
          %s1138 = scalar_lea.sflag [#allocation9], %s1137
          %s1139 = sand.u32 %s220, 1
          %s1140 = smul.addr %s1139, 64
          %s1141 = scalar_lea.vmem [#allocation10], %s1140
          %s1142 = smul.u32 8, %s106
          %1144 = vsyncadd %s1138, 0
          %s1145 = smul.addr %s1142, 8
          %s1146 = scalar_lea.hbm %s9, %s1145
          %s1147 = sshll.u32 %s1146, 4
          %s1148 = int_to_ptr.hbm [resolvable:$true] %s1147
          %s1149 = sshll.u32 %s1141, 4
          %s1150 = int_to_ptr.vmem [resolvable:$true] %s1149
          %1155 = dma.hbm_to_vmem [thread:$0]  %s1148, 1024, %s1150, %s1138, 128, 128, 8
        $region100: #{tpu_custom_call.1} parent=79 // pred_fallthru
          _
        // Predicated region
        $region101: #{tpu_custom_call.1} parent=79 // pred_check
          %p1156 = pneg %p256
        $region102: #{tpu_custom_call.1} parent=79 // pred_check_branch
          %1158 = sbr.rel (%p1156) target = $region104
        $region103: #{tpu_custom_call.1} parent=79 // pred_region
          %s1159 = sand.u32 %s106, 1
          %s1160 = scalar_lea.sflag [#allocation12], %s1159
          %s1161 = sand.u32 %s246, 1
          %s1162 = smul.addr %s1161, 64
          %s1163 = scalar_lea.vmem [#allocation11], %s1162
          %s1164 = smul.u32 8, %s106
          %1166 = vsyncadd %s1160, 0
          %s1167 = smul.addr %s1164, 8
          %s1168 = scalar_lea.hbm %s11, %s1167
          %s1169 = sshll.u32 %s1168, 4
          %s1170 = int_to_ptr.hbm [resolvable:$true] %s1169
          %s1171 = sshll.u32 %s1163, 4
          %s1172 = int_to_ptr.vmem [resolvable:$true] %s1171
          %1177 = dma.hbm_to_vmem [thread:$0]  %s1170, 1024, %s1172, %s1160, 128, 128, 8
        $region104: #{tpu_custom_call.1} parent=79 // pred_fallthru
          _
        // Predicated region
        $region105: #{tpu_custom_call.1} parent=79 // pred_check
          %p1178 = pneg %p282
        $region106: #{tpu_custom_call.1} parent=79 // pred_check_branch
          %1180 = sbr.rel (%p1178) target = $region108
        $region107: #{tpu_custom_call.1} parent=79 // pred_region
          %s1181 = sand.u32 %s106, 1
          %s1182 = scalar_lea.sflag [#allocation12], %s1181
          %s1183 = sand.u32 %s272, 1
          %s1184 = smul.addr %s1183, 64
          %s1185 = scalar_lea.vmem [#allocation13], %s1184
          %s1186 = smul.u32 8, %s106
          %1188 = vsyncadd %s1182, 0
          %s1189 = smul.addr %s1186, 8
          %s1190 = scalar_lea.hbm %s13, %s1189
          %s1191 = sshll.u32 %s1190, 4
          %s1192 = int_to_ptr.hbm [resolvable:$true] %s1191
          %s1193 = sshll.u32 %s1185, 4
          %s1194 = int_to_ptr.vmem [resolvable:$true] %s1193
          %1199 = dma.hbm_to_vmem [thread:$0]  %s1192, 1024, %s1194, %s1182, 128, 128, 8
        $region108: #{tpu_custom_call.1} parent=79 // pred_fallthru
          _
        // Predicated region
        $region109: #{tpu_custom_call.1} parent=79 // pred_check
          %p1200 = pneg %p308
        $region110: #{tpu_custom_call.1} parent=79 // pred_check_branch
          %1202 = sbr.rel (%p1200) target = $region112
        $region111: #{tpu_custom_call.1} parent=79 // pred_region
          %s1203 = sand.u32 %s106, 1
          %s1204 = scalar_lea.sflag [#allocation15], %s1203
          %s1205 = sand.u32 %s298, 1
          %s1206 = smul.addr %s1205, 64
          %s1207 = scalar_lea.vmem [#allocation14], %s1206
          %s1208 = smul.u32 8, %s106
          %1210 = vsyncadd %s1204, 0
          %s1211 = smul.addr %s1208, 8
          %s1212 = scalar_lea.hbm %s15, %s1211
          %s1213 = sshll.u32 %s1212, 4
          %s1214 = int_to_ptr.hbm [resolvable:$true] %s1213
          %s1215 = sshll.u32 %s1207, 4
          %s1216 = int_to_ptr.vmem [resolvable:$true] %s1215
          %1221 = dma.hbm_to_vmem [thread:$0]  %s1214, 1024, %s1216, %s1204, 128, 128, 8
        $region112: #{tpu_custom_call.1} parent=79 // pred_fallthru
          _
        // Predicated region
        $region113: #{tpu_custom_call.1} parent=79 // pred_check
          %p1222 = pneg %p334
        $region114: #{tpu_custom_call.1} parent=79 // pred_check_branch
          %1224 = sbr.rel (%p1222) target = $region116
        $region115: #{tpu_custom_call.1} parent=79 // pred_region
          %s1225 = sand.u32 %s106, 1
          %s1226 = scalar_lea.sflag [#allocation15], %s1225
          %s1227 = sand.u32 %s324, 1
          %s1228 = smul.addr %s1227, 64
          %s1229 = scalar_lea.vmem [#allocation16], %s1228
          %s1230 = smul.u32 8, %s106
          %1232 = vsyncadd %s1226, 0
          %s1233 = smul.addr %s1230, 8
          %s1234 = scalar_lea.hbm %s17, %s1233
          %s1235 = sshll.u32 %s1234, 4
          %s1236 = int_to_ptr.hbm [resolvable:$true] %s1235
          %s1237 = sshll.u32 %s1229, 4
          %s1238 = int_to_ptr.vmem [resolvable:$true] %s1237
          %1243 = dma.hbm_to_vmem [thread:$0]  %s1236, 1024, %s1238, %s1226, 128, 128, 8
        $region116: #{tpu_custom_call.1} parent=79 // pred_fallthru
          _
        // Predicated region
        $region117: #{tpu_custom_call.1} parent=79 // pred_check
          %p1244 = pneg %p360
        $region118: #{tpu_custom_call.1} parent=79 // pred_check_branch
          %1246 = sbr.rel (%p1244) target = $region120
        $region119: #{tpu_custom_call.1} parent=79 // pred_region
          %s1247 = sand.u32 %s106, 1
          %s1248 = scalar_lea.sflag [#allocation18], %s1247
          %s1249 = sand.u32 %s350, 1
          %s1250 = smul.addr %s1249, 64
          %s1251 = scalar_lea.vmem [#allocation17], %s1250
          %s1252 = smul.u32 8, %s106
          %1254 = vsyncadd %s1248, 0
          %s1255 = smul.addr %s1252, 8
          %s1256 = scalar_lea.hbm %s19, %s1255
          %s1257 = sshll.u32 %s1256, 4
          %s1258 = int_to_ptr.hbm [resolvable:$true] %s1257
          %s1259 = sshll.u32 %s1251, 4
          %s1260 = int_to_ptr.vmem [resolvable:$true] %s1259
          %1265 = dma.hbm_to_vmem [thread:$0]  %s1258, 1024, %s1260, %s1248, 128, 128, 8
        $region120: #{tpu_custom_call.1} parent=79 // pred_fallthru
          _
      $region80: #{tpu_custom_call.1} parent=5 // pred_fallthru
        _
      %p1266 = scmp.le.s32.totalorder 1, %s106
      %p1267 = scmp.lt.s32.totalorder %s106, 3
      %p1268 = pnand %p1266, %p1267
      %p1269 = pneg %p1268
      // Predicated region
      $region121: #{tpu_custom_call.1} parent=5 // pred_check
        _
      $region122: #{tpu_custom_call.1} parent=5 // pred_check_branch
        %1271 = sbr.rel (%p1268) target = $region124
      $region123: #{tpu_custom_call.1} parent=5 // pred_region
        %s1272 = ssub.s32 %s106, 1
        %s1273 = sand.u32 %s119, 1
        %s1274 = scalar_lea.sflag [#allocation3], %s1273
        %s1275 = sand.u32 %s119, 1
        %s1276 = smul.addr %s1275, 64
        %s1277 = scalar_lea.vmem [#allocation2], %s1276
        // Predicated region
        $region125: #{tpu_custom_call.1} parent=123 // pred_check
          %p1278 = pneg %p132
        $region126: #{tpu_custom_call.1} parent=123 // pred_check_branch
          %1280 = sbr.rel (%p1278) target = $region128
        $region127: #{tpu_custom_call.1} parent=123 // pred_region
          %1282 = dma.done %s1274, 1024
        $region128: #{tpu_custom_call.1} parent=123 // pred_fallthru
          _
        %s1283 = sand.u32 %s111, 1
        %s1284 = scalar_lea.sflag [#allocation6], %s1283
        %s1285 = sand.u32 %s145, 1
        %s1286 = smul.addr %s1285, 64
        %s1287 = scalar_lea.vmem [#allocation5], %s1286
        // Predicated region
        $region129: #{tpu_custom_call.1} parent=123 // pred_check
          %p1288 = pneg %p158
        $region130: #{tpu_custom_call.1} parent=123 // pred_check_branch
          %1290 = sbr.rel (%p1288) target = $region132
        $region131: #{tpu_custom_call.1} parent=123 // pred_region
          %1292 = dma.done %s1284, 1024
        $region132: #{tpu_custom_call.1} parent=123 // pred_fallthru
          _
        %s1293 = sand.u32 %s111, 1
        %s1294 = scalar_lea.sflag [#allocation6], %s1293
        %s1295 = sand.u32 %s171, 1
        %s1296 = smul.addr %s1295, 64
        %s1297 = scalar_lea.vmem [#allocation7], %s1296
        // Predicated region
        $region133: #{tpu_custom_call.1} parent=123 // pred_check
          %p1298 = pneg %p184
        $region134: #{tpu_custom_call.1} parent=123 // pred_check_branch
          %1300 = sbr.rel (%p1298) target = $region136
        $region135: #{tpu_custom_call.1} parent=123 // pred_region
          %1302 = dma.done %s1294, 1024
        $region136: #{tpu_custom_call.1} parent=123 // pred_fallthru
          _
        %s1303 = sand.u32 %s111, 1
        %s1304 = scalar_lea.sflag [#allocation9], %s1303
        %s1305 = sand.u32 %s197, 1
        %s1306 = smul.addr %s1305, 64
        %s1307 = scalar_lea.vmem [#allocation8], %s1306
        // Predicated region
        $region137: #{tpu_custom_call.1} parent=123 // pred_check
          %p1308 = pneg %p210
        $region138: #{tpu_custom_call.1} parent=123 // pred_check_branch
          %1310 = sbr.rel (%p1308) target = $region140
        $region139: #{tpu_custom_call.1} parent=123 // pred_region
          %1312 = dma.done %s1304, 1024
        $region140: #{tpu_custom_call.1} parent=123 // pred_fallthru
          _
        %s1313 = sand.u32 %s111, 1
        %s1314 = scalar_lea.sflag [#allocation9], %s1313
        %s1315 = sand.u32 %s223, 1
        %s1316 = smul.addr %s1315, 64
        %s1317 = scalar_lea.vmem [#allocation10], %s1316
        // Predicated region
        $region141: #{tpu_custom_call.1} parent=123 // pred_check
          %p1318 = pneg %p236
        $region142: #{tpu_custom_call.1} parent=123 // pred_check_branch
          %1320 = sbr.rel (%p1318) target = $region144
        $region143: #{tpu_custom_call.1} parent=123 // pred_region
          %1322 = dma.done %s1314, 1024
        $region144: #{tpu_custom_call.1} parent=123 // pred_fallthru
          _
        %s1323 = sand.u32 %s111, 1
        %s1324 = scalar_lea.sflag [#allocation12], %s1323
        %s1325 = sand.u32 %s249, 1
        %s1326 = smul.addr %s1325, 64
        %s1327 = scalar_lea.vmem [#allocation11], %s1326
        // Predicated region
        $region145: #{tpu_custom_call.1} parent=123 // pred_check
          %p1328 = pneg %p262
        $region146: #{tpu_custom_call.1} parent=123 // pred_check_branch
          %1330 = sbr.rel (%p1328) target = $region148
        $region147: #{tpu_custom_call.1} parent=123 // pred_region
          %1332 = dma.done %s1324, 1024
        $region148: #{tpu_custom_call.1} parent=123 // pred_fallthru
          _
        %s1333 = sand.u32 %s111, 1
        %s1334 = scalar_lea.sflag [#allocation12], %s1333
        %s1335 = sand.u32 %s275, 1
        %s1336 = smul.addr %s1335, 64
        %s1337 = scalar_lea.vmem [#allocation13], %s1336
        // Predicated region
        $region149: #{tpu_custom_call.1} parent=123 // pred_check
          %p1338 = pneg %p288
        $region150: #{tpu_custom_call.1} parent=123 // pred_check_branch
          %1340 = sbr.rel (%p1338) target = $region152
        $region151: #{tpu_custom_call.1} parent=123 // pred_region
          %1342 = dma.done %s1334, 1024
        $region152: #{tpu_custom_call.1} parent=123 // pred_fallthru
          _
        %s1343 = sand.u32 %s111, 1
        %s1344 = scalar_lea.sflag [#allocation15], %s1343
        %s1345 = sand.u32 %s301, 1
        %s1346 = smul.addr %s1345, 64
        %s1347 = scalar_lea.vmem [#allocation14], %s1346
        // Predicated region
        $region153: #{tpu_custom_call.1} parent=123 // pred_check
          %p1348 = pneg %p314
        $region154: #{tpu_custom_call.1} parent=123 // pred_check_branch
          %1350 = sbr.rel (%p1348) target = $region156
        $region155: #{tpu_custom_call.1} parent=123 // pred_region
          %1352 = dma.done %s1344, 1024
        $region156: #{tpu_custom_call.1} parent=123 // pred_fallthru
          _
        %s1353 = sand.u32 %s111, 1
        %s1354 = scalar_lea.sflag [#allocation15], %s1353
        %s1355 = sand.u32 %s327, 1
        %s1356 = smul.addr %s1355, 64
        %s1357 = scalar_lea.vmem [#allocation16], %s1356
        // Predicated region
        $region157: #{tpu_custom_call.1} parent=123 // pred_check
          %p1358 = pneg %p340
        $region158: #{tpu_custom_call.1} parent=123 // pred_check_branch
          %1360 = sbr.rel (%p1358) target = $region160
        $region159: #{tpu_custom_call.1} parent=123 // pred_region
          %1362 = dma.done %s1354, 1024
        $region160: #{tpu_custom_call.1} parent=123 // pred_fallthru
          _
        %s1363 = sand.u32 %s111, 1
        %s1364 = scalar_lea.sflag [#allocation18], %s1363
        %s1365 = sand.u32 %s353, 1
        %s1366 = smul.addr %s1365, 64
        %s1367 = scalar_lea.vmem [#allocation17], %s1366
        // Predicated region
        $region161: #{tpu_custom_call.1} parent=123 // pred_check
          %p1368 = pneg %p366
        $region162: #{tpu_custom_call.1} parent=123 // pred_check_branch
          %1370 = sbr.rel (%p1368) target = $region164
        $region163: #{tpu_custom_call.1} parent=123 // pred_region
          %1372 = dma.done %s1364, 1024
        $region164: #{tpu_custom_call.1} parent=123 // pred_fallthru
          _
        // Predicated region
        $region165: #{tpu_custom_call.1} parent=123 // pred_check
          %p1373 = pneg %p429
        $region166: #{tpu_custom_call.1} parent=123 // pred_check_branch
          %1375 = sbr.rel (%p1373) target = $region168
        $region167: #{tpu_custom_call.1} parent=123 // pred_region
          %1377 = dma.done [#allocation18], 4096
        $region168: #{tpu_custom_call.1} parent=123 // pred_fallthru
          _
        // Predicated region
        $region169: #{tpu_custom_call.1} parent=123 // pred_check
          %p1378 = pneg %p450
        $region170: #{tpu_custom_call.1} parent=123 // pred_check_branch
          %1380 = sbr.rel (%p1378) target = $region172
        $region171: #{tpu_custom_call.1} parent=123 // pred_region
          %1382 = dma.done [#allocation21], 16
        $region172: #{tpu_custom_call.1} parent=123 // pred_fallthru
          _
        // Predicated region
        $region173: #{tpu_custom_call.1} parent=123 // pred_check
          %p1383 = pneg %p471
        $region174: #{tpu_custom_call.1} parent=123 // pred_check_branch
          %1385 = sbr.rel (%p1383) target = $region176
        $region175: #{tpu_custom_call.1} parent=123 // pred_region
          %1387 = dma.done [#allocation21], 1024
        $region176: #{tpu_custom_call.1} parent=123 // pred_fallthru
          _
        // Predicated region
        $region177: #{tpu_custom_call.1} parent=123 // pred_check
          %p1388 = pneg %p492
        $region178: #{tpu_custom_call.1} parent=123 // pred_check_branch
          %1390 = sbr.rel (%p1388) target = $region180
        $region179: #{tpu_custom_call.1} parent=123 // pred_region
          %1392 = dma.done [#allocation24], 16
        $region180: #{tpu_custom_call.1} parent=123 // pred_fallthru
          _
        // Predicated region
        $region181: #{tpu_custom_call.1} parent=123 // pred_check
          %p1393 = pneg %p513
        $region182: #{tpu_custom_call.1} parent=123 // pred_check_branch
          %1395 = sbr.rel (%p1393) target = $region184
        $region183: #{tpu_custom_call.1} parent=123 // pred_region
          %1397 = dma.done [#allocation24], 1024
        $region184: #{tpu_custom_call.1} parent=123 // pred_fallthru
          _
        // Predicated region
        $region185: #{tpu_custom_call.1} parent=123 // pred_check
          %p1398 = pneg %p555
        $region186: #{tpu_custom_call.1} parent=123 // pred_check_branch
          %1400 = sbr.rel (%p1398) target = $region188
        $region187: #{tpu_custom_call.1} parent=123 // pred_region
          %1402 = dma.done [#allocation27], 2048
        $region188: #{tpu_custom_call.1} parent=123 // pred_fallthru
          _
        // Predicated region
        $region189: #{tpu_custom_call.1} parent=123 // pred_check
          %p1403 = pneg %p597
        $region190: #{tpu_custom_call.1} parent=123 // pred_check_branch
          %1405 = sbr.rel (%p1403) target = $region192
        $region191: #{tpu_custom_call.1} parent=123 // pred_region
          %1407 = dma.done [#allocation27], 2048
        $region192: #{tpu_custom_call.1} parent=123 // pred_fallthru
          _
        // Predicated region
        $region193: #{tpu_custom_call.1} parent=123 // pred_check
          %p1408 = pneg %p639
        $region194: #{tpu_custom_call.1} parent=123 // pred_check_branch
          %1410 = sbr.rel (%p1408) target = $region196
        $region195: #{tpu_custom_call.1} parent=123 // pred_region
          %1412 = dma.done [#allocation30], 2048
        $region196: #{tpu_custom_call.1} parent=123 // pred_fallthru
          _
        // Predicated region
        $region197: #{tpu_custom_call.1} parent=123 // pred_check
          %p1413 = pneg %p681
        $region198: #{tpu_custom_call.1} parent=123 // pred_check_branch
          %1415 = sbr.rel (%p1413) target = $region200
        $region199: #{tpu_custom_call.1} parent=123 // pred_region
          %1417 = dma.done [#allocation30], 1024
        $region200: #{tpu_custom_call.1} parent=123 // pred_fallthru
          _
        %s1418 = sand.u32 %s119, 1
        %s1419 = scalar_lea.sflag [#allocation3], %s1418
        %s1420 = sand.u32 %s119, 1
        %s1421 = smul.addr %s1420, 64
        %s1422 = scalar_lea.vmem [#allocation2], %s1421
        %p1423 = pneg %p132
        %p1424 = pneg %p129
        %s1425 = sand.u32 %s111, 1
        %s1426 = scalar_lea.sflag [#allocation6], %s1425
        %s1427 = sand.u32 %s145, 1
        %s1428 = smul.addr %s1427, 64
        %s1429 = scalar_lea.vmem [#allocation5], %s1428
        %p1430 = pneg %p158
        %p1431 = pneg %p155
        %s1432 = sand.u32 %s111, 1
        %s1433 = scalar_lea.sflag [#allocation6], %s1432
        %s1434 = sand.u32 %s171, 1
        %s1435 = smul.addr %s1434, 64
        %s1436 = scalar_lea.vmem [#allocation7], %s1435
        %p1437 = pneg %p184
        %p1438 = pneg %p181
        %s1439 = sand.u32 %s111, 1
        %s1440 = scalar_lea.sflag [#allocation9], %s1439
        %s1441 = sand.u32 %s197, 1
        %s1442 = smul.addr %s1441, 64
        %s1443 = scalar_lea.vmem [#allocation8], %s1442
        %p1444 = pneg %p210
        %p1445 = pneg %p207
        %s1446 = sand.u32 %s111, 1
        %s1447 = scalar_lea.sflag [#allocation9], %s1446
        %s1448 = sand.u32 %s223, 1
        %s1449 = smul.addr %s1448, 64
        %s1450 = scalar_lea.vmem [#allocation10], %s1449
        %p1451 = pneg %p236
        %p1452 = pneg %p233
        %s1453 = sand.u32 %s111, 1
        %s1454 = scalar_lea.sflag [#allocation12], %s1453
        %s1455 = sand.u32 %s249, 1
        %s1456 = smul.addr %s1455, 64
        %s1457 = scalar_lea.vmem [#allocation11], %s1456
        %p1458 = pneg %p262
        %p1459 = pneg %p259
        %s1460 = sand.u32 %s111, 1
        %s1461 = scalar_lea.sflag [#allocation12], %s1460
        %s1462 = sand.u32 %s275, 1
        %s1463 = smul.addr %s1462, 64
        %s1464 = scalar_lea.vmem [#allocation13], %s1463
        %p1465 = pneg %p288
        %p1466 = pneg %p285
        %s1467 = sand.u32 %s111, 1
        %s1468 = scalar_lea.sflag [#allocation15], %s1467
        %s1469 = sand.u32 %s301, 1
        %s1470 = smul.addr %s1469, 64
        %s1471 = scalar_lea.vmem [#allocation14], %s1470
        %p1472 = pneg %p314
        %p1473 = pneg %p311
        %s1474 = sand.u32 %s111, 1
        %s1475 = scalar_lea.sflag [#allocation15], %s1474
        %s1476 = sand.u32 %s327, 1
        %s1477 = smul.addr %s1476, 64
        %s1478 = scalar_lea.vmem [#allocation16], %s1477
        %p1479 = pneg %p340
        %p1480 = pneg %p337
        %s1481 = sand.u32 %s111, 1
        %s1482 = scalar_lea.sflag [#allocation18], %s1481
        %s1483 = sand.u32 %s353, 1
        %s1484 = smul.addr %s1483, 64
        %s1485 = scalar_lea.vmem [#allocation17], %s1484
        %p1486 = pneg %p366
        %p1487 = pneg %p363
        %p1488 = pneg %p387
        %p1489 = pneg %p384
        %p1490 = pneg %p408
        %p1491 = pneg %p405
        %p1492 = pneg %p429
        %p1493 = pneg %p426
        %p1494 = pneg %p450
        %p1495 = pneg %p447
        %p1496 = pneg %p471
        %p1497 = pneg %p468
        %p1498 = pneg %p492
        %p1499 = pneg %p489
        %p1500 = pneg %p513
        %p1501 = pneg %p510
        %p1502 = pneg %p534
        %p1503 = pneg %p531
        %p1504 = pneg %p555
        %p1505 = pneg %p552
        %p1506 = pneg %p576
        %p1507 = pneg %p573
        %p1508 = pneg %p597
        %p1509 = pneg %p594
        %p1510 = pneg %p618
        %p1511 = pneg %p615
        %p1512 = pneg %p639
        %p1513 = pneg %p636
        %p1514 = pneg %p660
        %p1515 = pneg %p657
        %p1516 = pneg %p681
        %p1517 = pneg %p678
        %p1518 = pneg %p702
        %p1519 = pneg %p699
        %p1520 = pneg %p728
        %p1521 = pneg %p725
        %s1522 = sand.u32 %s715, 1
        %s1523 = scalar_lea.sflag [#allocation4], %s1522
        %s1524 = sand.u32 %s715, 1
        %s1525 = smul.addr %s1524, 64
        %s1526 = scalar_lea.vmem [#allocation32], %s1525
        %p1527 = pneg %p754
        %p1528 = pneg %p751
        %s1529 = sand.u32 %s111, 1
        %s1530 = scalar_lea.sflag [#allocation34], %s1529
        %s1531 = sand.u32 %s741, 1
        %s1532 = smul.addr %s1531, 64
        %s1533 = scalar_lea.vmem [#allocation33], %s1532
        %p1534 = pneg %p780
        %p1535 = pneg %p777
        %s1536 = sand.u32 %s111, 1
        %s1537 = scalar_lea.sflag [#allocation34], %s1536
        %s1538 = sand.u32 %s767, 1
        %s1539 = smul.addr %s1538, 64
        %s1540 = scalar_lea.vmem [#allocation35], %s1539
        %p1541 = pneg %p806
        %p1542 = pneg %p803
        %s1543 = sand.u32 %s111, 1
        %s1544 = scalar_lea.sflag [#allocation37], %s1543
        %s1545 = sand.u32 %s793, 1
        %s1546 = smul.addr %s1545, 128
        %s1547 = scalar_lea.vmem [#allocation36], %s1546
        %p1548 = pneg %p832
        %p1549 = pneg %p829
        %s1550 = sand.u32 %s111, 1
        %s1551 = scalar_lea.sflag [#allocation37], %s1550
        %s1552 = sand.u32 %s819, 1
        %s1553 = smul.addr %s1552, 128
        %s1554 = scalar_lea.vmem [#allocation38], %s1553
        %p1555 = pneg %p858
        %p1556 = pneg %p855
        %s1557 = sand.u32 %s111, 1
        %s1558 = scalar_lea.sflag [#allocation40], %s1557
        %s1559 = sand.u32 %s845, 1
        %s1560 = smul.addr %s1559, 128
        %s1561 = scalar_lea.vmem [#allocation39], %s1560
        %p1562 = pneg %p884
        %p1563 = pneg %p881
        %s1564 = sand.u32 %s111, 1
        %s1565 = scalar_lea.sflag [#allocation40], %s1564
        %s1566 = sand.u32 %s871, 1
        %s1567 = smul.addr %s1566, 64
        %s1568 = scalar_lea.vmem [#allocation41], %s1567
        %s1569 = smul.u32 8, %s111
        %s1570 = smul.u32 8, %s111
        %s1571 = smul.u32 8, %s111
        %s1572 = smul.u32 8, %s111
        %s1573 = smul.u32 8, %s111
        %s1574 = smul.u32 8, %s111
        %s1575 = smul.u32 8, %s111
        %s1576 = smul.u32 8, %s111
        %s1577 = smul.u32 8, %s111
        %s1578 = smul.u32 8, %s111
        %s1579 = smul.u32 8, %s111
        %s1580 = smul.u32 8, %s111
        %s1581 = smul.u32 8, %s111
        %s1582 = smul.u32 8, %s111
        %s1583 = smul.u32 8, %s111
        %s1584 = smul.u32 8, %s111
        %s1585 = smul.u32 8, %s111
        %v1586 = vld [vmem:[%s1277] sm:$0xff]
        %v1587 = vld [vmem:[%s1277 + $0x8] sm:$0xff]
        %v1588 = vld [vmem:[%s1277 + $0x10] sm:$0xff]
        %v1589 = vld [vmem:[%s1277 + $0x18] sm:$0xff]
        %v1590 = vld [vmem:[%s1277 + $0x20] sm:$0xff]
        %v1591 = vld [vmem:[%s1277 + $0x28] sm:$0xff]
        %v1592 = vld [vmem:[%s1277 + $0x30] sm:$0xff]
        %v1593 = vld [vmem:[%s1277 + $0x38] sm:$0xff]
        %1594 = vadd.xlane.f32.xlu0 %v1586
        %v1595 = vpop.xlane.xlu0 %1594
        %1596 = vadd.xlane.f32.xlu0 %v1587
        %v1597 = vpop.xlane.xlu0 %1596
        %1598 = vadd.xlane.f32.xlu0 %v1588
        %v1599 = vpop.xlane.xlu0 %1598
        %1600 = vadd.xlane.f32.xlu0 %v1589
        %v1601 = vpop.xlane.xlu0 %1600
        %1602 = vadd.xlane.f32.xlu0 %v1590
        %v1603 = vpop.xlane.xlu0 %1602
        %1604 = vadd.xlane.f32.xlu0 %v1591
        %v1605 = vpop.xlane.xlu0 %1604
        %1606 = vadd.xlane.f32.xlu0 %v1592
        %v1607 = vpop.xlane.xlu0 %1606
        %1608 = vadd.xlane.f32.xlu0 %v1593
        %v1609 = vpop.xlane.xlu0 %1608
        %v1610 = vrcp.pop 128.0
        %v1611 = vmul.f32 128.0, %v1610
        %v1612 = vsub.f32 1.0, %v1611
        %v1613 = vmul.f32 %v1610, %v1612
        %v1614 = vadd.f32 %v1610, %v1613
        %vm1615 = vweird.f32 %v1610
        %v1616 = vsel %vm1615, %v1610, %v1614
        %v1617 = vmul.f32 %v1595, %v1616
        %v1618 = vmul.f32 %v1597, %v1616
        %v1619 = vmul.f32 %v1599, %v1616
        %v1620 = vmul.f32 %v1601, %v1616
        %v1621 = vmul.f32 %v1603, %v1616
        %v1622 = vmul.f32 %v1605, %v1616
        %v1623 = vmul.f32 %v1607, %v1616
        %v1624 = vmul.f32 %v1609, %v1616
        %v1625 = vsub.f32 %v1586, %v1617
        %v1626 = vsub.f32 %v1587, %v1618
        %v1627 = vsub.f32 %v1588, %v1619
        %v1628 = vsub.f32 %v1589, %v1620
        %v1629 = vsub.f32 %v1590, %v1621
        %v1630 = vsub.f32 %v1591, %v1622
        %v1631 = vsub.f32 %v1592, %v1623
        %v1632 = vsub.f32 %v1593, %v1624
        %v1633 = vmul.f32 %v1625, %v1625
        %v1634 = vmul.f32 %v1626, %v1626
        %v1635 = vmul.f32 %v1627, %v1627
        %v1636 = vmul.f32 %v1628, %v1628
        %v1637 = vmul.f32 %v1629, %v1629
        %v1638 = vmul.f32 %v1630, %v1630
        %v1639 = vmul.f32 %v1631, %v1631
        %v1640 = vmul.f32 %v1632, %v1632
        %1641 = vadd.xlane.f32.xlu0 %v1633
        %v1642 = vpop.xlane.xlu0 %1641
        %1643 = vadd.xlane.f32.xlu0 %v1634
        %v1644 = vpop.xlane.xlu0 %1643
        %1645 = vadd.xlane.f32.xlu0 %v1635
        %v1646 = vpop.xlane.xlu0 %1645
        %1647 = vadd.xlane.f32.xlu0 %v1636
        %v1648 = vpop.xlane.xlu0 %1647
        %1649 = vadd.xlane.f32.xlu0 %v1637
        %v1650 = vpop.xlane.xlu0 %1649
        %1651 = vadd.xlane.f32.xlu0 %v1638
        %v1652 = vpop.xlane.xlu0 %1651
        %1653 = vadd.xlane.f32.xlu0 %v1639
        %v1654 = vpop.xlane.xlu0 %1653
        %1655 = vadd.xlane.f32.xlu0 %v1640
        %v1656 = vpop.xlane.xlu0 %1655
        %v1657 = vmul.f32 %v1642, %v1616
        %v1658 = vmul.f32 %v1644, %v1616
        %v1659 = vmul.f32 %v1646, %v1616
        %v1660 = vmul.f32 %v1648, %v1616
        %v1661 = vmul.f32 %v1650, %v1616
        %v1662 = vmul.f32 %v1652, %v1616
        %v1663 = vmul.f32 %v1654, %v1616
        %v1664 = vmul.f32 %v1656, %v1616
        %v1665 = vadd.f32 %v1657, 1e-05
        %v1666 = vadd.f32 %v1658, 1e-05
        %v1667 = vadd.f32 %v1659, 1e-05
        %v1668 = vadd.f32 %v1660, 1e-05
        %v1669 = vadd.f32 %v1661, 1e-05
        %v1670 = vadd.f32 %v1662, 1e-05
        %v1671 = vadd.f32 %v1663, 1e-05
        %v1672 = vadd.f32 %v1664, 1e-05
        %v1673 = vrsqrt.pop %v1665
        %v1674 = vmul.f32 %v1673, %v1665
        %v1675 = vmul.f32 %v1674, %v1673
        %v1676 = vmul.f32 0.5, %v1675
        %v1677 = vsub.f32 1.5, %v1676
        %v1678 = vmul.f32 %v1673, %v1677
        %vm1679 = vweird.f32 %v1665
        %vm1680 = vweird.f32 %v1673
        %vm1681 = vmor %vm1679, %vm1680
        %v1682 = vsel %vm1681, %v1673, %v1678
        %v1683 = vrsqrt.pop %v1666
        %v1684 = vmul.f32 %v1683, %v1666
        %v1685 = vmul.f32 %v1684, %v1683
        %v1686 = vmul.f32 0.5, %v1685
        %v1687 = vsub.f32 1.5, %v1686
        %v1688 = vmul.f32 %v1683, %v1687
        %vm1689 = vweird.f32 %v1666
        %vm1690 = vweird.f32 %v1683
        %vm1691 = vmor %vm1689, %vm1690
        %v1692 = vsel %vm1691, %v1683, %v1688
        %v1693 = vrsqrt.pop %v1667
        %v1694 = vmul.f32 %v1693, %v1667
        %v1695 = vmul.f32 %v1694, %v1693
        %v1696 = vmul.f32 0.5, %v1695
        %v1697 = vsub.f32 1.5, %v1696
        %v1698 = vmul.f32 %v1693, %v1697
        %vm1699 = vweird.f32 %v1667
        %vm1700 = vweird.f32 %v1693
        %vm1701 = vmor %vm1699, %vm1700
        %v1702 = vsel %vm1701, %v1693, %v1698
        %v1703 = vrsqrt.pop %v1668
        %v1704 = vmul.f32 %v1703, %v1668
        %v1705 = vmul.f32 %v1704, %v1703
        %v1706 = vmul.f32 0.5, %v1705
        %v1707 = vsub.f32 1.5, %v1706
        %v1708 = vmul.f32 %v1703, %v1707
        %vm1709 = vweird.f32 %v1668
        %vm1710 = vweird.f32 %v1703
        %vm1711 = vmor %vm1709, %vm1710
        %v1712 = vsel %vm1711, %v1703, %v1708
        %v1713 = vrsqrt.pop %v1669
        %v1714 = vmul.f32 %v1713, %v1669
        %v1715 = vmul.f32 %v1714, %v1713
        %v1716 = vmul.f32 0.5, %v1715
        %v1717 = vsub.f32 1.5, %v1716
        %v1718 = vmul.f32 %v1713, %v1717
        %vm1719 = vweird.f32 %v1669
        %vm1720 = vweird.f32 %v1713
        %vm1721 = vmor %vm1719, %vm1720
        %v1722 = vsel %vm1721, %v1713, %v1718
        %v1723 = vrsqrt.pop %v1670
        %v1724 = vmul.f32 %v1723, %v1670
        %v1725 = vmul.f32 %v1724, %v1723
        %v1726 = vmul.f32 0.5, %v1725
        %v1727 = vsub.f32 1.5, %v1726
        %v1728 = vmul.f32 %v1723, %v1727
        %vm1729 = vweird.f32 %v1670
        %vm1730 = vweird.f32 %v1723
        %vm1731 = vmor %vm1729, %vm1730
        %v1732 = vsel %vm1731, %v1723, %v1728
        %v1733 = vrsqrt.pop %v1671
        %v1734 = vmul.f32 %v1733, %v1671
        %v1735 = vmul.f32 %v1734, %v1733
        %v1736 = vmul.f32 0.5, %v1735
        %v1737 = vsub.f32 1.5, %v1736
        %v1738 = vmul.f32 %v1733, %v1737
        %vm1739 = vweird.f32 %v1671
        %vm1740 = vweird.f32 %v1733
        %vm1741 = vmor %vm1739, %vm1740
        %v1742 = vsel %vm1741, %v1733, %v1738
        %v1743 = vrsqrt.pop %v1672
        %v1744 = vmul.f32 %v1743, %v1672
        %v1745 = vmul.f32 %v1744, %v1743
        %v1746 = vmul.f32 0.5, %v1745
        %v1747 = vsub.f32 1.5, %v1746
        %v1748 = vmul.f32 %v1743, %v1747
        %vm1749 = vweird.f32 %v1672
        %vm1750 = vweird.f32 %v1743
        %vm1751 = vmor %vm1749, %vm1750
        %v1752 = vsel %vm1751, %v1743, %v1748
        %v1753 = vmul.f32 %v1625, %v1682
        %v1754 = vmul.f32 %v1626, %v1692
        %v1755 = vmul.f32 %v1627, %v1702
        %v1756 = vmul.f32 %v1628, %v1712
        %v1757 = vmul.f32 %v1629, %v1722
        %v1758 = vmul.f32 %v1630, %v1732
        %v1759 = vmul.f32 %v1631, %v1742
        %v1760 = vmul.f32 %v1632, %v1752
        %v1761 = vld [vmem:[%s21] sm:$0x1]
        %v1763 = vperm.slane %v1761, 0
        %v1765 = vmul.f32 %v1753, %v1763
        %v1766 = vmul.f32 %v1754, %v1763
        %v1767 = vmul.f32 %v1755, %v1763
        %v1768 = vmul.f32 %v1756, %v1763
        %v1769 = vmul.f32 %v1757, %v1763
        %v1770 = vmul.f32 %v1758, %v1763
        %v1771 = vmul.f32 %v1759, %v1763
        %v1772 = vmul.f32 %v1760, %v1763
        %v1773 = vld [vmem:[%s23] sm:$0x1]
        %v1775 = vperm.slane %v1773, 0
        %v1777 = vadd.f32 %v1765, %v1775
        %v1778 = vadd.f32 %v1766, %v1775
        %v1779 = vadd.f32 %v1767, %v1775
        %v1780 = vadd.f32 %v1768, %v1775
        %v1781 = vadd.f32 %v1769, %v1775
        %v1782 = vadd.f32 %v1770, %v1775
        %v1783 = vadd.f32 %v1771, %v1775
        %v1784 = vadd.f32 %v1772, %v1775
        %v1785 = vpack.c.bf16 %v1778, %v1777
        %v1786 = vpack.c.bf16 %v1780, %v1779
        %v1787 = vpack.c.bf16 %v1782, %v1781
        %v1788 = vpack.c.bf16 %v1784, %v1783
        %v1789 = vld [vmem:[#allocation19] sm:$0xf]
        %v1790 = vld [vmem:[#allocation19 + $0x4] sm:$0xf]
        %v1791 = vld [vmem:[#allocation19 + $0x8] sm:$0xf]
        %v1792 = vld [vmem:[#allocation19 + $0xc] sm:$0xf]
        %v1793 = vld [vmem:[#allocation19 + $0x10] sm:$0xf]
        %v1794 = vld [vmem:[#allocation19 + $0x14] sm:$0xf]
        %v1795 = vld [vmem:[#allocation19 + $0x18] sm:$0xf]
        %v1796 = vld [vmem:[#allocation19 + $0x1c] sm:$0xf]
        %v1797 = vld [vmem:[#allocation19 + $0x20] sm:$0xf]
        %v1798 = vld [vmem:[#allocation19 + $0x24] sm:$0xf]
        %v1799 = vld [vmem:[#allocation19 + $0x28] sm:$0xf]
        %v1800 = vld [vmem:[#allocation19 + $0x2c] sm:$0xf]
        %v1801 = vld [vmem:[#allocation19 + $0x30] sm:$0xf]
        %v1802 = vld [vmem:[#allocation19 + $0x34] sm:$0xf]
        %v1803 = vld [vmem:[#allocation19 + $0x38] sm:$0xf]
        %v1804 = vld [vmem:[#allocation19 + $0x3c] sm:$0xf]
        %v1805 = vld [vmem:[%s1287] sm:$0xff]
        %v1806 = vld [vmem:[%s1287 + $0x8] sm:$0xff]
        %v1807 = vld [vmem:[%s1287 + $0x10] sm:$0xff]
        %v1808 = vld [vmem:[%s1287 + $0x18] sm:$0xff]
        %v1809 = vld [vmem:[%s1287 + $0x20] sm:$0xff]
        %v1810 = vld [vmem:[%s1287 + $0x28] sm:$0xff]
        %v1811 = vld [vmem:[%s1287 + $0x30] sm:$0xff]
        %v1812 = vld [vmem:[%s1287 + $0x38] sm:$0xff]
        %1813 = vadd.xlane.f32.xlu0 %v1805
        %v1814 = vpop.xlane.xlu0 %1813
        %1815 = vadd.xlane.f32.xlu0 %v1806
        %v1816 = vpop.xlane.xlu0 %1815
        %1817 = vadd.xlane.f32.xlu0 %v1807
        %v1818 = vpop.xlane.xlu0 %1817
        %1819 = vadd.xlane.f32.xlu0 %v1808
        %v1820 = vpop.xlane.xlu0 %1819
        %1821 = vadd.xlane.f32.xlu0 %v1809
        %v1822 = vpop.xlane.xlu0 %1821
        %1823 = vadd.xlane.f32.xlu0 %v1810
        %v1824 = vpop.xlane.xlu0 %1823
        %1825 = vadd.xlane.f32.xlu0 %v1811
        %v1826 = vpop.xlane.xlu0 %1825
        %1827 = vadd.xlane.f32.xlu0 %v1812
        %v1828 = vpop.xlane.xlu0 %1827
        %v1829 = vmul.f32 %v1814, %v1616
        %v1830 = vmul.f32 %v1816, %v1616
        %v1831 = vmul.f32 %v1818, %v1616
        %v1832 = vmul.f32 %v1820, %v1616
        %v1833 = vmul.f32 %v1822, %v1616
        %v1834 = vmul.f32 %v1824, %v1616
        %v1835 = vmul.f32 %v1826, %v1616
        %v1836 = vmul.f32 %v1828, %v1616
        %v1837 = vsub.f32 %v1805, %v1829
        %v1838 = vsub.f32 %v1806, %v1830
        %v1839 = vsub.f32 %v1807, %v1831
        %v1840 = vsub.f32 %v1808, %v1832
        %v1841 = vsub.f32 %v1809, %v1833
        %v1842 = vsub.f32 %v1810, %v1834
        %v1843 = vsub.f32 %v1811, %v1835
        %v1844 = vsub.f32 %v1812, %v1836
        %v1845 = vmul.f32 %v1837, %v1837
        %v1846 = vmul.f32 %v1838, %v1838
        %v1847 = vmul.f32 %v1839, %v1839
        %v1848 = vmul.f32 %v1840, %v1840
        %v1849 = vmul.f32 %v1841, %v1841
        %v1850 = vmul.f32 %v1842, %v1842
        %v1851 = vmul.f32 %v1843, %v1843
        %v1852 = vmul.f32 %v1844, %v1844
        %1853 = vadd.xlane.f32.xlu0 %v1845
        %v1854 = vpop.xlane.xlu0 %1853
        %1855 = vadd.xlane.f32.xlu0 %v1846
        %v1856 = vpop.xlane.xlu0 %1855
        %1857 = vadd.xlane.f32.xlu0 %v1847
        %v1858 = vpop.xlane.xlu0 %1857
        %1859 = vadd.xlane.f32.xlu0 %v1848
        %v1860 = vpop.xlane.xlu0 %1859
        %1861 = vadd.xlane.f32.xlu0 %v1849
        %v1862 = vpop.xlane.xlu0 %1861
        %1863 = vadd.xlane.f32.xlu0 %v1850
        %v1864 = vpop.xlane.xlu0 %1863
        %1865 = vadd.xlane.f32.xlu0 %v1851
        %v1866 = vpop.xlane.xlu0 %1865
        %1867 = vadd.xlane.f32.xlu0 %v1852
        %v1868 = vpop.xlane.xlu0 %1867
        %v1869 = vmul.f32 %v1854, %v1616
        %v1870 = vmul.f32 %v1856, %v1616
        %v1871 = vmul.f32 %v1858, %v1616
        %v1872 = vmul.f32 %v1860, %v1616
        %v1873 = vmul.f32 %v1862, %v1616
        %v1874 = vmul.f32 %v1864, %v1616
        %v1875 = vmul.f32 %v1866, %v1616
        %v1876 = vmul.f32 %v1868, %v1616
        %v1877 = vadd.f32 %v1869, 1e-05
        %v1878 = vadd.f32 %v1870, 1e-05
        %v1879 = vadd.f32 %v1871, 1e-05
        %v1880 = vadd.f32 %v1872, 1e-05
        %v1881 = vadd.f32 %v1873, 1e-05
        %v1882 = vadd.f32 %v1874, 1e-05
        %v1883 = vadd.f32 %v1875, 1e-05
        %v1884 = vadd.f32 %v1876, 1e-05
        %v1885 = vrsqrt.pop %v1877
        %v1886 = vmul.f32 %v1885, %v1877
        %v1887 = vmul.f32 %v1886, %v1885
        %v1888 = vmul.f32 0.5, %v1887
        %v1889 = vsub.f32 1.5, %v1888
        %v1890 = vmul.f32 %v1885, %v1889
        %vm1891 = vweird.f32 %v1877
        %vm1892 = vweird.f32 %v1885
        %vm1893 = vmor %vm1891, %vm1892
        %v1894 = vsel %vm1893, %v1885, %v1890
        %v1895 = vrsqrt.pop %v1878
        %v1896 = vmul.f32 %v1895, %v1878
        %v1897 = vmul.f32 %v1896, %v1895
        %v1898 = vmul.f32 0.5, %v1897
        %v1899 = vsub.f32 1.5, %v1898
        %v1900 = vmul.f32 %v1895, %v1899
        %vm1901 = vweird.f32 %v1878
        %vm1902 = vweird.f32 %v1895
        %vm1903 = vmor %vm1901, %vm1902
        %v1904 = vsel %vm1903, %v1895, %v1900
        %v1905 = vrsqrt.pop %v1879
        %v1906 = vmul.f32 %v1905, %v1879
        %v1907 = vmul.f32 %v1906, %v1905
        %v1908 = vmul.f32 0.5, %v1907
        %v1909 = vsub.f32 1.5, %v1908
        %v1910 = vmul.f32 %v1905, %v1909
        %vm1911 = vweird.f32 %v1879
        %vm1912 = vweird.f32 %v1905
        %vm1913 = vmor %vm1911, %vm1912
        %v1914 = vsel %vm1913, %v1905, %v1910
        %v1915 = vrsqrt.pop %v1880
        %v1916 = vmul.f32 %v1915, %v1880
        %v1917 = vmul.f32 %v1916, %v1915
        %v1918 = vmul.f32 0.5, %v1917
        %v1919 = vsub.f32 1.5, %v1918
        %v1920 = vmul.f32 %v1915, %v1919
        %vm1921 = vweird.f32 %v1880
        %vm1922 = vweird.f32 %v1915
        %vm1923 = vmor %vm1921, %vm1922
        %v1924 = vsel %vm1923, %v1915, %v1920
        %v1925 = vrsqrt.pop %v1881
        %v1926 = vmul.f32 %v1925, %v1881
        %v1927 = vmul.f32 %v1926, %v1925
        %v1928 = vmul.f32 0.5, %v1927
        %v1929 = vsub.f32 1.5, %v1928
        %v1930 = vmul.f32 %v1925, %v1929
        %vm1931 = vweird.f32 %v1881
        %vm1932 = vweird.f32 %v1925
        %vm1933 = vmor %vm1931, %vm1932
        %v1934 = vsel %vm1933, %v1925, %v1930
        %v1935 = vrsqrt.pop %v1882
        %v1936 = vmul.f32 %v1935, %v1882
        %v1937 = vmul.f32 %v1936, %v1935
        %v1938 = vmul.f32 0.5, %v1937
        %v1939 = vsub.f32 1.5, %v1938
        %v1940 = vmul.f32 %v1935, %v1939
        %vm1941 = vweird.f32 %v1882
        %vm1942 = vweird.f32 %v1935
        %vm1943 = vmor %vm1941, %vm1942
        %v1944 = vsel %vm1943, %v1935, %v1940
        %v1945 = vrsqrt.pop %v1883
        %v1946 = vmul.f32 %v1945, %v1883
        %v1947 = vmul.f32 %v1946, %v1945
        %v1948 = vmul.f32 0.5, %v1947
        %v1949 = vsub.f32 1.5, %v1948
        %v1950 = vmul.f32 %v1945, %v1949
        %vm1951 = vweird.f32 %v1883
        %vm1952 = vweird.f32 %v1945
        %vm1953 = vmor %vm1951, %vm1952
        %v1954 = vsel %vm1953, %v1945, %v1950
        %v1955 = vrsqrt.pop %v1884
        %v1956 = vmul.f32 %v1955, %v1884
        %v1957 = vmul.f32 %v1956, %v1955
        %v1958 = vmul.f32 0.5, %v1957
        %v1959 = vsub.f32 1.5, %v1958
        %v1960 = vmul.f32 %v1955, %v1959
        %vm1961 = vweird.f32 %v1884
        %vm1962 = vweird.f32 %v1955
        %vm1963 = vmor %vm1961, %vm1962
        %v1964 = vsel %vm1963, %v1955, %v1960
        %v1965 = vmul.f32 %v1837, %v1894
        %v1966 = vmul.f32 %v1838, %v1904
        %v1967 = vmul.f32 %v1839, %v1914
        %v1968 = vmul.f32 %v1840, %v1924
        %v1969 = vmul.f32 %v1841, %v1934
        %v1970 = vmul.f32 %v1842, %v1944
        %v1971 = vmul.f32 %v1843, %v1954
        %v1972 = vmul.f32 %v1844, %v1964
        %s1973 = scalar_lea.vmem %s21, 1
        %v1974 = vld [vmem:[%s1973] sm:$0x1]
        %v1976 = vperm.slane %v1974, 0
        %v1978 = vmul.f32 %v1965, %v1976
        %v1979 = vmul.f32 %v1966, %v1976
        %v1980 = vmul.f32 %v1967, %v1976
        %v1981 = vmul.f32 %v1968, %v1976
        %v1982 = vmul.f32 %v1969, %v1976
        %v1983 = vmul.f32 %v1970, %v1976
        %v1984 = vmul.f32 %v1971, %v1976
        %v1985 = vmul.f32 %v1972, %v1976
        %s1986 = scalar_lea.vmem %s23, 1
        %v1987 = vld [vmem:[%s1986] sm:$0x1]
        %v1989 = vperm.slane %v1987, 0
        %v1991 = vadd.f32 %v1978, %v1989
        %v1992 = vadd.f32 %v1979, %v1989
        %v1993 = vadd.f32 %v1980, %v1989
        %v1994 = vadd.f32 %v1981, %v1989
        %v1995 = vadd.f32 %v1982, %v1989
        %v1996 = vadd.f32 %v1983, %v1989
        %v1997 = vadd.f32 %v1984, %v1989
        %v1998 = vadd.f32 %v1985, %v1989
        %v1999 = vpack.c.bf16 %v1992, %v1991
        %v2000 = vpack.c.bf16 %v1994, %v1993
        %v2001 = vpack.c.bf16 %v1996, %v1995
        %v2002 = vpack.c.bf16 %v1998, %v1997
        %s2003 = scalar_lea.vmem [#allocation19], 64
        %v2004 = vld [vmem:[%s2003] sm:$0xf]
        %v2005 = vld [vmem:[%s2003 + $0x4] sm:$0xf]
        %v2006 = vld [vmem:[%s2003 + $0x8] sm:$0xf]
        %v2007 = vld [vmem:[%s2003 + $0xc] sm:$0xf]
        %v2008 = vld [vmem:[%s2003 + $0x10] sm:$0xf]
        %v2009 = vld [vmem:[%s2003 + $0x14] sm:$0xf]
        %v2010 = vld [vmem:[%s2003 + $0x18] sm:$0xf]
        %v2011 = vld [vmem:[%s2003 + $0x1c] sm:$0xf]
        %v2012 = vld [vmem:[%s2003 + $0x20] sm:$0xf]
        %v2013 = vld [vmem:[%s2003 + $0x24] sm:$0xf]
        %v2014 = vld [vmem:[%s2003 + $0x28] sm:$0xf]
        %v2015 = vld [vmem:[%s2003 + $0x2c] sm:$0xf]
        %v2016 = vld [vmem:[%s2003 + $0x30] sm:$0xf]
        %v2017 = vld [vmem:[%s2003 + $0x34] sm:$0xf]
        %v2018 = vld [vmem:[%s2003 + $0x38] sm:$0xf]
        %v2019 = vld [vmem:[%s2003 + $0x3c] sm:$0xf]
        %v2036 = vunpack.c.l.b16 %v2004
        %v2037 = vunpack.c.l.b16 %v2005
        %v2038 = vunpack.c.l.b16 %v2006
        %v2039 = vunpack.c.l.b16 %v2007
        %v2040 = vunpack.c.l.b16 %v2008
        %v2041 = vunpack.c.l.b16 %v2009
        %v2042 = vunpack.c.l.b16 %v2010
        %v2043 = vunpack.c.l.b16 %v2011
        %v2044 = vunpack.c.l.b16 %v2012
        %v2045 = vunpack.c.l.b16 %v2013
        %v2046 = vunpack.c.l.b16 %v2014
        %v2047 = vunpack.c.l.b16 %v2015
        %v2048 = vunpack.c.l.b16 %v2016
        %v2049 = vunpack.c.l.b16 %v2017
        %v2050 = vunpack.c.l.b16 %v2018
        %v2051 = vunpack.c.l.b16 %v2019
        %v2052 = vpack.c.b16 %v2037, %v2036
        %v2053 = vpack.c.b16 %v2039, %v2038
        %v2054 = vpack.c.b16 %v2041, %v2040
        %v2055 = vpack.c.b16 %v2043, %v2042
        %v2056 = vpack.c.b16 %v2045, %v2044
        %v2057 = vpack.c.b16 %v2047, %v2046
        %v2058 = vpack.c.b16 %v2049, %v2048
        %v2059 = vpack.c.b16 %v2051, %v2050
        %2068 = vmatpush.bf16.msra.mxu0 %v2059
        %2069 = vmatpush.bf16.msra.mxu0 %v2058
        %2070 = vmatpush.bf16.msra.mxu0 %v2057
        %2071 = vmatpush.bf16.msra.mxu0 %v2056
        %2072 = vmatpush.bf16.msra.mxu0 %v2055
        %2073 = vmatpush.bf16.msra.mxu0 %v2054
        %2074 = vmatpush.bf16.msra.mxu0 %v2053
        %2075 = vmatpush.bf16.msra.mxu0 %v2052
        %2076 = vmatmul.bf16.gmra.mxu0 %v1999
        %v2077 = vpop.f32.mrf.mxu0
        %v2078 = vadd.f32 0.0, %v2077
        %v2079 = vpop.f32.mrf.mxu0
        %v2080 = vadd.f32 0.0, %v2079
        %2081 = vmatmul.bf16.gmra.mxu0 %v2000
        %v2082 = vpop.f32.mrf.mxu0
        %v2083 = vadd.f32 0.0, %v2082
        %v2084 = vpop.f32.mrf.mxu0
        %v2085 = vadd.f32 0.0, %v2084
        %2086 = vmatmul.bf16.gmra.mxu0 %v2001
        %v2087 = vpop.f32.mrf.mxu0
        %v2088 = vadd.f32 0.0, %v2087
        %v2089 = vpop.f32.mrf.mxu0
        %v2090 = vadd.f32 0.0, %v2089
        %2091 = vmatmul.bf16.gmra.mxu0 %v2002
        %v2092 = vpop.f32.mrf.mxu0
        %v2093 = vadd.f32 0.0, %v2092
        %v2094 = vpop.f32.mrf.mxu0
        %v2095 = vadd.f32 0.0, %v2094
        %2096 = vdwg.mxu0
        %v2113 = vunpack.c.l.b16 %v1789
        %v2114 = vunpack.c.l.b16 %v1790
        %v2115 = vunpack.c.l.b16 %v1791
        %v2116 = vunpack.c.l.b16 %v1792
        %v2117 = vunpack.c.l.b16 %v1793
        %v2118 = vunpack.c.l.b16 %v1794
        %v2119 = vunpack.c.l.b16 %v1795
        %v2120 = vunpack.c.l.b16 %v1796
        %v2121 = vunpack.c.l.b16 %v1797
        %v2122 = vunpack.c.l.b16 %v1798
        %v2123 = vunpack.c.l.b16 %v1799
        %v2124 = vunpack.c.l.b16 %v1800
        %v2125 = vunpack.c.l.b16 %v1801
        %v2126 = vunpack.c.l.b16 %v1802
        %v2127 = vunpack.c.l.b16 %v1803
        %v2128 = vunpack.c.l.b16 %v1804
        %v2129 = vpack.c.b16 %v2114, %v2113
        %v2130 = vpack.c.b16 %v2116, %v2115
        %v2131 = vpack.c.b16 %v2118, %v2117
        %v2132 = vpack.c.b16 %v2120, %v2119
        %v2133 = vpack.c.b16 %v2122, %v2121
        %v2134 = vpack.c.b16 %v2124, %v2123
        %v2135 = vpack.c.b16 %v2126, %v2125
        %v2136 = vpack.c.b16 %v2128, %v2127
        %2145 = vmatpush.bf16.msra.mxu0 %v2136
        %2146 = vmatpush.bf16.msra.mxu0 %v2135
        %2147 = vmatpush.bf16.msra.mxu0 %v2134
        %2148 = vmatpush.bf16.msra.mxu0 %v2133
        %2149 = vmatpush.bf16.msra.mxu0 %v2132
        %2150 = vmatpush.bf16.msra.mxu0 %v2131
        %2151 = vmatpush.bf16.msra.mxu0 %v2130
        %2152 = vmatpush.bf16.msra.mxu0 %v2129
        %2153 = vmatmul.bf16.gmra.mxu0 %v1785
        %v2154 = vpop.f32.mrf.mxu0
        %v2155 = vadd.f32 %v2078, %v2154
        %v2156 = vpop.f32.mrf.mxu0
        %v2157 = vadd.f32 %v2080, %v2156
        %2158 = vmatmul.bf16.gmra.mxu0 %v1786
        %v2159 = vpop.f32.mrf.mxu0
        %v2160 = vadd.f32 %v2083, %v2159
        %v2161 = vpop.f32.mrf.mxu0
        %v2162 = vadd.f32 %v2085, %v2161
        %2163 = vmatmul.bf16.gmra.mxu0 %v1787
        %v2164 = vpop.f32.mrf.mxu0
        %v2165 = vadd.f32 %v2088, %v2164
        %v2166 = vpop.f32.mrf.mxu0
        %v2167 = vadd.f32 %v2090, %v2166
        %2168 = vmatmul.bf16.gmra.mxu0 %v1788
        %v2169 = vpop.f32.mrf.mxu0
        %v2170 = vadd.f32 %v2093, %v2169
        %v2171 = vpop.f32.mrf.mxu0
        %v2172 = vadd.f32 %v2095, %v2171
        %2173 = vdwg.mxu0
        %v2174 = vld [vmem:[%s1297] sm:$0xff]
        %v2175 = vld [vmem:[%s1297 + $0x8] sm:$0xff]
        %v2176 = vld [vmem:[%s1297 + $0x10] sm:$0xff]
        %v2177 = vld [vmem:[%s1297 + $0x18] sm:$0xff]
        %v2178 = vld [vmem:[%s1297 + $0x20] sm:$0xff]
        %v2179 = vld [vmem:[%s1297 + $0x28] sm:$0xff]
        %v2180 = vld [vmem:[%s1297 + $0x30] sm:$0xff]
        %v2181 = vld [vmem:[%s1297 + $0x38] sm:$0xff]
        %2182 = vadd.xlane.f32.xlu0 %v2174
        %v2183 = vpop.xlane.xlu0 %2182
        %2184 = vadd.xlane.f32.xlu0 %v2175
        %v2185 = vpop.xlane.xlu0 %2184
        %2186 = vadd.xlane.f32.xlu0 %v2176
        %v2187 = vpop.xlane.xlu0 %2186
        %2188 = vadd.xlane.f32.xlu0 %v2177
        %v2189 = vpop.xlane.xlu0 %2188
        %2190 = vadd.xlane.f32.xlu0 %v2178
        %v2191 = vpop.xlane.xlu0 %2190
        %2192 = vadd.xlane.f32.xlu0 %v2179
        %v2193 = vpop.xlane.xlu0 %2192
        %2194 = vadd.xlane.f32.xlu0 %v2180
        %v2195 = vpop.xlane.xlu0 %2194
        %2196 = vadd.xlane.f32.xlu0 %v2181
        %v2197 = vpop.xlane.xlu0 %2196
        %v2198 = vmul.f32 %v2183, %v1616
        %v2199 = vmul.f32 %v2185, %v1616
        %v2200 = vmul.f32 %v2187, %v1616
        %v2201 = vmul.f32 %v2189, %v1616
        %v2202 = vmul.f32 %v2191, %v1616
        %v2203 = vmul.f32 %v2193, %v1616
        %v2204 = vmul.f32 %v2195, %v1616
        %v2205 = vmul.f32 %v2197, %v1616
        %v2206 = vsub.f32 %v2174, %v2198
        %v2207 = vsub.f32 %v2175, %v2199
        %v2208 = vsub.f32 %v2176, %v2200
        %v2209 = vsub.f32 %v2177, %v2201
        %v2210 = vsub.f32 %v2178, %v2202
        %v2211 = vsub.f32 %v2179, %v2203
        %v2212 = vsub.f32 %v2180, %v2204
        %v2213 = vsub.f32 %v2181, %v2205
        %v2214 = vmul.f32 %v2206, %v2206
        %v2215 = vmul.f32 %v2207, %v2207
        %v2216 = vmul.f32 %v2208, %v2208
        %v2217 = vmul.f32 %v2209, %v2209
        %v2218 = vmul.f32 %v2210, %v2210
        %v2219 = vmul.f32 %v2211, %v2211
        %v2220 = vmul.f32 %v2212, %v2212
        %v2221 = vmul.f32 %v2213, %v2213
        %2222 = vadd.xlane.f32.xlu0 %v2214
        %v2223 = vpop.xlane.xlu0 %2222
        %2224 = vadd.xlane.f32.xlu0 %v2215
        %v2225 = vpop.xlane.xlu0 %2224
        %2226 = vadd.xlane.f32.xlu0 %v2216
        %v2227 = vpop.xlane.xlu0 %2226
        %2228 = vadd.xlane.f32.xlu0 %v2217
        %v2229 = vpop.xlane.xlu0 %2228
        %2230 = vadd.xlane.f32.xlu0 %v2218
        %v2231 = vpop.xlane.xlu0 %2230
        %2232 = vadd.xlane.f32.xlu0 %v2219
        %v2233 = vpop.xlane.xlu0 %2232
        %2234 = vadd.xlane.f32.xlu0 %v2220
        %v2235 = vpop.xlane.xlu0 %2234
        %2236 = vadd.xlane.f32.xlu0 %v2221
        %v2237 = vpop.xlane.xlu0 %2236
        %v2238 = vmul.f32 %v2223, %v1616
        %v2239 = vmul.f32 %v2225, %v1616
        %v2240 = vmul.f32 %v2227, %v1616
        %v2241 = vmul.f32 %v2229, %v1616
        %v2242 = vmul.f32 %v2231, %v1616
        %v2243 = vmul.f32 %v2233, %v1616
        %v2244 = vmul.f32 %v2235, %v1616
        %v2245 = vmul.f32 %v2237, %v1616
        %v2246 = vadd.f32 %v2238, 1e-05
        %v2247 = vadd.f32 %v2239, 1e-05
        %v2248 = vadd.f32 %v2240, 1e-05
        %v2249 = vadd.f32 %v2241, 1e-05
        %v2250 = vadd.f32 %v2242, 1e-05
        %v2251 = vadd.f32 %v2243, 1e-05
        %v2252 = vadd.f32 %v2244, 1e-05
        %v2253 = vadd.f32 %v2245, 1e-05
        %v2254 = vrsqrt.pop %v2246
        %v2255 = vmul.f32 %v2254, %v2246
        %v2256 = vmul.f32 %v2255, %v2254
        %v2257 = vmul.f32 0.5, %v2256
        %v2258 = vsub.f32 1.5, %v2257
        %v2259 = vmul.f32 %v2254, %v2258
        %vm2260 = vweird.f32 %v2246
        %vm2261 = vweird.f32 %v2254
        %vm2262 = vmor %vm2260, %vm2261
        %v2263 = vsel %vm2262, %v2254, %v2259
        %v2264 = vrsqrt.pop %v2247
        %v2265 = vmul.f32 %v2264, %v2247
        %v2266 = vmul.f32 %v2265, %v2264
        %v2267 = vmul.f32 0.5, %v2266
        %v2268 = vsub.f32 1.5, %v2267
        %v2269 = vmul.f32 %v2264, %v2268
        %vm2270 = vweird.f32 %v2247
        %vm2271 = vweird.f32 %v2264
        %vm2272 = vmor %vm2270, %vm2271
        %v2273 = vsel %vm2272, %v2264, %v2269
        %v2274 = vrsqrt.pop %v2248
        %v2275 = vmul.f32 %v2274, %v2248
        %v2276 = vmul.f32 %v2275, %v2274
        %v2277 = vmul.f32 0.5, %v2276
        %v2278 = vsub.f32 1.5, %v2277
        %v2279 = vmul.f32 %v2274, %v2278
        %vm2280 = vweird.f32 %v2248
        %vm2281 = vweird.f32 %v2274
        %vm2282 = vmor %vm2280, %vm2281
        %v2283 = vsel %vm2282, %v2274, %v2279
        %v2284 = vrsqrt.pop %v2249
        %v2285 = vmul.f32 %v2284, %v2249
        %v2286 = vmul.f32 %v2285, %v2284
        %v2287 = vmul.f32 0.5, %v2286
        %v2288 = vsub.f32 1.5, %v2287
        %v2289 = vmul.f32 %v2284, %v2288
        %vm2290 = vweird.f32 %v2249
        %vm2291 = vweird.f32 %v2284
        %vm2292 = vmor %vm2290, %vm2291
        %v2293 = vsel %vm2292, %v2284, %v2289
        %v2294 = vrsqrt.pop %v2250
        %v2295 = vmul.f32 %v2294, %v2250
        %v2296 = vmul.f32 %v2295, %v2294
        %v2297 = vmul.f32 0.5, %v2296
        %v2298 = vsub.f32 1.5, %v2297
        %v2299 = vmul.f32 %v2294, %v2298
        %vm2300 = vweird.f32 %v2250
        %vm2301 = vweird.f32 %v2294
        %vm2302 = vmor %vm2300, %vm2301
        %v2303 = vsel %vm2302, %v2294, %v2299
        %v2304 = vrsqrt.pop %v2251
        %v2305 = vmul.f32 %v2304, %v2251
        %v2306 = vmul.f32 %v2305, %v2304
        %v2307 = vmul.f32 0.5, %v2306
        %v2308 = vsub.f32 1.5, %v2307
        %v2309 = vmul.f32 %v2304, %v2308
        %vm2310 = vweird.f32 %v2251
        %vm2311 = vweird.f32 %v2304
        %vm2312 = vmor %vm2310, %vm2311
        %v2313 = vsel %vm2312, %v2304, %v2309
        %v2314 = vrsqrt.pop %v2252
        %v2315 = vmul.f32 %v2314, %v2252
        %v2316 = vmul.f32 %v2315, %v2314
        %v2317 = vmul.f32 0.5, %v2316
        %v2318 = vsub.f32 1.5, %v2317
        %v2319 = vmul.f32 %v2314, %v2318
        %vm2320 = vweird.f32 %v2252
        %vm2321 = vweird.f32 %v2314
        %vm2322 = vmor %vm2320, %vm2321
        %v2323 = vsel %vm2322, %v2314, %v2319
        %v2324 = vrsqrt.pop %v2253
        %v2325 = vmul.f32 %v2324, %v2253
        %v2326 = vmul.f32 %v2325, %v2324
        %v2327 = vmul.f32 0.5, %v2326
        %v2328 = vsub.f32 1.5, %v2327
        %v2329 = vmul.f32 %v2324, %v2328
        %vm2330 = vweird.f32 %v2253
        %vm2331 = vweird.f32 %v2324
        %vm2332 = vmor %vm2330, %vm2331
        %v2333 = vsel %vm2332, %v2324, %v2329
        %v2334 = vmul.f32 %v2206, %v2263
        %v2335 = vmul.f32 %v2207, %v2273
        %v2336 = vmul.f32 %v2208, %v2283
        %v2337 = vmul.f32 %v2209, %v2293
        %v2338 = vmul.f32 %v2210, %v2303
        %v2339 = vmul.f32 %v2211, %v2313
        %v2340 = vmul.f32 %v2212, %v2323
        %v2341 = vmul.f32 %v2213, %v2333
        %s2342 = scalar_lea.vmem %s21, 2
        %v2343 = vld [vmem:[%s2342] sm:$0x1]
        %v2345 = vperm.slane %v2343, 0
        %v2347 = vmul.f32 %v2334, %v2345
        %v2348 = vmul.f32 %v2335, %v2345
        %v2349 = vmul.f32 %v2336, %v2345
        %v2350 = vmul.f32 %v2337, %v2345
        %v2351 = vmul.f32 %v2338, %v2345
        %v2352 = vmul.f32 %v2339, %v2345
        %v2353 = vmul.f32 %v2340, %v2345
        %v2354 = vmul.f32 %v2341, %v2345
        %s2355 = scalar_lea.vmem %s23, 2
        %v2356 = vld [vmem:[%s2355] sm:$0x1]
        %v2358 = vperm.slane %v2356, 0
        %v2360 = vadd.f32 %v2347, %v2358
        %v2361 = vadd.f32 %v2348, %v2358
        %v2362 = vadd.f32 %v2349, %v2358
        %v2363 = vadd.f32 %v2350, %v2358
        %v2364 = vadd.f32 %v2351, %v2358
        %v2365 = vadd.f32 %v2352, %v2358
        %v2366 = vadd.f32 %v2353, %v2358
        %v2367 = vadd.f32 %v2354, %v2358
        %v2368 = vpack.c.bf16 %v2361, %v2360
        %v2369 = vpack.c.bf16 %v2363, %v2362
        %v2370 = vpack.c.bf16 %v2365, %v2364
        %v2371 = vpack.c.bf16 %v2367, %v2366
        %s2372 = scalar_lea.vmem [#allocation19], 128
        %v2373 = vld [vmem:[%s2372] sm:$0xf]
        %v2374 = vld [vmem:[%s2372 + $0x4] sm:$0xf]
        %v2375 = vld [vmem:[%s2372 + $0x8] sm:$0xf]
        %v2376 = vld [vmem:[%s2372 + $0xc] sm:$0xf]
        %v2377 = vld [vmem:[%s2372 + $0x10] sm:$0xf]
        %v2378 = vld [vmem:[%s2372 + $0x14] sm:$0xf]
        %v2379 = vld [vmem:[%s2372 + $0x18] sm:$0xf]
        %v2380 = vld [vmem:[%s2372 + $0x1c] sm:$0xf]
        %v2381 = vld [vmem:[%s2372 + $0x20] sm:$0xf]
        %v2382 = vld [vmem:[%s2372 + $0x24] sm:$0xf]
        %v2383 = vld [vmem:[%s2372 + $0x28] sm:$0xf]
        %v2384 = vld [vmem:[%s2372 + $0x2c] sm:$0xf]
        %v2385 = vld [vmem:[%s2372 + $0x30] sm:$0xf]
        %v2386 = vld [vmem:[%s2372 + $0x34] sm:$0xf]
        %v2387 = vld [vmem:[%s2372 + $0x38] sm:$0xf]
        %v2388 = vld [vmem:[%s2372 + $0x3c] sm:$0xf]
        %v2405 = vunpack.c.l.b16 %v2373
        %v2406 = vunpack.c.l.b16 %v2374
        %v2407 = vunpack.c.l.b16 %v2375
        %v2408 = vunpack.c.l.b16 %v2376
        %v2409 = vunpack.c.l.b16 %v2377
        %v2410 = vunpack.c.l.b16 %v2378
        %v2411 = vunpack.c.l.b16 %v2379
        %v2412 = vunpack.c.l.b16 %v2380
        %v2413 = vunpack.c.l.b16 %v2381
        %v2414 = vunpack.c.l.b16 %v2382
        %v2415 = vunpack.c.l.b16 %v2383
        %v2416 = vunpack.c.l.b16 %v2384
        %v2417 = vunpack.c.l.b16 %v2385
        %v2418 = vunpack.c.l.b16 %v2386
        %v2419 = vunpack.c.l.b16 %v2387
        %v2420 = vunpack.c.l.b16 %v2388
        %v2421 = vpack.c.b16 %v2406, %v2405
        %v2422 = vpack.c.b16 %v2408, %v2407
        %v2423 = vpack.c.b16 %v2410, %v2409
        %v2424 = vpack.c.b16 %v2412, %v2411
        %v2425 = vpack.c.b16 %v2414, %v2413
        %v2426 = vpack.c.b16 %v2416, %v2415
        %v2427 = vpack.c.b16 %v2418, %v2417
        %v2428 = vpack.c.b16 %v2420, %v2419
        %2437 = vmatpush.bf16.msra.mxu0 %v2428
        %2438 = vmatpush.bf16.msra.mxu0 %v2427
        %2439 = vmatpush.bf16.msra.mxu0 %v2426
        %2440 = vmatpush.bf16.msra.mxu0 %v2425
        %2441 = vmatpush.bf16.msra.mxu0 %v2424
        %2442 = vmatpush.bf16.msra.mxu0 %v2423
        %2443 = vmatpush.bf16.msra.mxu0 %v2422
        %2444 = vmatpush.bf16.msra.mxu0 %v2421
        %2445 = vmatmul.bf16.gmra.mxu0 %v2368
        %v2446 = vpop.f32.mrf.mxu0
        %v2447 = vadd.f32 0.0, %v2446
        %v2448 = vpop.f32.mrf.mxu0
        %v2449 = vadd.f32 0.0, %v2448
        %2450 = vmatmul.bf16.gmra.mxu0 %v2369
        %v2451 = vpop.f32.mrf.mxu0
        %v2452 = vadd.f32 0.0, %v2451
        %v2453 = vpop.f32.mrf.mxu0
        %v2454 = vadd.f32 0.0, %v2453
        %2455 = vmatmul.bf16.gmra.mxu0 %v2370
        %v2456 = vpop.f32.mrf.mxu0
        %v2457 = vadd.f32 0.0, %v2456
        %v2458 = vpop.f32.mrf.mxu0
        %v2459 = vadd.f32 0.0, %v2458
        %2460 = vmatmul.bf16.gmra.mxu0 %v2371
        %v2461 = vpop.f32.mrf.mxu0
        %v2462 = vadd.f32 0.0, %v2461
        %v2463 = vpop.f32.mrf.mxu0
        %v2464 = vadd.f32 0.0, %v2463
        %2465 = vdwg.mxu0
        %v2466 = vadd.f32 %v2155, %v2447
        %v2467 = vadd.f32 %v2157, %v2449
        %v2468 = vadd.f32 %v2160, %v2452
        %v2469 = vadd.f32 %v2162, %v2454
        %v2470 = vadd.f32 %v2165, %v2457
        %v2471 = vadd.f32 %v2167, %v2459
        %v2472 = vadd.f32 %v2170, %v2462
        %v2473 = vadd.f32 %v2172, %v2464
        %v2474 = vld [vmem:[%s1307] sm:$0xff]
        %v2475 = vld [vmem:[%s1307 + $0x8] sm:$0xff]
        %v2476 = vld [vmem:[%s1307 + $0x10] sm:$0xff]
        %v2477 = vld [vmem:[%s1307 + $0x18] sm:$0xff]
        %v2478 = vld [vmem:[%s1307 + $0x20] sm:$0xff]
        %v2479 = vld [vmem:[%s1307 + $0x28] sm:$0xff]
        %v2480 = vld [vmem:[%s1307 + $0x30] sm:$0xff]
        %v2481 = vld [vmem:[%s1307 + $0x38] sm:$0xff]
        %2482 = vadd.xlane.f32.xlu0 %v2474
        %v2483 = vpop.xlane.xlu0 %2482
        %2484 = vadd.xlane.f32.xlu0 %v2475
        %v2485 = vpop.xlane.xlu0 %2484
        %2486 = vadd.xlane.f32.xlu0 %v2476
        %v2487 = vpop.xlane.xlu0 %2486
        %2488 = vadd.xlane.f32.xlu0 %v2477
        %v2489 = vpop.xlane.xlu0 %2488
        %2490 = vadd.xlane.f32.xlu0 %v2478
        %v2491 = vpop.xlane.xlu0 %2490
        %2492 = vadd.xlane.f32.xlu0 %v2479
        %v2493 = vpop.xlane.xlu0 %2492
        %2494 = vadd.xlane.f32.xlu0 %v2480
        %v2495 = vpop.xlane.xlu0 %2494
        %2496 = vadd.xlane.f32.xlu0 %v2481
        %v2497 = vpop.xlane.xlu0 %2496
        %v2498 = vmul.f32 %v2483, %v1616
        %v2499 = vmul.f32 %v2485, %v1616
        %v2500 = vmul.f32 %v2487, %v1616
        %v2501 = vmul.f32 %v2489, %v1616
        %v2502 = vmul.f32 %v2491, %v1616
        %v2503 = vmul.f32 %v2493, %v1616
        %v2504 = vmul.f32 %v2495, %v1616
        %v2505 = vmul.f32 %v2497, %v1616
        %v2506 = vsub.f32 %v2474, %v2498
        %v2507 = vsub.f32 %v2475, %v2499
        %v2508 = vsub.f32 %v2476, %v2500
        %v2509 = vsub.f32 %v2477, %v2501
        %v2510 = vsub.f32 %v2478, %v2502
        %v2511 = vsub.f32 %v2479, %v2503
        %v2512 = vsub.f32 %v2480, %v2504
        %v2513 = vsub.f32 %v2481, %v2505
        %v2514 = vmul.f32 %v2506, %v2506
        %v2515 = vmul.f32 %v2507, %v2507
        %v2516 = vmul.f32 %v2508, %v2508
        %v2517 = vmul.f32 %v2509, %v2509
        %v2518 = vmul.f32 %v2510, %v2510
        %v2519 = vmul.f32 %v2511, %v2511
        %v2520 = vmul.f32 %v2512, %v2512
        %v2521 = vmul.f32 %v2513, %v2513
        %2522 = vadd.xlane.f32.xlu0 %v2514
        %v2523 = vpop.xlane.xlu0 %2522
        %2524 = vadd.xlane.f32.xlu0 %v2515
        %v2525 = vpop.xlane.xlu0 %2524
        %2526 = vadd.xlane.f32.xlu0 %v2516
        %v2527 = vpop.xlane.xlu0 %2526
        %2528 = vadd.xlane.f32.xlu0 %v2517
        %v2529 = vpop.xlane.xlu0 %2528
        %2530 = vadd.xlane.f32.xlu0 %v2518
        %v2531 = vpop.xlane.xlu0 %2530
        %2532 = vadd.xlane.f32.xlu0 %v2519
        %v2533 = vpop.xlane.xlu0 %2532
        %2534 = vadd.xlane.f32.xlu0 %v2520
        %v2535 = vpop.xlane.xlu0 %2534
        %2536 = vadd.xlane.f32.xlu0 %v2521
        %v2537 = vpop.xlane.xlu0 %2536
        %v2538 = vmul.f32 %v2523, %v1616
        %v2539 = vmul.f32 %v2525, %v1616
        %v2540 = vmul.f32 %v2527, %v1616
        %v2541 = vmul.f32 %v2529, %v1616
        %v2542 = vmul.f32 %v2531, %v1616
        %v2543 = vmul.f32 %v2533, %v1616
        %v2544 = vmul.f32 %v2535, %v1616
        %v2545 = vmul.f32 %v2537, %v1616
        %v2546 = vadd.f32 %v2538, 1e-05
        %v2547 = vadd.f32 %v2539, 1e-05
        %v2548 = vadd.f32 %v2540, 1e-05
        %v2549 = vadd.f32 %v2541, 1e-05
        %v2550 = vadd.f32 %v2542, 1e-05
        %v2551 = vadd.f32 %v2543, 1e-05
        %v2552 = vadd.f32 %v2544, 1e-05
        %v2553 = vadd.f32 %v2545, 1e-05
        %v2554 = vrsqrt.pop %v2546
        %v2555 = vmul.f32 %v2554, %v2546
        %v2556 = vmul.f32 %v2555, %v2554
        %v2557 = vmul.f32 0.5, %v2556
        %v2558 = vsub.f32 1.5, %v2557
        %v2559 = vmul.f32 %v2554, %v2558
        %vm2560 = vweird.f32 %v2546
        %vm2561 = vweird.f32 %v2554
        %vm2562 = vmor %vm2560, %vm2561
        %v2563 = vsel %vm2562, %v2554, %v2559
        %v2564 = vrsqrt.pop %v2547
        %v2565 = vmul.f32 %v2564, %v2547
        %v2566 = vmul.f32 %v2565, %v2564
        %v2567 = vmul.f32 0.5, %v2566
        %v2568 = vsub.f32 1.5, %v2567
        %v2569 = vmul.f32 %v2564, %v2568
        %vm2570 = vweird.f32 %v2547
        %vm2571 = vweird.f32 %v2564
        %vm2572 = vmor %vm2570, %vm2571
        %v2573 = vsel %vm2572, %v2564, %v2569
        %v2574 = vrsqrt.pop %v2548
        %v2575 = vmul.f32 %v2574, %v2548
        %v2576 = vmul.f32 %v2575, %v2574
        %v2577 = vmul.f32 0.5, %v2576
        %v2578 = vsub.f32 1.5, %v2577
        %v2579 = vmul.f32 %v2574, %v2578
        %vm2580 = vweird.f32 %v2548
        %vm2581 = vweird.f32 %v2574
        %vm2582 = vmor %vm2580, %vm2581
        %v2583 = vsel %vm2582, %v2574, %v2579
        %v2584 = vrsqrt.pop %v2549
        %v2585 = vmul.f32 %v2584, %v2549
        %v2586 = vmul.f32 %v2585, %v2584
        %v2587 = vmul.f32 0.5, %v2586
        %v2588 = vsub.f32 1.5, %v2587
        %v2589 = vmul.f32 %v2584, %v2588
        %vm2590 = vweird.f32 %v2549
        %vm2591 = vweird.f32 %v2584
        %vm2592 = vmor %vm2590, %vm2591
        %v2593 = vsel %vm2592, %v2584, %v2589
        %v2594 = vrsqrt.pop %v2550
        %v2595 = vmul.f32 %v2594, %v2550
        %v2596 = vmul.f32 %v2595, %v2594
        %v2597 = vmul.f32 0.5, %v2596
        %v2598 = vsub.f32 1.5, %v2597
        %v2599 = vmul.f32 %v2594, %v2598
        %vm2600 = vweird.f32 %v2550
        %vm2601 = vweird.f32 %v2594
        %vm2602 = vmor %vm2600, %vm2601
        %v2603 = vsel %vm2602, %v2594, %v2599
        %v2604 = vrsqrt.pop %v2551
        %v2605 = vmul.f32 %v2604, %v2551
        %v2606 = vmul.f32 %v2605, %v2604
        %v2607 = vmul.f32 0.5, %v2606
        %v2608 = vsub.f32 1.5, %v2607
        %v2609 = vmul.f32 %v2604, %v2608
        %vm2610 = vweird.f32 %v2551
        %vm2611 = vweird.f32 %v2604
        %vm2612 = vmor %vm2610, %vm2611
        %v2613 = vsel %vm2612, %v2604, %v2609
        %v2614 = vrsqrt.pop %v2552
        %v2615 = vmul.f32 %v2614, %v2552
        %v2616 = vmul.f32 %v2615, %v2614
        %v2617 = vmul.f32 0.5, %v2616
        %v2618 = vsub.f32 1.5, %v2617
        %v2619 = vmul.f32 %v2614, %v2618
        %vm2620 = vweird.f32 %v2552
        %vm2621 = vweird.f32 %v2614
        %vm2622 = vmor %vm2620, %vm2621
        %v2623 = vsel %vm2622, %v2614, %v2619
        %v2624 = vrsqrt.pop %v2553
        %v2625 = vmul.f32 %v2624, %v2553
        %v2626 = vmul.f32 %v2625, %v2624
        %v2627 = vmul.f32 0.5, %v2626
        %v2628 = vsub.f32 1.5, %v2627
        %v2629 = vmul.f32 %v2624, %v2628
        %vm2630 = vweird.f32 %v2553
        %vm2631 = vweird.f32 %v2624
        %vm2632 = vmor %vm2630, %vm2631
        %v2633 = vsel %vm2632, %v2624, %v2629
        %v2634 = vmul.f32 %v2506, %v2563
        %v2635 = vmul.f32 %v2507, %v2573
        %v2636 = vmul.f32 %v2508, %v2583
        %v2637 = vmul.f32 %v2509, %v2593
        %v2638 = vmul.f32 %v2510, %v2603
        %v2639 = vmul.f32 %v2511, %v2613
        %v2640 = vmul.f32 %v2512, %v2623
        %v2641 = vmul.f32 %v2513, %v2633
        %s2642 = scalar_lea.vmem %s21, 3
        %v2643 = vld [vmem:[%s2642] sm:$0x1]
        %v2645 = vperm.slane %v2643, 0
        %v2647 = vmul.f32 %v2634, %v2645
        %v2648 = vmul.f32 %v2635, %v2645
        %v2649 = vmul.f32 %v2636, %v2645
        %v2650 = vmul.f32 %v2637, %v2645
        %v2651 = vmul.f32 %v2638, %v2645
        %v2652 = vmul.f32 %v2639, %v2645
        %v2653 = vmul.f32 %v2640, %v2645
        %v2654 = vmul.f32 %v2641, %v2645
        %s2655 = scalar_lea.vmem %s23, 3
        %v2656 = vld [vmem:[%s2655] sm:$0x1]
        %v2658 = vperm.slane %v2656, 0
        %v2660 = vadd.f32 %v2647, %v2658
        %v2661 = vadd.f32 %v2648, %v2658
        %v2662 = vadd.f32 %v2649, %v2658
        %v2663 = vadd.f32 %v2650, %v2658
        %v2664 = vadd.f32 %v2651, %v2658
        %v2665 = vadd.f32 %v2652, %v2658
        %v2666 = vadd.f32 %v2653, %v2658
        %v2667 = vadd.f32 %v2654, %v2658
        %v2668 = vpack.c.bf16 %v2661, %v2660
        %v2669 = vpack.c.bf16 %v2663, %v2662
        %v2670 = vpack.c.bf16 %v2665, %v2664
        %v2671 = vpack.c.bf16 %v2667, %v2666
        %s2672 = scalar_lea.vmem [#allocation19], 192
        %v2673 = vld [vmem:[%s2672] sm:$0xf]
        %v2674 = vld [vmem:[%s2672 + $0x4] sm:$0xf]
        %v2675 = vld [vmem:[%s2672 + $0x8] sm:$0xf]
        %v2676 = vld [vmem:[%s2672 + $0xc] sm:$0xf]
        %v2677 = vld [vmem:[%s2672 + $0x10] sm:$0xf]
        %v2678 = vld [vmem:[%s2672 + $0x14] sm:$0xf]
        %v2679 = vld [vmem:[%s2672 + $0x18] sm:$0xf]
        %v2680 = vld [vmem:[%s2672 + $0x1c] sm:$0xf]
        %v2681 = vld [vmem:[%s2672 + $0x20] sm:$0xf]
        %v2682 = vld [vmem:[%s2672 + $0x24] sm:$0xf]
        %v2683 = vld [vmem:[%s2672 + $0x28] sm:$0xf]
        %v2684 = vld [vmem:[%s2672 + $0x2c] sm:$0xf]
        %v2685 = vld [vmem:[%s2672 + $0x30] sm:$0xf]
        %v2686 = vld [vmem:[%s2672 + $0x34] sm:$0xf]
        %v2687 = vld [vmem:[%s2672 + $0x38] sm:$0xf]
        %v2688 = vld [vmem:[%s2672 + $0x3c] sm:$0xf]
        %v2705 = vunpack.c.l.b16 %v2673
        %v2706 = vunpack.c.l.b16 %v2674
        %v2707 = vunpack.c.l.b16 %v2675
        %v2708 = vunpack.c.l.b16 %v2676
        %v2709 = vunpack.c.l.b16 %v2677
        %v2710 = vunpack.c.l.b16 %v2678
        %v2711 = vunpack.c.l.b16 %v2679
        %v2712 = vunpack.c.l.b16 %v2680
        %v2713 = vunpack.c.l.b16 %v2681
        %v2714 = vunpack.c.l.b16 %v2682
        %v2715 = vunpack.c.l.b16 %v2683
        %v2716 = vunpack.c.l.b16 %v2684
        %v2717 = vunpack.c.l.b16 %v2685
        %v2718 = vunpack.c.l.b16 %v2686
        %v2719 = vunpack.c.l.b16 %v2687
        %v2720 = vunpack.c.l.b16 %v2688
        %v2721 = vpack.c.b16 %v2706, %v2705
        %v2722 = vpack.c.b16 %v2708, %v2707
        %v2723 = vpack.c.b16 %v2710, %v2709
        %v2724 = vpack.c.b16 %v2712, %v2711
        %v2725 = vpack.c.b16 %v2714, %v2713
        %v2726 = vpack.c.b16 %v2716, %v2715
        %v2727 = vpack.c.b16 %v2718, %v2717
        %v2728 = vpack.c.b16 %v2720, %v2719
        %2737 = vmatpush.bf16.msra.mxu0 %v2728
        %2738 = vmatpush.bf16.msra.mxu0 %v2727
        %2739 = vmatpush.bf16.msra.mxu0 %v2726
        %2740 = vmatpush.bf16.msra.mxu0 %v2725
        %2741 = vmatpush.bf16.msra.mxu0 %v2724
        %2742 = vmatpush.bf16.msra.mxu0 %v2723
        %2743 = vmatpush.bf16.msra.mxu0 %v2722
        %2744 = vmatpush.bf16.msra.mxu0 %v2721
        %2745 = vmatmul.bf16.gmra.mxu0 %v2668
        %v2746 = vpop.f32.mrf.mxu0
        %v2747 = vadd.f32 0.0, %v2746
        %v2748 = vpop.f32.mrf.mxu0
        %v2749 = vadd.f32 0.0, %v2748
        %2750 = vmatmul.bf16.gmra.mxu0 %v2669
        %v2751 = vpop.f32.mrf.mxu0
        %v2752 = vadd.f32 0.0, %v2751
        %v2753 = vpop.f32.mrf.mxu0
        %v2754 = vadd.f32 0.0, %v2753
        %2755 = vmatmul.bf16.gmra.mxu0 %v2670
        %v2756 = vpop.f32.mrf.mxu0
        %v2757 = vadd.f32 0.0, %v2756
        %v2758 = vpop.f32.mrf.mxu0
        %v2759 = vadd.f32 0.0, %v2758
        %2760 = vmatmul.bf16.gmra.mxu0 %v2671
        %v2761 = vpop.f32.mrf.mxu0
        %v2762 = vadd.f32 0.0, %v2761
        %v2763 = vpop.f32.mrf.mxu0
        %v2764 = vadd.f32 0.0, %v2763
        %2765 = vdwg.mxu0
        %v2766 = vadd.f32 %v2466, %v2747
        %v2767 = vadd.f32 %v2467, %v2749
        %v2768 = vadd.f32 %v2468, %v2752
        %v2769 = vadd.f32 %v2469, %v2754
        %v2770 = vadd.f32 %v2470, %v2757
        %v2771 = vadd.f32 %v2471, %v2759
        %v2772 = vadd.f32 %v2472, %v2762
        %v2773 = vadd.f32 %v2473, %v2764
        %v2774 = vld [vmem:[#allocation20] sm:$0x1]
        %v2776 = vperm.slane %v2774, 0
        %v2778 = vadd.f32 %v2766, %v2776
        %v2779 = vadd.f32 %v2767, %v2776
        %v2780 = vadd.f32 %v2768, %v2776
        %v2781 = vadd.f32 %v2769, %v2776
        %v2782 = vadd.f32 %v2770, %v2776
        %v2783 = vadd.f32 %v2771, %v2776
        %v2784 = vadd.f32 %v2772, %v2776
        %v2785 = vadd.f32 %v2773, %v2776
        %2786 = vst [vmem:[%s1526] sm:$0xff] %v2778
        %2787 = vst [vmem:[%s1526 + $0x8] sm:$0xff] %v2779
        %2788 = vst [vmem:[%s1526 + $0x10] sm:$0xff] %v2780
        %2789 = vst [vmem:[%s1526 + $0x18] sm:$0xff] %v2781
        %2790 = vst [vmem:[%s1526 + $0x20] sm:$0xff] %v2782
        %2791 = vst [vmem:[%s1526 + $0x28] sm:$0xff] %v2783
        %2792 = vst [vmem:[%s1526 + $0x30] sm:$0xff] %v2784
        %2793 = vst [vmem:[%s1526 + $0x38] sm:$0xff] %v2785
        %v2794 = vld [vmem:[%s1337] sm:$0xff]
        %v2795 = vld [vmem:[%s1337 + $0x8] sm:$0xff]
        %v2796 = vld [vmem:[%s1337 + $0x10] sm:$0xff]
        %v2797 = vld [vmem:[%s1337 + $0x18] sm:$0xff]
        %v2798 = vld [vmem:[%s1337 + $0x20] sm:$0xff]
        %v2799 = vld [vmem:[%s1337 + $0x28] sm:$0xff]
        %v2800 = vld [vmem:[%s1337 + $0x30] sm:$0xff]
        %v2801 = vld [vmem:[%s1337 + $0x38] sm:$0xff]
        %v2802 = vpack.c.bf16 %v2795, %v2794
        %v2803 = vpack.c.bf16 %v2797, %v2796
        %v2804 = vpack.c.bf16 %v2799, %v2798
        %v2805 = vpack.c.bf16 %v2801, %v2800
        %v2806 = vld [vmem:[#allocation22] sm:$0xf]
        %v2807 = vld [vmem:[#allocation22 + $0x4] sm:$0xf]
        %v2808 = vld [vmem:[#allocation22 + $0x8] sm:$0xf]
        %v2809 = vld [vmem:[#allocation22 + $0xc] sm:$0xf]
        %v2810 = vld [vmem:[#allocation22 + $0x10] sm:$0xf]
        %v2811 = vld [vmem:[#allocation22 + $0x14] sm:$0xf]
        %v2812 = vld [vmem:[#allocation22 + $0x18] sm:$0xf]
        %v2813 = vld [vmem:[#allocation22 + $0x1c] sm:$0xf]
        %v2814 = vld [vmem:[#allocation22 + $0x20] sm:$0xf]
        %v2815 = vld [vmem:[#allocation22 + $0x24] sm:$0xf]
        %v2816 = vld [vmem:[#allocation22 + $0x28] sm:$0xf]
        %v2817 = vld [vmem:[#allocation22 + $0x2c] sm:$0xf]
        %v2818 = vld [vmem:[#allocation22 + $0x30] sm:$0xf]
        %v2819 = vld [vmem:[#allocation22 + $0x34] sm:$0xf]
        %v2820 = vld [vmem:[#allocation22 + $0x38] sm:$0xf]
        %v2821 = vld [vmem:[#allocation22 + $0x3c] sm:$0xf]
        %v2822 = vld [vmem:[#allocation23] sm:$0x1]
        %v2824 = vperm.slane %v2822, 0
        %v2842 = vunpack.c.l.b16 %v2806
        %v2843 = vunpack.c.l.b16 %v2807
        %v2844 = vunpack.c.l.b16 %v2808
        %v2845 = vunpack.c.l.b16 %v2809
        %v2846 = vunpack.c.l.b16 %v2810
        %v2847 = vunpack.c.l.b16 %v2811
        %v2848 = vunpack.c.l.b16 %v2812
        %v2849 = vunpack.c.l.b16 %v2813
        %v2850 = vunpack.c.l.b16 %v2814
        %v2851 = vunpack.c.l.b16 %v2815
        %v2852 = vunpack.c.l.b16 %v2816
        %v2853 = vunpack.c.l.b16 %v2817
        %v2854 = vunpack.c.l.b16 %v2818
        %v2855 = vunpack.c.l.b16 %v2819
        %v2856 = vunpack.c.l.b16 %v2820
        %v2857 = vunpack.c.l.b16 %v2821
        %v2858 = vpack.c.b16 %v2843, %v2842
        %v2859 = vpack.c.b16 %v2845, %v2844
        %v2860 = vpack.c.b16 %v2847, %v2846
        %v2861 = vpack.c.b16 %v2849, %v2848
        %v2862 = vpack.c.b16 %v2851, %v2850
        %v2863 = vpack.c.b16 %v2853, %v2852
        %v2864 = vpack.c.b16 %v2855, %v2854
        %v2865 = vpack.c.b16 %v2857, %v2856
        %2874 = vmatpush.bf16.msra.mxu0 %v2865
        %2875 = vmatpush.bf16.msra.mxu0 %v2864
        %2876 = vmatpush.bf16.msra.mxu0 %v2863
        %2877 = vmatpush.bf16.msra.mxu0 %v2862
        %2878 = vmatpush.bf16.msra.mxu0 %v2861
        %2879 = vmatpush.bf16.msra.mxu0 %v2860
        %2880 = vmatpush.bf16.msra.mxu0 %v2859
        %2881 = vmatpush.bf16.msra.mxu0 %v2858
        %2882 = vmatmul.bf16.gmra.mxu0 %v2802
        %v2883 = vpop.f32.mrf.mxu0
        %v2884 = vadd.f32 %v2824, %v2883
        %v2885 = vpop.f32.mrf.mxu0
        %v2886 = vadd.f32 %v2824, %v2885
        %2887 = vmatmul.bf16.gmra.mxu0 %v2803
        %v2888 = vpop.f32.mrf.mxu0
        %v2889 = vadd.f32 %v2824, %v2888
        %v2890 = vpop.f32.mrf.mxu0
        %v2891 = vadd.f32 %v2824, %v2890
        %2892 = vmatmul.bf16.gmra.mxu0 %v2804
        %v2893 = vpop.f32.mrf.mxu0
        %v2894 = vadd.f32 %v2824, %v2893
        %v2895 = vpop.f32.mrf.mxu0
        %v2896 = vadd.f32 %v2824, %v2895
        %2897 = vmatmul.bf16.gmra.mxu0 %v2805
        %v2898 = vpop.f32.mrf.mxu0
        %v2899 = vadd.f32 %v2824, %v2898
        %v2900 = vpop.f32.mrf.mxu0
        %v2901 = vadd.f32 %v2824, %v2900
        %2902 = vdwg.mxu0
        %2903 = vst [vmem:[%s1533] sm:$0xff] %v2884
        %2904 = vst [vmem:[%s1533 + $0x8] sm:$0xff] %v2886
        %2905 = vst [vmem:[%s1533 + $0x10] sm:$0xff] %v2889
        %2906 = vst [vmem:[%s1533 + $0x18] sm:$0xff] %v2891
        %2907 = vst [vmem:[%s1533 + $0x20] sm:$0xff] %v2894
        %2908 = vst [vmem:[%s1533 + $0x28] sm:$0xff] %v2896
        %2909 = vst [vmem:[%s1533 + $0x30] sm:$0xff] %v2899
        %2910 = vst [vmem:[%s1533 + $0x38] sm:$0xff] %v2901
        %v2911 = vld [vmem:[%s1367] sm:$0xff]
        %v2912 = vld [vmem:[%s1367 + $0x8] sm:$0xff]
        %v2913 = vld [vmem:[%s1367 + $0x10] sm:$0xff]
        %v2914 = vld [vmem:[%s1367 + $0x18] sm:$0xff]
        %v2915 = vld [vmem:[%s1367 + $0x20] sm:$0xff]
        %v2916 = vld [vmem:[%s1367 + $0x28] sm:$0xff]
        %v2917 = vld [vmem:[%s1367 + $0x30] sm:$0xff]
        %v2918 = vld [vmem:[%s1367 + $0x38] sm:$0xff]
        %v2919 = vpack.c.bf16 %v2912, %v2911
        %v2920 = vpack.c.bf16 %v2914, %v2913
        %v2921 = vpack.c.bf16 %v2916, %v2915
        %v2922 = vpack.c.bf16 %v2918, %v2917
        %v2923 = vld [vmem:[#allocation25] sm:$0xf]
        %v2924 = vld [vmem:[#allocation25 + $0x4] sm:$0xf]
        %v2925 = vld [vmem:[#allocation25 + $0x8] sm:$0xf]
        %v2926 = vld [vmem:[#allocation25 + $0xc] sm:$0xf]
        %v2927 = vld [vmem:[#allocation25 + $0x10] sm:$0xf]
        %v2928 = vld [vmem:[#allocation25 + $0x14] sm:$0xf]
        %v2929 = vld [vmem:[#allocation25 + $0x18] sm:$0xf]
        %v2930 = vld [vmem:[#allocation25 + $0x1c] sm:$0xf]
        %v2931 = vld [vmem:[#allocation25 + $0x20] sm:$0xf]
        %v2932 = vld [vmem:[#allocation25 + $0x24] sm:$0xf]
        %v2933 = vld [vmem:[#allocation25 + $0x28] sm:$0xf]
        %v2934 = vld [vmem:[#allocation25 + $0x2c] sm:$0xf]
        %v2935 = vld [vmem:[#allocation25 + $0x30] sm:$0xf]
        %v2936 = vld [vmem:[#allocation25 + $0x34] sm:$0xf]
        %v2937 = vld [vmem:[#allocation25 + $0x38] sm:$0xf]
        %v2938 = vld [vmem:[#allocation25 + $0x3c] sm:$0xf]
        %v2939 = vld [vmem:[%s35] sm:$0x1]
        %v2941 = vperm.slane %v2939, 0
        %v2959 = vunpack.c.l.b16 %v2923
        %v2960 = vunpack.c.l.b16 %v2924
        %v2961 = vunpack.c.l.b16 %v2925
        %v2962 = vunpack.c.l.b16 %v2926
        %v2963 = vunpack.c.l.b16 %v2927
        %v2964 = vunpack.c.l.b16 %v2928
        %v2965 = vunpack.c.l.b16 %v2929
        %v2966 = vunpack.c.l.b16 %v2930
        %v2967 = vunpack.c.l.b16 %v2931
        %v2968 = vunpack.c.l.b16 %v2932
        %v2969 = vunpack.c.l.b16 %v2933
        %v2970 = vunpack.c.l.b16 %v2934
        %v2971 = vunpack.c.l.b16 %v2935
        %v2972 = vunpack.c.l.b16 %v2936
        %v2973 = vunpack.c.l.b16 %v2937
        %v2974 = vunpack.c.l.b16 %v2938
        %v2975 = vpack.c.b16 %v2960, %v2959
        %v2976 = vpack.c.b16 %v2962, %v2961
        %v2977 = vpack.c.b16 %v2964, %v2963
        %v2978 = vpack.c.b16 %v2966, %v2965
        %v2979 = vpack.c.b16 %v2968, %v2967
        %v2980 = vpack.c.b16 %v2970, %v2969
        %v2981 = vpack.c.b16 %v2972, %v2971
        %v2982 = vpack.c.b16 %v2974, %v2973
        %2991 = vmatpush.bf16.msra.mxu0 %v2982
        %2992 = vmatpush.bf16.msra.mxu0 %v2981
        %2993 = vmatpush.bf16.msra.mxu0 %v2980
        %2994 = vmatpush.bf16.msra.mxu0 %v2979
        %2995 = vmatpush.bf16.msra.mxu0 %v2978
        %2996 = vmatpush.bf16.msra.mxu0 %v2977
        %2997 = vmatpush.bf16.msra.mxu0 %v2976
        %2998 = vmatpush.bf16.msra.mxu0 %v2975
        %2999 = vmatmul.bf16.gmra.mxu0 %v2919
        %v3000 = vpop.f32.mrf.mxu0
        %v3001 = vadd.f32 %v2941, %v3000
        %v3002 = vpop.f32.mrf.mxu0
        %v3003 = vadd.f32 %v2941, %v3002
        %3004 = vmatmul.bf16.gmra.mxu0 %v2920
        %v3005 = vpop.f32.mrf.mxu0
        %v3006 = vadd.f32 %v2941, %v3005
        %v3007 = vpop.f32.mrf.mxu0
        %v3008 = vadd.f32 %v2941, %v3007
        %3009 = vmatmul.bf16.gmra.mxu0 %v2921
        %v3010 = vpop.f32.mrf.mxu0
        %v3011 = vadd.f32 %v2941, %v3010
        %v3012 = vpop.f32.mrf.mxu0
        %v3013 = vadd.f32 %v2941, %v3012
        %3014 = vmatmul.bf16.gmra.mxu0 %v2922
        %v3015 = vpop.f32.mrf.mxu0
        %v3016 = vadd.f32 %v2941, %v3015
        %v3017 = vpop.f32.mrf.mxu0
        %v3018 = vadd.f32 %v2941, %v3017
        %3019 = vdwg.mxu0
        %3020 = vst [vmem:[%s1540] sm:$0xff] %v3001
        %3021 = vst [vmem:[%s1540 + $0x8] sm:$0xff] %v3003
        %3022 = vst [vmem:[%s1540 + $0x10] sm:$0xff] %v3006
        %3023 = vst [vmem:[%s1540 + $0x18] sm:$0xff] %v3008
        %3024 = vst [vmem:[%s1540 + $0x20] sm:$0xff] %v3011
        %3025 = vst [vmem:[%s1540 + $0x28] sm:$0xff] %v3013
        %3026 = vst [vmem:[%s1540 + $0x30] sm:$0xff] %v3016
        %3027 = vst [vmem:[%s1540 + $0x38] sm:$0xff] %v3018
        %v3028 = vld [vmem:[%s1317] sm:$0xff]
        %v3029 = vld [vmem:[%s1317 + $0x8] sm:$0xff]
        %v3030 = vld [vmem:[%s1317 + $0x10] sm:$0xff]
        %v3031 = vld [vmem:[%s1317 + $0x18] sm:$0xff]
        %v3032 = vld [vmem:[%s1317 + $0x20] sm:$0xff]
        %v3033 = vld [vmem:[%s1317 + $0x28] sm:$0xff]
        %v3034 = vld [vmem:[%s1317 + $0x30] sm:$0xff]
        %v3035 = vld [vmem:[%s1317 + $0x38] sm:$0xff]
        %v3036 = vpack.c.bf16 %v3029, %v3028
        %v3037 = vpack.c.bf16 %v3031, %v3030
        %v3038 = vpack.c.bf16 %v3033, %v3032
        %v3039 = vpack.c.bf16 %v3035, %v3034
        %v3040 = vld [vmem:[#allocation26] sm:$0xff]
        %v3041 = vld [vmem:[#allocation26 + $0x8] sm:$0xff]
        %v3042 = vld [vmem:[#allocation26 + $0x10] sm:$0xff]
        %v3043 = vld [vmem:[#allocation26 + $0x18] sm:$0xff]
        %v3044 = vld [vmem:[#allocation26 + $0x20] sm:$0xff]
        %v3045 = vld [vmem:[#allocation26 + $0x28] sm:$0xff]
        %v3046 = vld [vmem:[#allocation26 + $0x30] sm:$0xff]
        %v3047 = vld [vmem:[#allocation26 + $0x38] sm:$0xff]
        %v3048 = vld [vmem:[#allocation26 + $0x40] sm:$0xff]
        %v3049 = vld [vmem:[#allocation26 + $0x48] sm:$0xff]
        %v3050 = vld [vmem:[#allocation26 + $0x50] sm:$0xff]
        %v3051 = vld [vmem:[#allocation26 + $0x58] sm:$0xff]
        %v3052 = vld [vmem:[#allocation26 + $0x60] sm:$0xff]
        %v3053 = vld [vmem:[#allocation26 + $0x68] sm:$0xff]
        %v3054 = vld [vmem:[#allocation26 + $0x70] sm:$0xff]
        %v3055 = vld [vmem:[#allocation26 + $0x78] sm:$0xff]
        %v3056 = vld [vmem:[%s39] sm:$0x3]
        %v3058 = vperm.slane %v3056, 0
        %v3059 = vperm.slane %v3056, 1
        %v3078 = vunpack.c.l.b16 %v3040
        %v3079 = vunpack.c.h.b16 %v3040
        %v3080 = vunpack.c.l.b16 %v3041
        %v3081 = vunpack.c.h.b16 %v3041
        %v3082 = vunpack.c.l.b16 %v3042
        %v3083 = vunpack.c.h.b16 %v3042
        %v3084 = vunpack.c.l.b16 %v3043
        %v3085 = vunpack.c.h.b16 %v3043
        %v3086 = vunpack.c.l.b16 %v3044
        %v3087 = vunpack.c.h.b16 %v3044
        %v3088 = vunpack.c.l.b16 %v3045
        %v3089 = vunpack.c.h.b16 %v3045
        %v3090 = vunpack.c.l.b16 %v3046
        %v3091 = vunpack.c.h.b16 %v3046
        %v3092 = vunpack.c.l.b16 %v3047
        %v3093 = vunpack.c.h.b16 %v3047
        %v3094 = vunpack.c.l.b16 %v3048
        %v3095 = vunpack.c.h.b16 %v3048
        %v3096 = vunpack.c.l.b16 %v3049
        %v3097 = vunpack.c.h.b16 %v3049
        %v3098 = vunpack.c.l.b16 %v3050
        %v3099 = vunpack.c.h.b16 %v3050
        %v3100 = vunpack.c.l.b16 %v3051
        %v3101 = vunpack.c.h.b16 %v3051
        %v3102 = vunpack.c.l.b16 %v3052
        %v3103 = vunpack.c.h.b16 %v3052
        %v3104 = vunpack.c.l.b16 %v3053
        %v3105 = vunpack.c.h.b16 %v3053
        %v3106 = vunpack.c.l.b16 %v3054
        %v3107 = vunpack.c.h.b16 %v3054
        %v3108 = vunpack.c.l.b16 %v3055
        %v3109 = vunpack.c.h.b16 %v3055
        %v3110 = vpack.c.b16 %v3080, %v3078
        %v3111 = vpack.c.b16 %v3081, %v3079
        %v3112 = vpack.c.b16 %v3084, %v3082
        %v3113 = vpack.c.b16 %v3085, %v3083
        %v3114 = vpack.c.b16 %v3088, %v3086
        %v3115 = vpack.c.b16 %v3089, %v3087
        %v3116 = vpack.c.b16 %v3092, %v3090
        %v3117 = vpack.c.b16 %v3093, %v3091
        %v3118 = vpack.c.b16 %v3096, %v3094
        %v3119 = vpack.c.b16 %v3097, %v3095
        %v3120 = vpack.c.b16 %v3100, %v3098
        %v3121 = vpack.c.b16 %v3101, %v3099
        %v3122 = vpack.c.b16 %v3104, %v3102
        %v3123 = vpack.c.b16 %v3105, %v3103
        %v3124 = vpack.c.b16 %v3108, %v3106
        %v3125 = vpack.c.b16 %v3109, %v3107
        %3142 = vmatpush.bf16.msra.mxu0 %v3124
        %3143 = vmatpush.bf16.msra.mxu0 %v3122
        %3144 = vmatpush.bf16.msra.mxu0 %v3120
        %3145 = vmatpush.bf16.msra.mxu0 %v3118
        %3146 = vmatpush.bf16.msra.mxu0 %v3116
        %3147 = vmatpush.bf16.msra.mxu0 %v3114
        %3148 = vmatpush.bf16.msra.mxu0 %v3112
        %3149 = vmatpush.bf16.msra.mxu0 %v3110
        %3150 = vmatmul.bf16.gmra.mxu0 %v3036
        %v3151 = vpop.f32.mrf.mxu0
        %v3152 = vadd.f32 %v3058, %v3151
        %v3153 = vpop.f32.mrf.mxu0
        %v3154 = vadd.f32 %v3058, %v3153
        %3155 = vmatmul.bf16.gmra.mxu0 %v3037
        %v3156 = vpop.f32.mrf.mxu0
        %v3157 = vadd.f32 %v3058, %v3156
        %v3158 = vpop.f32.mrf.mxu0
        %v3159 = vadd.f32 %v3058, %v3158
        %3160 = vmatmul.bf16.gmra.mxu0 %v3038
        %v3161 = vpop.f32.mrf.mxu0
        %v3162 = vadd.f32 %v3058, %v3161
        %v3163 = vpop.f32.mrf.mxu0
        %v3164 = vadd.f32 %v3058, %v3163
        %3165 = vmatmul.bf16.gmra.mxu0 %v3039
        %v3166 = vpop.f32.mrf.mxu0
        %v3167 = vadd.f32 %v3058, %v3166
        %v3168 = vpop.f32.mrf.mxu0
        %v3169 = vadd.f32 %v3058, %v3168
        %3170 = vdwg.mxu0
        %3171 = vmatpush.bf16.msra.mxu0 %v3125
        %3172 = vmatpush.bf16.msra.mxu0 %v3123
        %3173 = vmatpush.bf16.msra.mxu0 %v3121
        %3174 = vmatpush.bf16.msra.mxu0 %v3119
        %3175 = vmatpush.bf16.msra.mxu0 %v3117
        %3176 = vmatpush.bf16.msra.mxu0 %v3115
        %3177 = vmatpush.bf16.msra.mxu0 %v3113
        %3178 = vmatpush.bf16.msra.mxu0 %v3111
        %3179 = vmatmul.bf16.gmra.mxu0 %v3036
        %v3180 = vpop.f32.mrf.mxu0
        %v3181 = vadd.f32 %v3059, %v3180
        %v3182 = vpop.f32.mrf.mxu0
        %v3183 = vadd.f32 %v3059, %v3182
        %3184 = vmatmul.bf16.gmra.mxu0 %v3037
        %v3185 = vpop.f32.mrf.mxu0
        %v3186 = vadd.f32 %v3059, %v3185
        %v3187 = vpop.f32.mrf.mxu0
        %v3188 = vadd.f32 %v3059, %v3187
        %3189 = vmatmul.bf16.gmra.mxu0 %v3038
        %v3190 = vpop.f32.mrf.mxu0
        %v3191 = vadd.f32 %v3059, %v3190
        %v3192 = vpop.f32.mrf.mxu0
        %v3193 = vadd.f32 %v3059, %v3192
        %3194 = vmatmul.bf16.gmra.mxu0 %v3039
        %v3195 = vpop.f32.mrf.mxu0
        %v3196 = vadd.f32 %v3059, %v3195
        %v3197 = vpop.f32.mrf.mxu0
        %v3198 = vadd.f32 %v3059, %v3197
        %3199 = vdwg.mxu0
        %3200 = vst [vmem:[%s1547] sm:$0xff] %v3152
        %3201 = vst [vmem:[%s1547 + $0x8] sm:$0xff] %v3181
        %3202 = vst [vmem:[%s1547 + $0x10] sm:$0xff] %v3154
        %3203 = vst [vmem:[%s1547 + $0x18] sm:$0xff] %v3183
        %3204 = vst [vmem:[%s1547 + $0x20] sm:$0xff] %v3157
        %3205 = vst [vmem:[%s1547 + $0x28] sm:$0xff] %v3186
        %3206 = vst [vmem:[%s1547 + $0x30] sm:$0xff] %v3159
        %3207 = vst [vmem:[%s1547 + $0x38] sm:$0xff] %v3188
        %3208 = vst [vmem:[%s1547 + $0x40] sm:$0xff] %v3162
        %3209 = vst [vmem:[%s1547 + $0x48] sm:$0xff] %v3191
        %3210 = vst [vmem:[%s1547 + $0x50] sm:$0xff] %v3164
        %3211 = vst [vmem:[%s1547 + $0x58] sm:$0xff] %v3193
        %3212 = vst [vmem:[%s1547 + $0x60] sm:$0xff] %v3167
        %3213 = vst [vmem:[%s1547 + $0x68] sm:$0xff] %v3196
        %3214 = vst [vmem:[%s1547 + $0x70] sm:$0xff] %v3169
        %3215 = vst [vmem:[%s1547 + $0x78] sm:$0xff] %v3198
        %v3216 = vld [vmem:[%s1327] sm:$0xff]
        %v3217 = vld [vmem:[%s1327 + $0x8] sm:$0xff]
        %v3218 = vld [vmem:[%s1327 + $0x10] sm:$0xff]
        %v3219 = vld [vmem:[%s1327 + $0x18] sm:$0xff]
        %v3220 = vld [vmem:[%s1327 + $0x20] sm:$0xff]
        %v3221 = vld [vmem:[%s1327 + $0x28] sm:$0xff]
        %v3222 = vld [vmem:[%s1327 + $0x30] sm:$0xff]
        %v3223 = vld [vmem:[%s1327 + $0x38] sm:$0xff]
        %v3224 = vpack.c.bf16 %v3217, %v3216
        %v3225 = vpack.c.bf16 %v3219, %v3218
        %v3226 = vpack.c.bf16 %v3221, %v3220
        %v3227 = vpack.c.bf16 %v3223, %v3222
        %v3228 = vld [vmem:[#allocation28] sm:$0xff]
        %v3229 = vld [vmem:[#allocation28 + $0x8] sm:$0xff]
        %v3230 = vld [vmem:[#allocation28 + $0x10] sm:$0xff]
        %v3231 = vld [vmem:[#allocation28 + $0x18] sm:$0xff]
        %v3232 = vld [vmem:[#allocation28 + $0x20] sm:$0xff]
        %v3233 = vld [vmem:[#allocation28 + $0x28] sm:$0xff]
        %v3234 = vld [vmem:[#allocation28 + $0x30] sm:$0xff]
        %v3235 = vld [vmem:[#allocation28 + $0x38] sm:$0xff]
        %v3236 = vld [vmem:[#allocation28 + $0x40] sm:$0xff]
        %v3237 = vld [vmem:[#allocation28 + $0x48] sm:$0xff]
        %v3238 = vld [vmem:[#allocation28 + $0x50] sm:$0xff]
        %v3239 = vld [vmem:[#allocation28 + $0x58] sm:$0xff]
        %v3240 = vld [vmem:[#allocation28 + $0x60] sm:$0xff]
        %v3241 = vld [vmem:[#allocation28 + $0x68] sm:$0xff]
        %v3242 = vld [vmem:[#allocation28 + $0x70] sm:$0xff]
        %v3243 = vld [vmem:[#allocation28 + $0x78] sm:$0xff]
        %v3244 = vld [vmem:[%s43] sm:$0x3]
        %v3246 = vperm.slane %v3244, 0
        %v3247 = vperm.slane %v3244, 1
        %v3266 = vunpack.c.l.b16 %v3228
        %v3267 = vunpack.c.h.b16 %v3228
        %v3268 = vunpack.c.l.b16 %v3229
        %v3269 = vunpack.c.h.b16 %v3229
        %v3270 = vunpack.c.l.b16 %v3230
        %v3271 = vunpack.c.h.b16 %v3230
        %v3272 = vunpack.c.l.b16 %v3231
        %v3273 = vunpack.c.h.b16 %v3231
        %v3274 = vunpack.c.l.b16 %v3232
        %v3275 = vunpack.c.h.b16 %v3232
        %v3276 = vunpack.c.l.b16 %v3233
        %v3277 = vunpack.c.h.b16 %v3233
        %v3278 = vunpack.c.l.b16 %v3234
        %v3279 = vunpack.c.h.b16 %v3234
        %v3280 = vunpack.c.l.b16 %v3235
        %v3281 = vunpack.c.h.b16 %v3235
        %v3282 = vunpack.c.l.b16 %v3236
        %v3283 = vunpack.c.h.b16 %v3236
        %v3284 = vunpack.c.l.b16 %v3237
        %v3285 = vunpack.c.h.b16 %v3237
        %v3286 = vunpack.c.l.b16 %v3238
        %v3287 = vunpack.c.h.b16 %v3238
        %v3288 = vunpack.c.l.b16 %v3239
        %v3289 = vunpack.c.h.b16 %v3239
        %v3290 = vunpack.c.l.b16 %v3240
        %v3291 = vunpack.c.h.b16 %v3240
        %v3292 = vunpack.c.l.b16 %v3241
        %v3293 = vunpack.c.h.b16 %v3241
        %v3294 = vunpack.c.l.b16 %v3242
        %v3295 = vunpack.c.h.b16 %v3242
        %v3296 = vunpack.c.l.b16 %v3243
        %v3297 = vunpack.c.h.b16 %v3243
        %v3298 = vpack.c.b16 %v3268, %v3266
        %v3299 = vpack.c.b16 %v3269, %v3267
        %v3300 = vpack.c.b16 %v3272, %v3270
        %v3301 = vpack.c.b16 %v3273, %v3271
        %v3302 = vpack.c.b16 %v3276, %v3274
        %v3303 = vpack.c.b16 %v3277, %v3275
        %v3304 = vpack.c.b16 %v3280, %v3278
        %v3305 = vpack.c.b16 %v3281, %v3279
        %v3306 = vpack.c.b16 %v3284, %v3282
        %v3307 = vpack.c.b16 %v3285, %v3283
        %v3308 = vpack.c.b16 %v3288, %v3286
        %v3309 = vpack.c.b16 %v3289, %v3287
        %v3310 = vpack.c.b16 %v3292, %v3290
        %v3311 = vpack.c.b16 %v3293, %v3291
        %v3312 = vpack.c.b16 %v3296, %v3294
        %v3313 = vpack.c.b16 %v3297, %v3295
        %3330 = vmatpush.bf16.msra.mxu0 %v3312
        %3331 = vmatpush.bf16.msra.mxu0 %v3310
        %3332 = vmatpush.bf16.msra.mxu0 %v3308
        %3333 = vmatpush.bf16.msra.mxu0 %v3306
        %3334 = vmatpush.bf16.msra.mxu0 %v3304
        %3335 = vmatpush.bf16.msra.mxu0 %v3302
        %3336 = vmatpush.bf16.msra.mxu0 %v3300
        %3337 = vmatpush.bf16.msra.mxu0 %v3298
        %3338 = vmatmul.bf16.gmra.mxu0 %v3224
        %v3339 = vpop.f32.mrf.mxu0
        %v3340 = vadd.f32 %v3246, %v3339
        %v3341 = vpop.f32.mrf.mxu0
        %v3342 = vadd.f32 %v3246, %v3341
        %3343 = vmatmul.bf16.gmra.mxu0 %v3225
        %v3344 = vpop.f32.mrf.mxu0
        %v3345 = vadd.f32 %v3246, %v3344
        %v3346 = vpop.f32.mrf.mxu0
        %v3347 = vadd.f32 %v3246, %v3346
        %3348 = vmatmul.bf16.gmra.mxu0 %v3226
        %v3349 = vpop.f32.mrf.mxu0
        %v3350 = vadd.f32 %v3246, %v3349
        %v3351 = vpop.f32.mrf.mxu0
        %v3352 = vadd.f32 %v3246, %v3351
        %3353 = vmatmul.bf16.gmra.mxu0 %v3227
        %v3354 = vpop.f32.mrf.mxu0
        %v3355 = vadd.f32 %v3246, %v3354
        %v3356 = vpop.f32.mrf.mxu0
        %v3357 = vadd.f32 %v3246, %v3356
        %3358 = vdwg.mxu0
        %3359 = vmatpush.bf16.msra.mxu0 %v3313
        %3360 = vmatpush.bf16.msra.mxu0 %v3311
        %3361 = vmatpush.bf16.msra.mxu0 %v3309
        %3362 = vmatpush.bf16.msra.mxu0 %v3307
        %3363 = vmatpush.bf16.msra.mxu0 %v3305
        %3364 = vmatpush.bf16.msra.mxu0 %v3303
        %3365 = vmatpush.bf16.msra.mxu0 %v3301
        %3366 = vmatpush.bf16.msra.mxu0 %v3299
        %3367 = vmatmul.bf16.gmra.mxu0 %v3224
        %v3368 = vpop.f32.mrf.mxu0
        %v3369 = vadd.f32 %v3247, %v3368
        %v3370 = vpop.f32.mrf.mxu0
        %v3371 = vadd.f32 %v3247, %v3370
        %3372 = vmatmul.bf16.gmra.mxu0 %v3225
        %v3373 = vpop.f32.mrf.mxu0
        %v3374 = vadd.f32 %v3247, %v3373
        %v3375 = vpop.f32.mrf.mxu0
        %v3376 = vadd.f32 %v3247, %v3375
        %3377 = vmatmul.bf16.gmra.mxu0 %v3226
        %v3378 = vpop.f32.mrf.mxu0
        %v3379 = vadd.f32 %v3247, %v3378
        %v3380 = vpop.f32.mrf.mxu0
        %v3381 = vadd.f32 %v3247, %v3380
        %3382 = vmatmul.bf16.gmra.mxu0 %v3227
        %v3383 = vpop.f32.mrf.mxu0
        %v3384 = vadd.f32 %v3247, %v3383
        %v3385 = vpop.f32.mrf.mxu0
        %v3386 = vadd.f32 %v3247, %v3385
        %3387 = vdwg.mxu0
        %3388 = vst [vmem:[%s1554] sm:$0xff] %v3340
        %3389 = vst [vmem:[%s1554 + $0x8] sm:$0xff] %v3369
        %3390 = vst [vmem:[%s1554 + $0x10] sm:$0xff] %v3342
        %3391 = vst [vmem:[%s1554 + $0x18] sm:$0xff] %v3371
        %3392 = vst [vmem:[%s1554 + $0x20] sm:$0xff] %v3345
        %3393 = vst [vmem:[%s1554 + $0x28] sm:$0xff] %v3374
        %3394 = vst [vmem:[%s1554 + $0x30] sm:$0xff] %v3347
        %3395 = vst [vmem:[%s1554 + $0x38] sm:$0xff] %v3376
        %3396 = vst [vmem:[%s1554 + $0x40] sm:$0xff] %v3350
        %3397 = vst [vmem:[%s1554 + $0x48] sm:$0xff] %v3379
        %3398 = vst [vmem:[%s1554 + $0x50] sm:$0xff] %v3352
        %3399 = vst [vmem:[%s1554 + $0x58] sm:$0xff] %v3381
        %3400 = vst [vmem:[%s1554 + $0x60] sm:$0xff] %v3355
        %3401 = vst [vmem:[%s1554 + $0x68] sm:$0xff] %v3384
        %3402 = vst [vmem:[%s1554 + $0x70] sm:$0xff] %v3357
        %3403 = vst [vmem:[%s1554 + $0x78] sm:$0xff] %v3386
        %v3404 = vld [vmem:[%s1357] sm:$0xff]
        %v3405 = vld [vmem:[%s1357 + $0x8] sm:$0xff]
        %v3406 = vld [vmem:[%s1357 + $0x10] sm:$0xff]
        %v3407 = vld [vmem:[%s1357 + $0x18] sm:$0xff]
        %v3408 = vld [vmem:[%s1357 + $0x20] sm:$0xff]
        %v3409 = vld [vmem:[%s1357 + $0x28] sm:$0xff]
        %v3410 = vld [vmem:[%s1357 + $0x30] sm:$0xff]
        %v3411 = vld [vmem:[%s1357 + $0x38] sm:$0xff]
        %v3412 = vpack.c.bf16 %v3405, %v3404
        %v3413 = vpack.c.bf16 %v3407, %v3406
        %v3414 = vpack.c.bf16 %v3409, %v3408
        %v3415 = vpack.c.bf16 %v3411, %v3410
        %v3416 = vld [vmem:[#allocation29] sm:$0xff]
        %v3417 = vld [vmem:[#allocation29 + $0x8] sm:$0xff]
        %v3418 = vld [vmem:[#allocation29 + $0x10] sm:$0xff]
        %v3419 = vld [vmem:[#allocation29 + $0x18] sm:$0xff]
        %v3420 = vld [vmem:[#allocation29 + $0x20] sm:$0xff]
        %v3421 = vld [vmem:[#allocation29 + $0x28] sm:$0xff]
        %v3422 = vld [vmem:[#allocation29 + $0x30] sm:$0xff]
        %v3423 = vld [vmem:[#allocation29 + $0x38] sm:$0xff]
        %v3424 = vld [vmem:[#allocation29 + $0x40] sm:$0xff]
        %v3425 = vld [vmem:[#allocation29 + $0x48] sm:$0xff]
        %v3426 = vld [vmem:[#allocation29 + $0x50] sm:$0xff]
        %v3427 = vld [vmem:[#allocation29 + $0x58] sm:$0xff]
        %v3428 = vld [vmem:[#allocation29 + $0x60] sm:$0xff]
        %v3429 = vld [vmem:[#allocation29 + $0x68] sm:$0xff]
        %v3430 = vld [vmem:[#allocation29 + $0x70] sm:$0xff]
        %v3431 = vld [vmem:[#allocation29 + $0x78] sm:$0xff]
        %v3432 = vld [vmem:[%s47] sm:$0x3]
        %v3434 = vperm.slane %v3432, 0
        %v3435 = vperm.slane %v3432, 1
        %v3454 = vunpack.c.l.b16 %v3416
        %v3455 = vunpack.c.h.b16 %v3416
        %v3456 = vunpack.c.l.b16 %v3417
        %v3457 = vunpack.c.h.b16 %v3417
        %v3458 = vunpack.c.l.b16 %v3418
        %v3459 = vunpack.c.h.b16 %v3418
        %v3460 = vunpack.c.l.b16 %v3419
        %v3461 = vunpack.c.h.b16 %v3419
        %v3462 = vunpack.c.l.b16 %v3420
        %v3463 = vunpack.c.h.b16 %v3420
        %v3464 = vunpack.c.l.b16 %v3421
        %v3465 = vunpack.c.h.b16 %v3421
        %v3466 = vunpack.c.l.b16 %v3422
        %v3467 = vunpack.c.h.b16 %v3422
        %v3468 = vunpack.c.l.b16 %v3423
        %v3469 = vunpack.c.h.b16 %v3423
        %v3470 = vunpack.c.l.b16 %v3424
        %v3471 = vunpack.c.h.b16 %v3424
        %v3472 = vunpack.c.l.b16 %v3425
        %v3473 = vunpack.c.h.b16 %v3425
        %v3474 = vunpack.c.l.b16 %v3426
        %v3475 = vunpack.c.h.b16 %v3426
        %v3476 = vunpack.c.l.b16 %v3427
        %v3477 = vunpack.c.h.b16 %v3427
        %v3478 = vunpack.c.l.b16 %v3428
        %v3479 = vunpack.c.h.b16 %v3428
        %v3480 = vunpack.c.l.b16 %v3429
        %v3481 = vunpack.c.h.b16 %v3429
        %v3482 = vunpack.c.l.b16 %v3430
        %v3483 = vunpack.c.h.b16 %v3430
        %v3484 = vunpack.c.l.b16 %v3431
        %v3485 = vunpack.c.h.b16 %v3431
        %v3486 = vpack.c.b16 %v3456, %v3454
        %v3487 = vpack.c.b16 %v3457, %v3455
        %v3488 = vpack.c.b16 %v3460, %v3458
        %v3489 = vpack.c.b16 %v3461, %v3459
        %v3490 = vpack.c.b16 %v3464, %v3462
        %v3491 = vpack.c.b16 %v3465, %v3463
        %v3492 = vpack.c.b16 %v3468, %v3466
        %v3493 = vpack.c.b16 %v3469, %v3467
        %v3494 = vpack.c.b16 %v3472, %v3470
        %v3495 = vpack.c.b16 %v3473, %v3471
        %v3496 = vpack.c.b16 %v3476, %v3474
        %v3497 = vpack.c.b16 %v3477, %v3475
        %v3498 = vpack.c.b16 %v3480, %v3478
        %v3499 = vpack.c.b16 %v3481, %v3479
        %v3500 = vpack.c.b16 %v3484, %v3482
        %v3501 = vpack.c.b16 %v3485, %v3483
        %3518 = vmatpush.bf16.msra.mxu0 %v3500
        %3519 = vmatpush.bf16.msra.mxu0 %v3498
        %3520 = vmatpush.bf16.msra.mxu0 %v3496
        %3521 = vmatpush.bf16.msra.mxu0 %v3494
        %3522 = vmatpush.bf16.msra.mxu0 %v3492
        %3523 = vmatpush.bf16.msra.mxu0 %v3490
        %3524 = vmatpush.bf16.msra.mxu0 %v3488
        %3525 = vmatpush.bf16.msra.mxu0 %v3486
        %3526 = vmatmul.bf16.gmra.mxu0 %v3412
        %v3527 = vpop.f32.mrf.mxu0
        %v3528 = vadd.f32 %v3434, %v3527
        %v3529 = vpop.f32.mrf.mxu0
        %v3530 = vadd.f32 %v3434, %v3529
        %3531 = vmatmul.bf16.gmra.mxu0 %v3413
        %v3532 = vpop.f32.mrf.mxu0
        %v3533 = vadd.f32 %v3434, %v3532
        %v3534 = vpop.f32.mrf.mxu0
        %v3535 = vadd.f32 %v3434, %v3534
        %3536 = vmatmul.bf16.gmra.mxu0 %v3414
        %v3537 = vpop.f32.mrf.mxu0
        %v3538 = vadd.f32 %v3434, %v3537
        %v3539 = vpop.f32.mrf.mxu0
        %v3540 = vadd.f32 %v3434, %v3539
        %3541 = vmatmul.bf16.gmra.mxu0 %v3415
        %v3542 = vpop.f32.mrf.mxu0
        %v3543 = vadd.f32 %v3434, %v3542
        %v3544 = vpop.f32.mrf.mxu0
        %v3545 = vadd.f32 %v3434, %v3544
        %3546 = vdwg.mxu0
        %3547 = vmatpush.bf16.msra.mxu0 %v3501
        %3548 = vmatpush.bf16.msra.mxu0 %v3499
        %3549 = vmatpush.bf16.msra.mxu0 %v3497
        %3550 = vmatpush.bf16.msra.mxu0 %v3495
        %3551 = vmatpush.bf16.msra.mxu0 %v3493
        %3552 = vmatpush.bf16.msra.mxu0 %v3491
        %3553 = vmatpush.bf16.msra.mxu0 %v3489
        %3554 = vmatpush.bf16.msra.mxu0 %v3487
        %3555 = vmatmul.bf16.gmra.mxu0 %v3412
        %v3556 = vpop.f32.mrf.mxu0
        %v3557 = vadd.f32 %v3435, %v3556
        %v3558 = vpop.f32.mrf.mxu0
        %v3559 = vadd.f32 %v3435, %v3558
        %3560 = vmatmul.bf16.gmra.mxu0 %v3413
        %v3561 = vpop.f32.mrf.mxu0
        %v3562 = vadd.f32 %v3435, %v3561
        %v3563 = vpop.f32.mrf.mxu0
        %v3564 = vadd.f32 %v3435, %v3563
        %3565 = vmatmul.bf16.gmra.mxu0 %v3414
        %v3566 = vpop.f32.mrf.mxu0
        %v3567 = vadd.f32 %v3435, %v3566
        %v3568 = vpop.f32.mrf.mxu0
        %v3569 = vadd.f32 %v3435, %v3568
        %3570 = vmatmul.bf16.gmra.mxu0 %v3415
        %v3571 = vpop.f32.mrf.mxu0
        %v3572 = vadd.f32 %v3435, %v3571
        %v3573 = vpop.f32.mrf.mxu0
        %v3574 = vadd.f32 %v3435, %v3573
        %3575 = vdwg.mxu0
        %3576 = vst [vmem:[%s1561] sm:$0xff] %v3528
        %3577 = vst [vmem:[%s1561 + $0x8] sm:$0xff] %v3557
        %3578 = vst [vmem:[%s1561 + $0x10] sm:$0xff] %v3530
        %3579 = vst [vmem:[%s1561 + $0x18] sm:$0xff] %v3559
        %3580 = vst [vmem:[%s1561 + $0x20] sm:$0xff] %v3533
        %3581 = vst [vmem:[%s1561 + $0x28] sm:$0xff] %v3562
        %3582 = vst [vmem:[%s1561 + $0x30] sm:$0xff] %v3535
        %3583 = vst [vmem:[%s1561 + $0x38] sm:$0xff] %v3564
        %3584 = vst [vmem:[%s1561 + $0x40] sm:$0xff] %v3538
        %3585 = vst [vmem:[%s1561 + $0x48] sm:$0xff] %v3567
        %3586 = vst [vmem:[%s1561 + $0x50] sm:$0xff] %v3540
        %3587 = vst [vmem:[%s1561 + $0x58] sm:$0xff] %v3569
        %3588 = vst [vmem:[%s1561 + $0x60] sm:$0xff] %v3543
        %3589 = vst [vmem:[%s1561 + $0x68] sm:$0xff] %v3572
        %3590 = vst [vmem:[%s1561 + $0x70] sm:$0xff] %v3545
        %3591 = vst [vmem:[%s1561 + $0x78] sm:$0xff] %v3574
        %v3592 = vld [vmem:[%s1347] sm:$0xff]
        %v3593 = vld [vmem:[%s1347 + $0x8] sm:$0xff]
        %v3594 = vld [vmem:[%s1347 + $0x10] sm:$0xff]
        %v3595 = vld [vmem:[%s1347 + $0x18] sm:$0xff]
        %v3596 = vld [vmem:[%s1347 + $0x20] sm:$0xff]
        %v3597 = vld [vmem:[%s1347 + $0x28] sm:$0xff]
        %v3598 = vld [vmem:[%s1347 + $0x30] sm:$0xff]
        %v3599 = vld [vmem:[%s1347 + $0x38] sm:$0xff]
        %v3600 = vpack.c.bf16 %v3593, %v3592
        %v3601 = vpack.c.bf16 %v3595, %v3594
        %v3602 = vpack.c.bf16 %v3597, %v3596
        %v3603 = vpack.c.bf16 %v3599, %v3598
        %v3604 = vld [vmem:[#allocation31] sm:$0xf]
        %v3605 = vld [vmem:[#allocation31 + $0x4] sm:$0xf]
        %v3606 = vld [vmem:[#allocation31 + $0x8] sm:$0xf]
        %v3607 = vld [vmem:[#allocation31 + $0xc] sm:$0xf]
        %v3608 = vld [vmem:[#allocation31 + $0x10] sm:$0xf]
        %v3609 = vld [vmem:[#allocation31 + $0x14] sm:$0xf]
        %v3610 = vld [vmem:[#allocation31 + $0x18] sm:$0xf]
        %v3611 = vld [vmem:[#allocation31 + $0x1c] sm:$0xf]
        %v3612 = vld [vmem:[#allocation31 + $0x20] sm:$0xf]
        %v3613 = vld [vmem:[#allocation31 + $0x24] sm:$0xf]
        %v3614 = vld [vmem:[#allocation31 + $0x28] sm:$0xf]
        %v3615 = vld [vmem:[#allocation31 + $0x2c] sm:$0xf]
        %v3616 = vld [vmem:[#allocation31 + $0x30] sm:$0xf]
        %v3617 = vld [vmem:[#allocation31 + $0x34] sm:$0xf]
        %v3618 = vld [vmem:[#allocation31 + $0x38] sm:$0xf]
        %v3619 = vld [vmem:[#allocation31 + $0x3c] sm:$0xf]
        %v3620 = vld [vmem:[%s51] sm:$0x1]
        %v3622 = vperm.slane %v3620, 0
        %v3640 = vunpack.c.l.b16 %v3604
        %v3641 = vunpack.c.l.b16 %v3605
        %v3642 = vunpack.c.l.b16 %v3606
        %v3643 = vunpack.c.l.b16 %v3607
        %v3644 = vunpack.c.l.b16 %v3608
        %v3645 = vunpack.c.l.b16 %v3609
        %v3646 = vunpack.c.l.b16 %v3610
        %v3647 = vunpack.c.l.b16 %v3611
        %v3648 = vunpack.c.l.b16 %v3612
        %v3649 = vunpack.c.l.b16 %v3613
        %v3650 = vunpack.c.l.b16 %v3614
        %v3651 = vunpack.c.l.b16 %v3615
        %v3652 = vunpack.c.l.b16 %v3616
        %v3653 = vunpack.c.l.b16 %v3617
        %v3654 = vunpack.c.l.b16 %v3618
        %v3655 = vunpack.c.l.b16 %v3619
        %v3656 = vpack.c.b16 %v3641, %v3640
        %v3657 = vpack.c.b16 %v3643, %v3642
        %v3658 = vpack.c.b16 %v3645, %v3644
        %v3659 = vpack.c.b16 %v3647, %v3646
        %v3660 = vpack.c.b16 %v3649, %v3648
        %v3661 = vpack.c.b16 %v3651, %v3650
        %v3662 = vpack.c.b16 %v3653, %v3652
        %v3663 = vpack.c.b16 %v3655, %v3654
        %3672 = vmatpush.bf16.msra.mxu0 %v3663
        %3673 = vmatpush.bf16.msra.mxu0 %v3662
        %3674 = vmatpush.bf16.msra.mxu0 %v3661
        %3675 = vmatpush.bf16.msra.mxu0 %v3660
        %3676 = vmatpush.bf16.msra.mxu0 %v3659
        %3677 = vmatpush.bf16.msra.mxu0 %v3658
        %3678 = vmatpush.bf16.msra.mxu0 %v3657
        %3679 = vmatpush.bf16.msra.mxu0 %v3656
        %3680 = vmatmul.bf16.gmra.mxu0 %v3600
        %v3681 = vpop.f32.mrf.mxu0
        %v3682 = vadd.f32 %v3622, %v3681
        %v3683 = vpop.f32.mrf.mxu0
        %v3684 = vadd.f32 %v3622, %v3683
        %3685 = vmatmul.bf16.gmra.mxu0 %v3601
        %v3686 = vpop.f32.mrf.mxu0
        %v3687 = vadd.f32 %v3622, %v3686
        %v3688 = vpop.f32.mrf.mxu0
        %v3689 = vadd.f32 %v3622, %v3688
        %3690 = vmatmul.bf16.gmra.mxu0 %v3602
        %v3691 = vpop.f32.mrf.mxu0
        %v3692 = vadd.f32 %v3622, %v3691
        %v3693 = vpop.f32.mrf.mxu0
        %v3694 = vadd.f32 %v3622, %v3693
        %3695 = vmatmul.bf16.gmra.mxu0 %v3603
        %v3696 = vpop.f32.mrf.mxu0
        %v3697 = vadd.f32 %v3622, %v3696
        %v3698 = vpop.f32.mrf.mxu0
        %v3699 = vadd.f32 %v3622, %v3698
        %3700 = vdwg.mxu0
        %3701 = vst [vmem:[%s1568] sm:$0xff] %v3682
        %3702 = vst [vmem:[%s1568 + $0x8] sm:$0xff] %v3684
        %3703 = vst [vmem:[%s1568 + $0x10] sm:$0xff] %v3687
        %3704 = vst [vmem:[%s1568 + $0x18] sm:$0xff] %v3689
        %3705 = vst [vmem:[%s1568 + $0x20] sm:$0xff] %v3692
        %3706 = vst [vmem:[%s1568 + $0x28] sm:$0xff] %v3694
        %3707 = vst [vmem:[%s1568 + $0x30] sm:$0xff] %v3697
        %3708 = vst [vmem:[%s1568 + $0x38] sm:$0xff] %v3699
        %s3709 = sand.u32 %s715, 1
        %s3710 = scalar_lea.sflag [#allocation4], %s3709
        %s3711 = sand.u32 %s715, 1
        %s3712 = smul.addr %s3711, 64
        %s3713 = scalar_lea.vmem [#allocation32], %s3712
        %s3714 = sand.u32 %s111, 1
        %s3715 = scalar_lea.sflag [#allocation34], %s3714
        %s3716 = sand.u32 %s741, 1
        %s3717 = smul.addr %s3716, 64
        %s3718 = scalar_lea.vmem [#allocation33], %s3717
        %s3719 = sand.u32 %s111, 1
        %s3720 = scalar_lea.sflag [#allocation34], %s3719
        %s3721 = sand.u32 %s767, 1
        %s3722 = smul.addr %s3721, 64
        %s3723 = scalar_lea.vmem [#allocation35], %s3722
        %s3724 = sand.u32 %s111, 1
        %s3725 = scalar_lea.sflag [#allocation37], %s3724
        %s3726 = sand.u32 %s793, 1
        %s3727 = smul.addr %s3726, 128
        %s3728 = scalar_lea.vmem [#allocation36], %s3727
        %s3729 = sand.u32 %s111, 1
        %s3730 = scalar_lea.sflag [#allocation37], %s3729
        %s3731 = sand.u32 %s819, 1
        %s3732 = smul.addr %s3731, 128
        %s3733 = scalar_lea.vmem [#allocation38], %s3732
        %s3734 = sand.u32 %s111, 1
        %s3735 = scalar_lea.sflag [#allocation40], %s3734
        %s3736 = sand.u32 %s845, 1
        %s3737 = smul.addr %s3736, 128
        %s3738 = scalar_lea.vmem [#allocation39], %s3737
        %s3739 = sand.u32 %s111, 1
        %s3740 = scalar_lea.sflag [#allocation40], %s3739
        %s3741 = sand.u32 %s871, 1
        %s3742 = smul.addr %s3741, 64
        %s3743 = scalar_lea.vmem [#allocation41], %s3742
        // Predicated region
        $region201: #{tpu_custom_call.1} parent=123 // pred_check
          %p3744 = pneg %p725
        $region202: #{tpu_custom_call.1} parent=123 // pred_check_branch
          %3746 = sbr.rel (%p3744) target = $region204
        $region203: #{tpu_custom_call.1} parent=123 // pred_region
          %s3747 = smul.u32 8, %s111
          %3749 = vsyncadd %s3710, 0
          %s3750 = smul.addr %s3747, 8
          %s3751 = scalar_lea.hbm %s53, %s3750
          %s3752 = sshll.u32 %s3713, 4
          %s3753 = int_to_ptr.vmem [resolvable:$true] %s3752
          %s3754 = sshll.u32 %s3751, 4
          %s3755 = int_to_ptr.hbm [resolvable:$true] %s3754
          %3760 = dma.vmem_to_hbm [thread:$0]  %s3753, 1024, %s3755, %s3710, 128, 128, 8
        $region204: #{tpu_custom_call.1} parent=123 // pred_fallthru
          _
        // Predicated region
        $region205: #{tpu_custom_call.1} parent=123 // pred_check
          %p3761 = pneg %p751
        $region206: #{tpu_custom_call.1} parent=123 // pred_check_branch
          %3763 = sbr.rel (%p3761) target = $region208
        $region207: #{tpu_custom_call.1} parent=123 // pred_region
          %s3764 = smul.u32 8, %s111
          %3766 = vsyncadd %s3715, 0
          %s3767 = smul.addr %s3764, 8
          %s3768 = scalar_lea.hbm %s55, %s3767
          %s3769 = sshll.u32 %s3718, 4
          %s3770 = int_to_ptr.vmem [resolvable:$true] %s3769
          %s3771 = sshll.u32 %s3768, 4
          %s3772 = int_to_ptr.hbm [resolvable:$true] %s3771
          %3777 = dma.vmem_to_hbm [thread:$0]  %s3770, 1024, %s3772, %s3715, 128, 128, 8
        $region208: #{tpu_custom_call.1} parent=123 // pred_fallthru
          _
        // Predicated region
        $region209: #{tpu_custom_call.1} parent=123 // pred_check
          %p3778 = pneg %p777
        $region210: #{tpu_custom_call.1} parent=123 // pred_check_branch
          %3780 = sbr.rel (%p3778) target = $region212
        $region211: #{tpu_custom_call.1} parent=123 // pred_region
          %s3781 = smul.u32 8, %s111
          %3783 = vsyncadd %s3720, 0
          %s3784 = smul.addr %s3781, 8
          %s3785 = scalar_lea.hbm %s57, %s3784
          %s3786 = sshll.u32 %s3723, 4
          %s3787 = int_to_ptr.vmem [resolvable:$true] %s3786
          %s3788 = sshll.u32 %s3785, 4
          %s3789 = int_to_ptr.hbm [resolvable:$true] %s3788
          %3794 = dma.vmem_to_hbm [thread:$0]  %s3787, 1024, %s3789, %s3720, 128, 128, 8
        $region212: #{tpu_custom_call.1} parent=123 // pred_fallthru
          _
        // Predicated region
        $region213: #{tpu_custom_call.1} parent=123 // pred_check
          %p3795 = pneg %p803
        $region214: #{tpu_custom_call.1} parent=123 // pred_check_branch
          %3797 = sbr.rel (%p3795) target = $region216
        $region215: #{tpu_custom_call.1} parent=123 // pred_region
          %s3798 = smul.u32 8, %s111
          %3800 = vsyncadd %s3725, 0
          %s3801 = smul.addr %s3798, 2
          %s3802 = smul.addr %s3801, 8
          %s3803 = scalar_lea.hbm %s59, %s3802
          %s3804 = sshll.u32 %s3728, 4
          %s3805 = int_to_ptr.vmem [resolvable:$true] %s3804
          %s3806 = sshll.u32 %s3803, 4
          %s3807 = int_to_ptr.hbm [resolvable:$true] %s3806
          %3812 = dma.vmem_to_hbm [thread:$0]  %s3805, 2048, %s3807, %s3725, 256, 256, 16
        $region216: #{tpu_custom_call.1} parent=123 // pred_fallthru
          _
        // Predicated region
        $region217: #{tpu_custom_call.1} parent=123 // pred_check
          %p3813 = pneg %p829
        $region218: #{tpu_custom_call.1} parent=123 // pred_check_branch
          %3815 = sbr.rel (%p3813) target = $region220
        $region219: #{tpu_custom_call.1} parent=123 // pred_region
          %s3816 = smul.u32 8, %s111
          %3818 = vsyncadd %s3730, 0
          %s3819 = smul.addr %s3816, 2
          %s3820 = smul.addr %s3819, 8
          %s3821 = scalar_lea.hbm %s61, %s3820
          %s3822 = sshll.u32 %s3733, 4
          %s3823 = int_to_ptr.vmem [resolvable:$true] %s3822
          %s3824 = sshll.u32 %s3821, 4
          %s3825 = int_to_ptr.hbm [resolvable:$true] %s3824
          %3830 = dma.vmem_to_hbm [thread:$0]  %s3823, 2048, %s3825, %s3730, 256, 256, 16
        $region220: #{tpu_custom_call.1} parent=123 // pred_fallthru
          _
        // Predicated region
        $region221: #{tpu_custom_call.1} parent=123 // pred_check
          %p3831 = pneg %p855
        $region222: #{tpu_custom_call.1} parent=123 // pred_check_branch
          %3833 = sbr.rel (%p3831) target = $region224
        $region223: #{tpu_custom_call.1} parent=123 // pred_region
          %s3834 = smul.u32 8, %s111
          %3836 = vsyncadd %s3735, 0
          %s3837 = smul.addr %s3834, 2
          %s3838 = smul.addr %s3837, 8
          %s3839 = scalar_lea.hbm %s63, %s3838
          %s3840 = sshll.u32 %s3738, 4
          %s3841 = int_to_ptr.vmem [resolvable:$true] %s3840
          %s3842 = sshll.u32 %s3839, 4
          %s3843 = int_to_ptr.hbm [resolvable:$true] %s3842
          %3848 = dma.vmem_to_hbm [thread:$0]  %s3841, 2048, %s3843, %s3735, 256, 256, 16
        $region224: #{tpu_custom_call.1} parent=123 // pred_fallthru
          _
        // Predicated region
        $region225: #{tpu_custom_call.1} parent=123 // pred_check
          %p3849 = pneg %p881
        $region226: #{tpu_custom_call.1} parent=123 // pred_check_branch
          %3851 = sbr.rel (%p3849) target = $region228
        $region227: #{tpu_custom_call.1} parent=123 // pred_region
          %s3852 = smul.u32 8, %s111
          %3854 = vsyncadd %s3740, 0
          %s3855 = smul.addr %s3852, 8
          %s3856 = scalar_lea.hbm %s65, %s3855
          %s3857 = sshll.u32 %s3743, 4
          %s3858 = int_to_ptr.vmem [resolvable:$true] %s3857
          %s3859 = sshll.u32 %s3856, 4
          %s3860 = int_to_ptr.hbm [resolvable:$true] %s3859
          %3865 = dma.vmem_to_hbm [thread:$0]  %s3858, 1024, %s3860, %s3740, 128, 128, 8
        $region228: #{tpu_custom_call.1} parent=123 // pred_fallthru
          _
      $region124: #{tpu_custom_call.1} parent=5 // pred_fallthru
        _
      %p3866 = scmp.le.s32.totalorder 2, %s106
      // Predicated region
      $region229: #{tpu_custom_call.1} parent=5 // pred_check
        %p3867 = pneg %p3866
      $region230: #{tpu_custom_call.1} parent=5 // pred_check_branch
        %3869 = sbr.rel (%p3867) target = $region232
      $region231: #{tpu_custom_call.1} parent=5 // pred_region
        %s3870 = ssub.s32 %s106, 2
        // Predicated region
        $region233: #{tpu_custom_call.1} parent=231 // pred_check
          %p3871 = pneg %p731
        $region234: #{tpu_custom_call.1} parent=231 // pred_check_branch
          %3873 = sbr.rel (%p3871) target = $region236
        $region235: #{tpu_custom_call.1} parent=231 // pred_region
          %s3874 = sand.u32 %s716, 1
          %s3875 = scalar_lea.sflag [#allocation4], %s3874
          %s3876 = sand.u32 %s716, 1
          %s3877 = smul.addr %s3876, 64
          %s3878 = scalar_lea.vmem [#allocation32], %s3877
          %3880 = dma.done %s3875, 1024
        $region236: #{tpu_custom_call.1} parent=231 // pred_fallthru
          _
        // Predicated region
        $region237: #{tpu_custom_call.1} parent=231 // pred_check
          %p3881 = pneg %p757
        $region238: #{tpu_custom_call.1} parent=231 // pred_check_branch
          %3883 = sbr.rel (%p3881) target = $region240
        $region239: #{tpu_custom_call.1} parent=231 // pred_region
          %s3884 = sand.u32 %s112, 1
          %s3885 = scalar_lea.sflag [#allocation34], %s3884
          %s3886 = sand.u32 %s742, 1
          %s3887 = smul.addr %s3886, 64
          %s3888 = scalar_lea.vmem [#allocation33], %s3887
          %3890 = dma.done %s3885, 1024
        $region240: #{tpu_custom_call.1} parent=231 // pred_fallthru
          _
        // Predicated region
        $region241: #{tpu_custom_call.1} parent=231 // pred_check
          %p3891 = pneg %p783
        $region242: #{tpu_custom_call.1} parent=231 // pred_check_branch
          %3893 = sbr.rel (%p3891) target = $region244
        $region243: #{tpu_custom_call.1} parent=231 // pred_region
          %s3894 = sand.u32 %s112, 1
          %s3895 = scalar_lea.sflag [#allocation34], %s3894
          %s3896 = sand.u32 %s768, 1
          %s3897 = smul.addr %s3896, 64
          %s3898 = scalar_lea.vmem [#allocation35], %s3897
          %3900 = dma.done %s3895, 1024
        $region244: #{tpu_custom_call.1} parent=231 // pred_fallthru
          _
        // Predicated region
        $region245: #{tpu_custom_call.1} parent=231 // pred_check
          %p3901 = pneg %p809
        $region246: #{tpu_custom_call.1} parent=231 // pred_check_branch
          %3903 = sbr.rel (%p3901) target = $region248
        $region247: #{tpu_custom_call.1} parent=231 // pred_region
          %s3904 = sand.u32 %s112, 1
          %s3905 = scalar_lea.sflag [#allocation37], %s3904
          %s3906 = sand.u32 %s794, 1
          %s3907 = smul.addr %s3906, 128
          %s3908 = scalar_lea.vmem [#allocation36], %s3907
          %3910 = dma.done %s3905, 2048
        $region248: #{tpu_custom_call.1} parent=231 // pred_fallthru
          _
        // Predicated region
        $region249: #{tpu_custom_call.1} parent=231 // pred_check
          %p3911 = pneg %p835
        $region250: #{tpu_custom_call.1} parent=231 // pred_check_branch
          %3913 = sbr.rel (%p3911) target = $region252
        $region251: #{tpu_custom_call.1} parent=231 // pred_region
          %s3914 = sand.u32 %s112, 1
          %s3915 = scalar_lea.sflag [#allocation37], %s3914
          %s3916 = sand.u32 %s820, 1
          %s3917 = smul.addr %s3916, 128
          %s3918 = scalar_lea.vmem [#allocation38], %s3917
          %3920 = dma.done %s3915, 2048
        $region252: #{tpu_custom_call.1} parent=231 // pred_fallthru
          _
        // Predicated region
        $region253: #{tpu_custom_call.1} parent=231 // pred_check
          %p3921 = pneg %p861
        $region254: #{tpu_custom_call.1} parent=231 // pred_check_branch
          %3923 = sbr.rel (%p3921) target = $region256
        $region255: #{tpu_custom_call.1} parent=231 // pred_region
          %s3924 = sand.u32 %s112, 1
          %s3925 = scalar_lea.sflag [#allocation40], %s3924
          %s3926 = sand.u32 %s846, 1
          %s3927 = smul.addr %s3926, 128
          %s3928 = scalar_lea.vmem [#allocation39], %s3927
          %3930 = dma.done %s3925, 2048
        $region256: #{tpu_custom_call.1} parent=231 // pred_fallthru
          _
        // Predicated region
        $region257: #{tpu_custom_call.1} parent=231 // pred_check
          %p3931 = pneg %p887
        $region258: #{tpu_custom_call.1} parent=231 // pred_check_branch
          %3933 = sbr.rel (%p3931) target = $region260
        $region259: #{tpu_custom_call.1} parent=231 // pred_region
          %s3934 = sand.u32 %s112, 1
          %s3935 = scalar_lea.sflag [#allocation40], %s3934
          %s3936 = sand.u32 %s872, 1
          %s3937 = smul.addr %s3936, 64
          %s3938 = scalar_lea.vmem [#allocation41], %s3937
          %3940 = dma.done %s3935, 1024
        $region260: #{tpu_custom_call.1} parent=231 // pred_fallthru
          _
      $region232: #{tpu_custom_call.1} parent=5 // pred_fallthru
        _
    $region6: #{tpu_custom_call.1} parent=1 // loop_footer
      %s110 = sadd.s32 1, %s106
    $region7: #{tpu_custom_call.1} parent=1 // loop_footer_branch
      %105 = sbr.rel target = $region3
    $region8: #{tpu_custom_call.1} parent=1 // loop_exit
      _
    %3941 = vsyncpa [#allocation3], 1
    %s3942 = scalar_lea.sflag [#allocation3], 1
    %3943 = vsyncpa %s3942, 1
    %3944 = vsyncpa [#allocation6], 1
    %s3945 = scalar_lea.sflag [#allocation6], 1
    %3946 = vsyncpa %s3945, 1
    %3947 = vsyncpa [#allocation9], 1
    %s3948 = scalar_lea.sflag [#allocation9], 1
    %3949 = vsyncpa %s3948, 1
    %3950 = vsyncpa [#allocation12], 1
    %s3951 = scalar_lea.sflag [#allocation12], 1
    %3952 = vsyncpa %s3951, 1
    %3953 = vsyncpa [#allocation15], 1
    %s3954 = scalar_lea.sflag [#allocation15], 1
    %3955 = vsyncpa %s3954, 1
    %3956 = vsyncpa [#allocation18], 1
    %s3957 = scalar_lea.sflag [#allocation18], 1
    %3958 = vsyncpa %s3957, 1
    %3959 = vsyncpa [#allocation21], 1
    %3960 = vsyncpa [#allocation24], 1
    %3961 = vsyncpa [#allocation27], 1
    %3962 = vsyncpa [#allocation30], 1
    %3963 = vsyncpa [#allocation4], 1
    %s3964 = scalar_lea.sflag [#allocation4], 1
    %3965 = vsyncpa %s3964, 1
    %3966 = vsyncpa [#allocation34], 1
    %s3967 = scalar_lea.sflag [#allocation34], 1
    %3968 = vsyncpa %s3967, 1
    %3969 = vsyncpa [#allocation37], 1
    %s3970 = scalar_lea.sflag [#allocation37], 1
    %3971 = vsyncpa %s3970, 1
    %3972 = vsyncpa [#allocation40], 1
    %s3973 = scalar_lea.sflag [#allocation40], 1
    %3974 = vsyncpa %s3973, 1

</llo_original>
